<compile_context>
chip_gen: v7x
topology: tpu7x:2x2x1
jax: 0.10.0
libtpu: 0.0.40
codegen_flags: <defaults>
</compile_context>

<pallas_src>
import math

import jax
import jax.numpy as jnp
from jax import lax
from jax.experimental import pallas as pl
from jax.experimental.pallas import tpu as pltpu


def make_decoder_layer_kernel(d_model, num_heads, q_block, eps=1e-6):
    D = d_model
    dk = D // num_heads
    scale = 1.0 / math.sqrt(dk)
    NEG = -1e9
    f32 = jnp.float32
    bf16 = jnp.bfloat16

    def kernel(x_ref, mem_ref, tmask_ref, smask_ref,
               ln_a_ref, ln_b_ref,
               sa_wq_ref, sa_bq_ref, sa_wkv_ref, sa_bkv_ref,
               sa_wo_ref, sa_bo_ref,
               ca_wq_ref, ca_bq_ref, ca_wkv_ref, ca_bkv_ref,
               ca_wo_ref, ca_bo_ref,
               ff_w1_ref, ff_b1_ref, ff_w2_ref, ff_b2_ref,
               o_ref,
               sa_kv_scr, ca_kv_scr):
        i = pl.program_id(1)                  # query-tile index within batch b

        def layer_norm(v, idx):
            # custom LayerNorm: a*(v-mean)/(std+eps)+b with unbiased std.
            a = ln_a_ref[idx:idx + 1, :]      # (1, D) static slice
            b = ln_b_ref[idx:idx + 1, :]
            mean = jnp.mean(v, axis=-1, keepdims=True)
            var = jnp.sum((v - mean) ** 2, axis=-1, keepdims=True) * (1.0 / (D - 1))
            inv = pl.reciprocal(jnp.sqrt(var) + eps, approx=True)   # EUP
            return a * ((v - mean) * inv) + b

        # ---- once per batch element: project + cache K/V in VMEM scratch ----
        @pl.when(i == 0)
        def _():
            xf = x_ref[0].astype(f32)                              # (T, D)
            xfn = layer_norm(xf, 0)
            kv_s = (jnp.dot(xfn.astype(bf16), sa_wkv_ref[...],
                            preferred_element_type=f32) + sa_bkv_ref[...])
            sa_kv_scr[...] = kv_s.astype(bf16)                     # (T, 2D)
            mem = mem_ref[0].astype(f32)                           # (S, D)
            kv_c = (jnp.dot(mem.astype(bf16), ca_wkv_ref[...],
                            preferred_element_type=f32) + ca_bkv_ref[...])
            ca_kv_scr[...] = kv_c.astype(bf16)                     # (S, 2D)

        # query tile: 8-row-aligned dynamic slice of the resident x block
        row0 = pl.multiple_of(i * q_block, q_block)
        xq = x_ref[0, pl.ds(row0, q_block), :].astype(f32)         # (TQ, D)

        # masks -> additive bias, computed once (hoisted out of the head loop)
        tbias = jnp.where(tmask_ref[0].astype(f32) == 0.0, NEG, 0.0)  # (TQ, T)
        sbias = jnp.where(smask_ref[0].astype(f32) == 0.0, NEG, 0.0)  # (1, S)

        def mha(q, kv, bias, wo_ref, bo_ref):
            # q: (TQ, D) f32 ; kv: (Tk, 2D) bf16 cached ; bias bcast to (TQ, Tk)
            q16 = (q * scale).astype(bf16)    # fold 1/sqrt(dk) once, pre-cast
            heads = []
            # TODO(synk): for H >= 8 use lax.fori_loop(unroll=True) or a
            # head-batched dot_general to bound vreg live ranges.
            for h in range(num_heads):
                lo = h * dk
                qh = q16[:, lo:lo + dk]
                kh = kv[:, lo:lo + dk]
                vh = kv[:, D + lo:D + lo + dk]
                s = lax.dot_general(qh, kh, (((1,), (1,)), ((), ())),
                                    preferred_element_type=f32)    # (TQ, Tk)
                s = s + bias
                s = s - jnp.max(s, axis=-1, keepdims=True)
                e = jnp.exp(s)
                p = e * pl.reciprocal(jnp.sum(e, axis=-1, keepdims=True),
                                      approx=True)
                heads.append(jnp.dot(p.astype(bf16), vh,
                                     preferred_element_type=f32))  # (TQ, dk)
            ctx = jnp.concatenate(heads, axis=-1)                  # (TQ, D)
            # single full-depth output projection (not folded per head)
            return (jnp.dot(ctx.astype(bf16), wo_ref[...],
                            preferred_element_type=f32) + bo_ref[...])

        # ---- sublayer 0: masked multi-head self-attention ----
        xn = layer_norm(xq, 0)
        q = (jnp.dot(xn.astype(bf16), sa_wq_ref[...],
                     preferred_element_type=f32) + sa_bq_ref[...])
        x = xq + mha(q, sa_kv_scr[...], tbias, sa_wo_ref, sa_bo_ref)

        # ---- sublayer 1: multi-head cross-attention over memory ----
        xn = layer_norm(x, 1)
        qc = (jnp.dot(xn.astype(bf16), ca_wq_ref[...],
                      preferred_element_type=f32) + ca_bq_ref[...])
        x = x + mha(qc, ca_kv_scr[...], sbias, ca_wo_ref, ca_bo_ref)

        # ---- sublayer 2: position-wise feed-forward ----
        xn = layer_norm(x, 2)
        h1 = jnp.maximum(
            jnp.dot(xn.astype(bf16), ff_w1_ref[...],
                    preferred_element_type=f32) + ff_b1_ref[...], 0.0)
        x = x + (jnp.dot(h1.astype(bf16), ff_w2_ref[...],
                         preferred_element_type=f32) + ff_b2_ref[...])

        o_ref[0] = x.astype(o_ref.dtype)

    return kernel


def decoder_layer_forward(x, memory, tgt_mask, src_mask, params, num_heads,
                          q_block=None):
    """Fused DecoderLayer forward (eval mode).

    x:        (B, T, D)   target sequence
    memory:   (B, S, D)   encoder memory
    tgt_mask: (B, T, T)   1 = attend, 0 = masked
    src_mask: (B, 1, S)   1 = attend, 0 = masked
    """
    B, T, D = x.shape
    S = memory.shape[1]
    TQ = T if q_block is None else min(q_block, T)
    assert T % TQ == 0 and TQ % 8 == 0 and D % num_heads == 0
    nT = T // TQ

    bf16, f32 = jnp.bfloat16, jnp.float32
    pr = params
    # weights -> bf16 (MXU operands, half the VMEM residency); biases/LN -> f32
    weights = [
        pr["ln_a"].astype(f32), pr["ln_b"].astype(f32),
        pr["sa_wq"].astype(bf16), pr["sa_bq"].astype(f32),
        pr["sa_wkv"].astype(bf16), pr["sa_bkv"].astype(f32),
        pr["sa_wo"].astype(bf16), pr["sa_bo"].astype(f32),
        pr["ca_wq"].astype(bf16), pr["ca_bq"].astype(f32),
        pr["ca_wkv"].astype(bf16), pr["ca_bkv"].astype(f32),
        pr["ca_wo"].astype(bf16), pr["ca_bo"].astype(f32),
        pr["ff_w1"].astype(bf16), pr["ff_b1"].astype(f32),
        pr["ff_w2"].astype(bf16), pr["ff_b2"].astype(f32),
    ]

    tmask_i8 = (tgt_mask != 0).astype(jnp.int8)   # 4x less mask HBM traffic
    smask_i8 = (src_mask != 0).astype(jnp.int8)

    kernel = make_decoder_layer_kernel(D, num_heads, TQ)

    in_specs = [
        pl.BlockSpec((1, T, D), lambda b, i: (b, 0, 0)),     # x (full, resident)
        pl.BlockSpec((1, S, D), lambda b, i: (b, 0, 0)),     # memory
        pl.BlockSpec((1, TQ, T), lambda b, i: (b, i, 0)),    # tgt mask tile
        pl.BlockSpec((1, 1, S), lambda b, i: (b, 0, 0)),     # src mask
    ] + [
        # constant index maps: weights stay resident; single-buffered.
        pl.BlockSpec(wt.shape, lambda b, i: (0, 0),
                     pipeline_mode=pl.Buffered(1))
        for wt in weights
    ]

    return pl.pallas_call(
        kernel,
        out_shape=jax.ShapeDtypeStruct((B, T, D), x.dtype),
        grid=(B, nT),
        in_specs=in_specs,
        out_specs=pl.BlockSpec((1, TQ, D), lambda b, i: (b, i, 0)),
        scratch_shapes=[pltpu.VMEM((T, 2 * D), jnp.bfloat16),   # self-attn K,V
                        pltpu.VMEM((S, 2 * D), jnp.bfloat16)],  # cross-attn K,V
        compiler_params=pltpu.CompilerParams(
            # query-tile axis must be "arbitrary": the pl.when(i==0) K/V cache
            # fill has to precede the other tiles of the same batch element.
            dimension_semantics=("parallel", "arbitrary"),
            vmem_limit_bytes=64 * 1024 * 1024),
    )(x, memory, tmask_i8, smask_i8, *weights)


# ----------------------------- pure-JAX reference -----------------------------
def decoder_layer_reference(x, memory, tgt_mask, src_mask, p, num_heads,
                            eps=1e-6):
    def layer_norm(v, a, b):
        mean = v.mean(-1, keepdims=True)
        var = ((v - mean) ** 2).sum(-1, keepdims=True) / (v.shape[-1] - 1)
        std = jnp.sqrt(var)
        return a * (v - mean) / (std + eps) + b

    def mha(q_in, k_in, v_in, wq, bq, wk, bk, wv, bv, wo, bo, mask):
        B, Tq, D = q_in.shape
        Tk = k_in.shape[1]
        dk = D // num_heads

        def split(t, Tt):
            return t.reshape(B, Tt, num_heads, dk).transpose(0, 2, 1, 3)

        q = split(q_in @ wq + bq, Tq)
        k = split(k_in @ wk + bk, Tk)
        v = split(v_in @ wv + bv, Tk)
        s = jnp.einsum("bhqd,bhkd->bhqk", q, k) / math.sqrt(dk)
        s = jnp.where(mask[:, None] == 0.0, -1e9, s)
        a = jax.nn.softmax(s, axis=-1)
        o = jnp.einsum("bhqk,bhkd->bhqd", a, v)
        o = o.transpose(0, 2, 1, 3).reshape(B, Tq, D)
        return o @ wo + bo

    xn = layer_norm(x, p["ln_a"][0], p["ln_b"][0])
    x = x + mha(xn, xn, xn,
                p["sa_wq"], p["sa_bq"], p["sa_wk"], p["sa_bk"],
                p["sa_wv"], p["sa_bv"], p["sa_wo"], p["sa_bo"], tgt_mask)

    xn = layer_norm(x, p["ln_a"][1], p["ln_b"][1])
    x = x + mha(xn, memory, memory,
                p["ca_wq"], p["ca_bq"], p["ca_wk"], p["ca_bk"],
                p["ca_wv"], p["ca_bv"], p["ca_wo"], p["ca_bo"], src_mask)

    xn = layer_norm(x, p["ln_a"][2], p["ln_b"][2])
    h1 = jnp.maximum(xn @ p["ff_w1"] + p["ff_b1"], 0.0)
    return x + h1 @ p["ff_w2"] + p["ff_b2"]


if __name__ == "__main__":
    B, T, S, D, H, FF = 2, 64, 16, 32, 4, 64

    keys = iter(jax.random.split(jax.random.PRNGKey(0), 32))

    def nrm(shape, scale):
        return scale * jax.random.normal(next(keys), shape, dtype=jnp.float32)

    x = nrm((B, T, D), 1.0)
    memory = nrm((B, S, D), 1.0)

    # causal target mask + ragged source mask (batch 1 only sees 12 tokens)
    tgt_mask = jnp.broadcast_to(jnp.tril(jnp.ones((T, T), jnp.float32)),
                                (B, T, T))
    src_len = jnp.array([S, 12])
    src_mask = (jnp.arange(S)[None, :] < src_len[:, None]).astype(jnp.float32)
    src_mask = src_mask[:, None, :]                       # (B, 1, S)

    ws, bs = 0.08, 0.02
    raw = dict(
        ln_a=1.0 + nrm((3, D), 0.05), ln_b=nrm((3, D), 0.05),
        sa_wq=nrm((D, D), ws), sa_bq=nrm((D,), bs),
        sa_wk=nrm((D, D), ws), sa_bk=nrm((D,), bs),
        sa_wv=nrm((D, D), ws), sa_bv=nrm((D,), bs),
        sa_wo=nrm((D, D), ws), sa_bo=nrm((D,), bs),
        ca_wq=nrm((D, D), ws), ca_bq=nrm((D,), bs),
        ca_wk=nrm((D, D), ws), ca_bk=nrm((D,), bs),
        ca_wv=nrm((D, D), ws), ca_bv=nrm((D,), bs),
        ca_wo=nrm((D, D), ws), ca_bo=nrm((D,), bs),
        ff_w1=nrm((D, FF), ws), ff_b1=nrm((FF,), bs),
        ff_w2=nrm((FF, D), ws), ff_b2=nrm((D,), bs),
    )

    packed = dict(
        ln_a=raw["ln_a"], ln_b=raw["ln_b"],
        sa_wq=raw["sa_wq"], sa_bq=raw["sa_bq"].reshape(1, D),
        sa_wkv=jnp.concatenate([raw["sa_wk"], raw["sa_wv"]], axis=1),
        sa_bkv=jnp.concatenate([raw["sa_bk"], raw["sa_bv"]]).reshape(1, 2 * D),
        sa_wo=raw["sa_wo"], sa_bo=raw["sa_bo"].reshape(1, D),
        ca_wq=raw["ca_wq"], ca_bq=raw["ca_bq"].reshape(1, D),
        ca_wkv=jnp.concatenate([raw["ca_wk"], raw["ca_wv"]], axis=1),
        ca_bkv=jnp.concatenate([raw["ca_bk"], raw["ca_bv"]]).reshape(1, 2 * D),
        ca_wo=raw["ca_wo"], ca_bo=raw["ca_bo"].reshape(1, D),
        ff_w1=raw["ff_w1"], ff_b1=raw["ff_b1"].reshape(1, FF),
        ff_w2=raw["ff_w2"], ff_b2=raw["ff_b2"].reshape(1, D),
    )

    out = decoder_layer_forward(x, memory, tgt_mask, src_mask, packed,
                                num_heads=H, q_block=32)
    out = jax.block_until_ready(out)

    ref = decoder_layer_reference(x, memory, tgt_mask, src_mask, raw,
                                  num_heads=H)

    assert out.shape == ref.shape, (out.shape, ref.shape)
    # bf16 MXU operands + approx reciprocals => loosened (but still tight)
    # tolerance vs. the pure-f32 reference.
    err = float(jnp.max(jnp.abs(out - ref)))
    assert err < 5e-2, err
    print("KERNEL_OK")
</pallas_src>

<mosaic_0001>
module attributes {stable_mosaic.version = 11 : i64} {
  func.func @kernel(%arg0: i32, %arg1: i32, %arg2: memref<1x64x32xf32, #tpu.memory_space<vmem>>, %arg3: memref<1x16x32xf32, #tpu.memory_space<vmem>>, %arg4: memref<1x32x64xi8, #tpu.memory_space<vmem>>, %arg5: memref<1x1x16xi8, #tpu.memory_space<vmem>>, %arg6: memref<3x32xf32, #tpu.memory_space<vmem>>, %arg7: memref<3x32xf32, #tpu.memory_space<vmem>>, %arg8: memref<32x32xbf16, #tpu.memory_space<vmem>>, %arg9: memref<1x32xf32, #tpu.memory_space<vmem>>, %arg10: memref<32x64xbf16, #tpu.memory_space<vmem>>, %arg11: memref<1x64xf32, #tpu.memory_space<vmem>>, %arg12: memref<32x32xbf16, #tpu.memory_space<vmem>>, %arg13: memref<1x32xf32, #tpu.memory_space<vmem>>, %arg14: memref<32x32xbf16, #tpu.memory_space<vmem>>, %arg15: memref<1x32xf32, #tpu.memory_space<vmem>>, %arg16: memref<32x64xbf16, #tpu.memory_space<vmem>>, %arg17: memref<1x64xf32, #tpu.memory_space<vmem>>, %arg18: memref<32x32xbf16, #tpu.memory_space<vmem>>, %arg19: memref<1x32xf32, #tpu.memory_space<vmem>>, %arg20: memref<32x64xbf16, #tpu.memory_space<vmem>>, %arg21: memref<1x64xf32, #tpu.memory_space<vmem>>, %arg22: memref<64x32xbf16, #tpu.memory_space<vmem>>, %arg23: memref<1x32xf32, #tpu.memory_space<vmem>>, %arg24: memref<1x32x32xf32, #tpu.memory_space<vmem>>, %arg25: memref<64x64xbf16, #tpu.memory_space<vmem>>, %arg26: memref<16x64xbf16, #tpu.memory_space<vmem>>) attributes {dimension_semantics = [#tpu.dimension_semantics<parallel>, #tpu.dimension_semantics<arbitrary>], iteration_bounds = array<i64: 2, 2>, scalar_prefetch = 0 : i64, scratch_operands = 2 : i64, tpu.core_type = #tpu.core_type<tc>, window_params = [{transform_indices = @transform_0, window_bounds = array<i64: 1, 64, 32>}, {transform_indices = @transform_1, window_bounds = array<i64: 1, 16, 32>}, {transform_indices = @transform_2, window_bounds = array<i64: 1, 32, 64>}, {transform_indices = @transform_3, window_bounds = array<i64: 1, 1, 16>}, {pipeline_mode = #tpu.pipeline_mode<synchronous>, transform_indices = @transform_4, window_bounds = array<i64: 3, 32>}, {pipeline_mode = #tpu.pipeline_mode<synchronous>, transform_indices = @transform_5, window_bounds = array<i64: 3, 32>}, {pipeline_mode = #tpu.pipeline_mode<synchronous>, transform_indices = @transform_6, window_bounds = array<i64: 32, 32>}, {pipeline_mode = #tpu.pipeline_mode<synchronous>, transform_indices = @transform_7, window_bounds = array<i64: 1, 32>}, {pipeline_mode = #tpu.pipeline_mode<synchronous>, transform_indices = @transform_8, window_bounds = array<i64: 32, 64>}, {pipeline_mode = #tpu.pipeline_mode<synchronous>, transform_indices = @transform_9, window_bounds = array<i64: 1, 64>}, {pipeline_mode = #tpu.pipeline_mode<synchronous>, transform_indices = @transform_10, window_bounds = array<i64: 32, 32>}, {pipeline_mode = #tpu.pipeline_mode<synchronous>, transform_indices = @transform_11, window_bounds = array<i64: 1, 32>}, {pipeline_mode = #tpu.pipeline_mode<synchronous>, transform_indices = @transform_12, window_bounds = array<i64: 32, 32>}, {pipeline_mode = #tpu.pipeline_mode<synchronous>, transform_indices = @transform_13, window_bounds = array<i64: 1, 32>}, {pipeline_mode = #tpu.pipeline_mode<synchronous>, transform_indices = @transform_14, window_bounds = array<i64: 32, 64>}, {pipeline_mode = #tpu.pipeline_mode<synchronous>, transform_indices = @transform_15, window_bounds = array<i64: 1, 64>}, {pipeline_mode = #tpu.pipeline_mode<synchronous>, transform_indices = @transform_16, window_bounds = array<i64: 32, 32>}, {pipeline_mode = #tpu.pipeline_mode<synchronous>, transform_indices = @transform_17, window_bounds = array<i64: 1, 32>}, {pipeline_mode = #tpu.pipeline_mode<synchronous>, transform_indices = @transform_18, window_bounds = array<i64: 32, 64>}, {pipeline_mode = #tpu.pipeline_mode<synchronous>, transform_indices = @transform_19, window_bounds = array<i64: 1, 64>}, {pipeline_mode = #tpu.pipeline_mode<synchronous>, transform_indices = @transform_20, window_bounds = array<i64: 64, 32>}, {pipeline_mode = #tpu.pipeline_mode<synchronous>, transform_indices = @transform_21, window_bounds = array<i64: 1, 32>}, {transform_indices = @transform_22, window_bounds = array<i64: 1, 32, 32>}]} {
    %c0_i32 = arith.constant 0 : i32
    %0 = arith.cmpi eq, %arg1, %c0_i32 : i32
    %1 = arith.extui %0 : i1 to i32
    %c0_i32_0 = arith.constant 0 : i32
    %2 = arith.cmpi ne, %1, %c0_i32_0 : i32
    scf.if %2 {
      %c0_110 = arith.constant 0 : index
      %c0_111 = arith.constant 0 : index
      %c0_112 = arith.constant 0 : index
      %293 = vector.load %arg2[%c0_110, %c0_111, %c0_112] : memref<1x64x32xf32, #tpu.memory_space<vmem>>, vector<1x64x32xf32>
      %294 = vector.shape_cast %293 : vector<1x64x32xf32> to vector<64x32xf32>
      %c0_113 = arith.constant 0 : index
      %c0_114 = arith.constant 0 : index
      %295 = vector.load %arg6[%c0_113, %c0_114] : memref<3x32xf32, #tpu.memory_space<vmem>>, vector<1x32xf32>
      %c0_115 = arith.constant 0 : index
      %c0_116 = arith.constant 0 : index
      %296 = vector.load %arg7[%c0_115, %c0_116] : memref<3x32xf32, #tpu.memory_space<vmem>>, vector<1x32xf32>
      %cst_117 = arith.constant dense<0.000000e+00> : vector<64xf32>
      %297 = vector.multi_reduction <add>, %294, %cst_117 [1] : vector<64x32xf32> to vector<64xf32>
      %298 = vector.shape_cast %297 : vector<64xf32> to vector<64x1xf32>
      %cst_118 = arith.constant 3.200000e+01 : f32
      %299 = vector.broadcast %cst_118 : f32 to vector<64x1xf32>
      %300 = arith.divf %298, %299 : vector<64x1xf32>
      %301 = vector.broadcast %300 : vector<64x1xf32> to vector<64x32xf32>
      %302 = arith.subf %294, %301 : vector<64x32xf32>
      %303 = arith.mulf %302, %302 : vector<64x32xf32>
      %cst_119 = arith.constant dense<0.000000e+00> : vector<64xf32>
      %304 = vector.multi_reduction <add>, %303, %cst_119 [1] : vector<64x32xf32> to vector<64xf32>
      %305 = vector.shape_cast %304 : vector<64xf32> to vector<64x1xf32>
      %cst_120 = arith.constant 0.0322580636 : f32
      %306 = vector.broadcast %cst_120 : f32 to vector<64x1xf32>
      %307 = arith.mulf %305, %306 : vector<64x1xf32>
      %308 = math.sqrt %307 : vector<64x1xf32>
      %cst_121 = arith.constant 9.99999997E-7 : f32
      %309 = vector.broadcast %cst_121 : f32 to vector<64x1xf32>
      %310 = arith.addf %308, %309 : vector<64x1xf32>
      %311 = tpu.reciprocal %310 {approx = true} : vector<64x1xf32> -> vector<64x1xf32>
      %312 = vector.broadcast %300 : vector<64x1xf32> to vector<64x32xf32>
      %313 = arith.subf %294, %312 : vector<64x32xf32>
      %314 = vector.broadcast %311 : vector<64x1xf32> to vector<64x32xf32>
      %315 = arith.mulf %313, %314 : vector<64x32xf32>
      %316 = vector.broadcast %295 : vector<1x32xf32> to vector<64x32xf32>
      %317 = arith.mulf %316, %315 : vector<64x32xf32>
      %318 = vector.broadcast %296 : vector<1x32xf32> to vector<64x32xf32>
      %319 = arith.addf %317, %318 : vector<64x32xf32>
      %320 = arith.truncf %319 : vector<64x32xf32> to vector<64x32xbf16>
      %c0_122 = arith.constant 0 : index
      %c0_123 = arith.constant 0 : index
      %321 = vector.load %arg10[%c0_122, %c0_123] : memref<32x64xbf16, #tpu.memory_space<vmem>>, vector<32x64xbf16>
      %cst_124 = arith.constant dense<0.000000e+00> : vector<64x64xf32>
      %322 = tpu.matmul %320, %321, %cst_124 {dimension_numbers = #tpu.dot_dimension_numbers<[1], [0], [0], [1], [0, 0, 1, 1], [], []>} : vector<64x32xbf16>, vector<32x64xbf16>, vector<64x64xf32> -> vector<64x64xf32>
      %c0_125 = arith.constant 0 : index
      %c0_126 = arith.constant 0 : index
      %323 = vector.load %arg11[%c0_125, %c0_126] : memref<1x64xf32, #tpu.memory_space<vmem>>, vector<1x64xf32>
      %324 = vector.broadcast %323 : vector<1x64xf32> to vector<64x64xf32>
      %325 = arith.addf %322, %324 : vector<64x64xf32>
      %326 = arith.truncf %325 : vector<64x64xf32> to vector<64x64xbf16>
      %c0_127 = arith.constant 0 : index
      %c0_128 = arith.constant 0 : index
      %327 = vector.load %arg25[%c0_127, %c0_128] : memref<64x64xbf16, #tpu.memory_space<vmem>>, vector<64x64xbf16>
      tpu.vector_store %arg25[%c0_127, %c0_128], %326 {strides = array<i32>} : memref<64x64xbf16, #tpu.memory_space<vmem>>, vector<64x64xbf16>,
      %c0_129 = arith.constant 0 : index
      %c0_130 = arith.constant 0 : index
      %c0_131 = arith.constant 0 : index
      %328 = vector.load %arg3[%c0_129, %c0_130, %c0_131] : memref<1x16x32xf32, #tpu.memory_space<vmem>>, vector<1x16x32xf32>
      %329 = vector.shape_cast %328 : vector<1x16x32xf32> to vector<16x32xf32>
      %330 = arith.truncf %329 : vector<16x32xf32> to vector<16x32xbf16>
      %c0_132 = arith.constant 0 : index
      %c0_133 = arith.constant 0 : index
      %331 = vector.load %arg16[%c0_132, %c0_133] : memref<32x64xbf16, #tpu.memory_space<vmem>>, vector<32x64xbf16>
      %cst_134 = arith.constant dense<0.000000e+00> : vector<16x64xf32>
      %332 = tpu.matmul %330, %331, %cst_134 {dimension_numbers = #tpu.dot_dimension_numbers<[1], [0], [0], [1], [0, 0, 1, 1], [], []>} : vector<16x32xbf16>, vector<32x64xbf16>, vector<16x64xf32> -> vector<16x64xf32>
      %c0_135 = arith.constant 0 : index
      %c0_136 = arith.constant 0 : index
      %333 = vector.load %arg17[%c0_135, %c0_136] : memref<1x64xf32, #tpu.memory_space<vmem>>, vector<1x64xf32>
      %334 = vector.broadcast %333 : vector<1x64xf32> to vector<16x64xf32>
      %335 = arith.addf %332, %334 : vector<16x64xf32>
      %336 = arith.truncf %335 : vector<16x64xf32> to vector<16x64xbf16>
      %c0_137 = arith.constant 0 : index
      %c0_138 = arith.constant 0 : index
      %337 = vector.load %arg26[%c0_137, %c0_138] : memref<16x64xbf16, #tpu.memory_space<vmem>>, vector<16x64xbf16>
      tpu.vector_store %arg26[%c0_137, %c0_138], %336 {strides = array<i32>} : memref<16x64xbf16, #tpu.memory_space<vmem>>, vector<16x64xbf16>,
    } else {
    }
    %c32_i32 = arith.constant 32 : i32
    %3 = arith.muli %arg1, %c32_i32 : i32
    %4 = tpu.assume_multiple %3, 32 : i32
    %c0 = arith.constant 0 : index
    %5 = arith.index_cast %4 : i32 to index
    %c0_1 = arith.constant 0 : index
    %6 = vector.load %arg2[%c0, %5, %c0_1] : memref<1x64x32xf32, #tpu.memory_space<vmem>>, vector<1x32x32xf32>
    %7 = vector.shape_cast %6 : vector<1x32x32xf32> to vector<32x32xf32>
    %c0_2 = arith.constant 0 : index
    %c0_3 = arith.constant 0 : index
    %c0_4 = arith.constant 0 : index
    %8 = vector.load %arg4[%c0_2, %c0_3, %c0_4] : memref<1x32x64xi8, #tpu.memory_space<vmem>>, vector<1x32x64xi8>
    %9 = vector.shape_cast %8 : vector<1x32x64xi8> to vector<32x64xi8>
    %10 = arith.sitofp %9 : vector<32x64xi8> to vector<32x64xf32>
    %cst = arith.constant 0.000000e+00 : f32
    %11 = vector.broadcast %cst : f32 to vector<32x64xf32>
    %12 = arith.cmpf oeq, %10, %11 : vector<32x64xf32>
    %cst_5 = arith.constant -1.000000e+09 : f32
    %cst_6 = arith.constant 0.000000e+00 : f32
    %13 = vector.broadcast %cst_5 : f32 to vector<32x64xf32>
    %14 = vector.broadcast %cst_6 : f32 to vector<32x64xf32>
    %15 = arith.select %12, %13, %14 : vector<32x64xi1>, vector<32x64xf32>
    %c0_7 = arith.constant 0 : index
    %c0_8 = arith.constant 0 : index
    %c0_9 = arith.constant 0 : index
    %16 = vector.load %arg5[%c0_7, %c0_8, %c0_9] : memref<1x1x16xi8, #tpu.memory_space<vmem>>, vector<1x1x16xi8>
    %17 = vector.shape_cast %16 : vector<1x1x16xi8> to vector<1x16xi8>
    %18 = arith.sitofp %17 : vector<1x16xi8> to vector<1x16xf32>
    %cst_10 = arith.constant 0.000000e+00 : f32
    %19 = vector.broadcast %cst_10 : f32 to vector<1x16xf32>
    %20 = arith.cmpf oeq, %18, %19 : vector<1x16xf32>
    %cst_11 = arith.constant -1.000000e+09 : f32
    %cst_12 = arith.constant 0.000000e+00 : f32
    %21 = vector.broadcast %cst_11 : f32 to vector<1x16xf32>
    %22 = vector.broadcast %cst_12 : f32 to vector<1x16xf32>
    %23 = arith.select %20, %21, %22 : vector<1x16xi1>, vector<1x16xf32>
    %c0_13 = arith.constant 0 : index
    %c0_14 = arith.constant 0 : index
    %24 = vector.load %arg6[%c0_13, %c0_14] : memref<3x32xf32, #tpu.memory_space<vmem>>, vector<1x32xf32>
    %c0_15 = arith.constant 0 : index
    %c0_16 = arith.constant 0 : index
    %25 = vector.load %arg7[%c0_15, %c0_16] : memref<3x32xf32, #tpu.memory_space<vmem>>, vector<1x32xf32>
    %cst_17 = arith.constant dense<0.000000e+00> : vector<32xf32>
    %26 = vector.multi_reduction <add>, %7, %cst_17 [1] : vector<32x32xf32> to vector<32xf32>
    %27 = vector.shape_cast %26 : vector<32xf32> to vector<32x1xf32>
    %cst_18 = arith.constant 3.200000e+01 : f32
    %28 = vector.broadcast %cst_18 : f32 to vector<32x1xf32>
    %29 = arith.divf %27, %28 : vector<32x1xf32>
    %30 = vector.broadcast %29 : vector<32x1xf32> to vector<32x32xf32>
    %31 = arith.subf %7, %30 : vector<32x32xf32>
    %32 = arith.mulf %31, %31 : vector<32x32xf32>
    %cst_19 = arith.constant dense<0.000000e+00> : vector<32xf32>
    %33 = vector.multi_reduction <add>, %32, %cst_19 [1] : vector<32x32xf32> to vector<32xf32>
    %34 = vector.shape_cast %33 : vector<32xf32> to vector<32x1xf32>
    %cst_20 = arith.constant 0.0322580636 : f32
    %35 = vector.broadcast %cst_20 : f32 to vector<32x1xf32>
    %36 = arith.mulf %34, %35 : vector<32x1xf32>
    %37 = math.sqrt %36 : vector<32x1xf32>
    %cst_21 = arith.constant 9.99999997E-7 : f32
    %38 = vector.broadcast %cst_21 : f32 to vector<32x1xf32>
    %39 = arith.addf %37, %38 : vector<32x1xf32>
    %40 = tpu.reciprocal %39 {approx = true} : vector<32x1xf32> -> vector<32x1xf32>
    %41 = vector.broadcast %29 : vector<32x1xf32> to vector<32x32xf32>
    %42 = arith.subf %7, %41 : vector<32x32xf32>
    %43 = vector.broadcast %40 : vector<32x1xf32> to vector<32x32xf32>
    %44 = arith.mulf %42, %43 : vector<32x32xf32>
    %45 = vector.broadcast %24 : vector<1x32xf32> to vector<32x32xf32>
    %46 = arith.mulf %45, %44 : vector<32x32xf32>
    %47 = vector.broadcast %25 : vector<1x32xf32> to vector<32x32xf32>
    %48 = arith.addf %46, %47 : vector<32x32xf32>
    %49 = arith.truncf %48 : vector<32x32xf32> to vector<32x32xbf16>
    %c0_22 = arith.constant 0 : index
    %c0_23 = arith.constant 0 : index
    %50 = vector.load %arg8[%c0_22, %c0_23] : memref<32x32xbf16, #tpu.memory_space<vmem>>, vector<32x32xbf16>
    %cst_24 = arith.constant dense<0.000000e+00> : vector<32x32xf32>
    %51 = tpu.matmul %49, %50, %cst_24 {dimension_numbers = #tpu.dot_dimension_numbers<[1], [0], [0], [1], [0, 0, 1, 1], [], []>} : vector<32x32xbf16>, vector<32x32xbf16>, vector<32x32xf32> -> vector<32x32xf32>
    %c0_25 = arith.constant 0 : index
    %c0_26 = arith.constant 0 : index
    %52 = vector.load %arg9[%c0_25, %c0_26] : memref<1x32xf32, #tpu.memory_space<vmem>>, vector<1x32xf32>
    %53 = vector.broadcast %52 : vector<1x32xf32> to vector<32x32xf32>
    %54 = arith.addf %51, %53 : vector<32x32xf32>
    %c0_27 = arith.constant 0 : index
    %c0_28 = arith.constant 0 : index
    %55 = vector.load %arg25[%c0_27, %c0_28] : memref<64x64xbf16, #tpu.memory_space<vmem>>, vector<64x64xbf16>
    %cst_29 = arith.constant 0.353553385 : f32
    %56 = vector.broadcast %cst_29 : f32 to vector<32x32xf32>
    %57 = arith.mulf %54, %56 : vector<32x32xf32>
    %58 = arith.truncf %57 : vector<32x32xf32> to vector<32x32xbf16>
    %59 = vector.extract_strided_slice %58 {offsets = [0, 0], sizes = [32, 8], strides = [1, 1]} : vector<32x32xbf16> to vector<32x8xbf16>
    %60 = vector.extract_strided_slice %55 {offsets = [0, 0], sizes = [64, 8], strides = [1, 1]} : vector<64x64xbf16> to vector<64x8xbf16>
    %61 = vector.extract_strided_slice %55 {offsets = [0, 32], sizes = [64, 8], strides = [1, 1]} : vector<64x64xbf16> to vector<64x8xbf16>
    %cst_30 = arith.constant dense<0.000000e+00> : vector<32x64xf32>
    %62 = tpu.matmul %59, %60, %cst_30 {dimension_numbers = #tpu.dot_dimension_numbers<[1], [1], [0], [0], [0, 0, 1, 0], [], []>} : vector<32x8xbf16>, vector<64x8xbf16>, vector<32x64xf32> -> vector<32x64xf32>
    %63 = arith.addf %62, %15 : vector<32x64xf32>
    %cst_31 = arith.constant dense<0xFF800000> : vector<32xf32>
    %64 = vector.multi_reduction <maximumf>, %63, %cst_31 [1] : vector<32x64xf32> to vector<32xf32>
    %65 = vector.shape_cast %64 : vector<32xf32> to vector<32x1xf32>
    %66 = vector.broadcast %65 : vector<32x1xf32> to vector<32x64xf32>
    %67 = arith.subf %63, %66 : vector<32x64xf32>
    %68 = math.exp %67 : vector<32x64xf32>
    %cst_32 = arith.constant dense<0.000000e+00> : vector<32xf32>
    %69 = vector.multi_reduction <add>, %68, %cst_32 [1] : vector<32x64xf32> to vector<32xf32>
    %70 = vector.shape_cast %69 : vector<32xf32> to vector<32x1xf32>
    %71 = tpu.reciprocal %70 {approx = true} : vector<32x1xf32> -> vector<32x1xf32>
    %72 = vector.broadcast %71 : vector<32x1xf32> to vector<32x64xf32>
    %73 = arith.mulf %68, %72 : vector<32x64xf32>
    %74 = arith.truncf %73 : vector<32x64xf32> to vector<32x64xbf16>
    %cst_33 = arith.constant dense<0.000000e+00> : vector<32x8xf32>
    %75 = tpu.matmul %74, %61, %cst_33 {dimension_numbers = #tpu.dot_dimension_numbers<[1], [0], [0], [1], [0, 0, 1, 1], [], []>} : vector<32x64xbf16>, vector<64x8xbf16>, vector<32x8xf32> -> vector<32x8xf32>
    %76 = vector.extract_strided_slice %58 {offsets = [0, 8], sizes = [32, 8], strides = [1, 1]} : vector<32x32xbf16> to vector<32x8xbf16>
    %77 = vector.extract_strided_slice %55 {offsets = [0, 8], sizes = [64, 8], strides = [1, 1]} : vector<64x64xbf16> to vector<64x8xbf16>
    %78 = vector.extract_strided_slice %55 {offsets = [0, 40], sizes = [64, 8], strides = [1, 1]} : vector<64x64xbf16> to vector<64x8xbf16>
    %cst_34 = arith.constant dense<0.000000e+00> : vector<32x64xf32>
    %79 = tpu.matmul %76, %77, %cst_34 {dimension_numbers = #tpu.dot_dimension_numbers<[1], [1], [0], [0], [0, 0, 1, 0], [], []>} : vector<32x8xbf16>, vector<64x8xbf16>, vector<32x64xf32> -> vector<32x64xf32>
    %80 = arith.addf %79, %15 : vector<32x64xf32>
    %cst_35 = arith.constant dense<0xFF800000> : vector<32xf32>
    %81 = vector.multi_reduction <maximumf>, %80, %cst_35 [1] : vector<32x64xf32> to vector<32xf32>
    %82 = vector.shape_cast %81 : vector<32xf32> to vector<32x1xf32>
    %83 = vector.broadcast %82 : vector<32x1xf32> to vector<32x64xf32>
    %84 = arith.subf %80, %83 : vector<32x64xf32>
    %85 = math.exp %84 : vector<32x64xf32>
    %cst_36 = arith.constant dense<0.000000e+00> : vector<32xf32>
    %86 = vector.multi_reduction <add>, %85, %cst_36 [1] : vector<32x64xf32> to vector<32xf32>
    %87 = vector.shape_cast %86 : vector<32xf32> to vector<32x1xf32>
    %88 = tpu.reciprocal %87 {approx = true} : vector<32x1xf32> -> vector<32x1xf32>
    %89 = vector.broadcast %88 : vector<32x1xf32> to vector<32x64xf32>
    %90 = arith.mulf %85, %89 : vector<32x64xf32>
    %91 = arith.truncf %90 : vector<32x64xf32> to vector<32x64xbf16>
    %cst_37 = arith.constant dense<0.000000e+00> : vector<32x8xf32>
    %92 = tpu.matmul %91, %78, %cst_37 {dimension_numbers = #tpu.dot_dimension_numbers<[1], [0], [0], [1], [0, 0, 1, 1], [], []>} : vector<32x64xbf16>, vector<64x8xbf16>, vector<32x8xf32> -> vector<32x8xf32>
    %93 = vector.extract_strided_slice %58 {offsets = [0, 16], sizes = [32, 8], strides = [1, 1]} : vector<32x32xbf16> to vector<32x8xbf16>
    %94 = vector.extract_strided_slice %55 {offsets = [0, 16], sizes = [64, 8], strides = [1, 1]} : vector<64x64xbf16> to vector<64x8xbf16>
    %95 = vector.extract_strided_slice %55 {offsets = [0, 48], sizes = [64, 8], strides = [1, 1]} : vector<64x64xbf16> to vector<64x8xbf16>
    %cst_38 = arith.constant dense<0.000000e+00> : vector<32x64xf32>
    %96 = tpu.matmul %93, %94, %cst_38 {dimension_numbers = #tpu.dot_dimension_numbers<[1], [1], [0], [0], [0, 0, 1, 0], [], []>} : vector<32x8xbf16>, vector<64x8xbf16>, vector<32x64xf32> -> vector<32x64xf32>
    %97 = arith.addf %96, %15 : vector<32x64xf32>
    %cst_39 = arith.constant dense<0xFF800000> : vector<32xf32>
    %98 = vector.multi_reduction <maximumf>, %97, %cst_39 [1] : vector<32x64xf32> to vector<32xf32>
    %99 = vector.shape_cast %98 : vector<32xf32> to vector<32x1xf32>
    %100 = vector.broadcast %99 : vector<32x1xf32> to vector<32x64xf32>
    %101 = arith.subf %97, %100 : vector<32x64xf32>
    %102 = math.exp %101 : vector<32x64xf32>
    %cst_40 = arith.constant dense<0.000000e+00> : vector<32xf32>
    %103 = vector.multi_reduction <add>, %102, %cst_40 [1] : vector<32x64xf32> to vector<32xf32>
    %104 = vector.shape_cast %103 : vector<32xf32> to vector<32x1xf32>
    %105 = tpu.reciprocal %104 {approx = true} : vector<32x1xf32> -> vector<32x1xf32>
    %106 = vector.broadcast %105 : vector<32x1xf32> to vector<32x64xf32>
    %107 = arith.mulf %102, %106 : vector<32x64xf32>
    %108 = arith.truncf %107 : vector<32x64xf32> to vector<32x64xbf16>
    %cst_41 = arith.constant dense<0.000000e+00> : vector<32x8xf32>
    %109 = tpu.matmul %108, %95, %cst_41 {dimension_numbers = #tpu.dot_dimension_numbers<[1], [0], [0], [1], [0, 0, 1, 1], [], []>} : vector<32x64xbf16>, vector<64x8xbf16>, vector<32x8xf32> -> vector<32x8xf32>
    %110 = vector.extract_strided_slice %58 {offsets = [0, 24], sizes = [32, 8], strides = [1, 1]} : vector<32x32xbf16> to vector<32x8xbf16>
    %111 = vector.extract_strided_slice %55 {offsets = [0, 24], sizes = [64, 8], strides = [1, 1]} : vector<64x64xbf16> to vector<64x8xbf16>
    %112 = vector.extract_strided_slice %55 {offsets = [0, 56], sizes = [64, 8], strides = [1, 1]} : vector<64x64xbf16> to vector<64x8xbf16>
    %cst_42 = arith.constant dense<0.000000e+00> : vector<32x64xf32>
    %113 = tpu.matmul %110, %111, %cst_42 {dimension_numbers = #tpu.dot_dimension_numbers<[1], [1], [0], [0], [0, 0, 1, 0], [], []>} : vector<32x8xbf16>, vector<64x8xbf16>, vector<32x64xf32> -> vector<32x64xf32>
    %114 = arith.addf %113, %15 : vector<32x64xf32>
    %cst_43 = arith.constant dense<0xFF800000> : vector<32xf32>
    %115 = vector.multi_reduction <maximumf>, %114, %cst_43 [1] : vector<32x64xf32> to vector<32xf32>
    %116 = vector.shape_cast %115 : vector<32xf32> to vector<32x1xf32>
    %117 = vector.broadcast %116 : vector<32x1xf32> to vector<32x64xf32>
    %118 = arith.subf %114, %117 : vector<32x64xf32>
    %119 = math.exp %118 : vector<32x64xf32>
    %cst_44 = arith.constant dense<0.000000e+00> : vector<32xf32>
    %120 = vector.multi_reduction <add>, %119, %cst_44 [1] : vector<32x64xf32> to vector<32xf32>
    %121 = vector.shape_cast %120 : vector<32xf32> to vector<32x1xf32>
    %122 = tpu.reciprocal %121 {approx = true} : vector<32x1xf32> -> vector<32x1xf32>
    %123 = vector.broadcast %122 : vector<32x1xf32> to vector<32x64xf32>
    %124 = arith.mulf %119, %123 : vector<32x64xf32>
    %125 = arith.truncf %124 : vector<32x64xf32> to vector<32x64xbf16>
    %cst_45 = arith.constant dense<0.000000e+00> : vector<32x8xf32>
    %126 = tpu.matmul %125, %112, %cst_45 {dimension_numbers = #tpu.dot_dimension_numbers<[1], [0], [0], [1], [0, 0, 1, 1], [], []>} : vector<32x64xbf16>, vector<64x8xbf16>, vector<32x8xf32> -> vector<32x8xf32>
    %127 = tpu.concatenate %75, %92, %109, %126 in 1 : vector<32x8xf32>, vector<32x8xf32>, vector<32x8xf32>, vector<32x8xf32> -> vector<32x32xf32>
    %128 = arith.truncf %127 : vector<32x32xf32> to vector<32x32xbf16>
    %c0_46 = arith.constant 0 : index
    %c0_47 = arith.constant 0 : index
    %129 = vector.load %arg12[%c0_46, %c0_47] : memref<32x32xbf16, #tpu.memory_space<vmem>>, vector<32x32xbf16>
    %cst_48 = arith.constant dense<0.000000e+00> : vector<32x32xf32>
    %130 = tpu.matmul %128, %129, %cst_48 {dimension_numbers = #tpu.dot_dimension_numbers<[1], [0], [0], [1], [0, 0, 1, 1], [], []>} : vector<32x32xbf16>, vector<32x32xbf16>, vector<32x32xf32> -> vector<32x32xf32>
    %c0_49 = arith.constant 0 : index
    %c0_50 = arith.constant 0 : index
    %131 = vector.load %arg13[%c0_49, %c0_50] : memref<1x32xf32, #tpu.memory_space<vmem>>, vector<1x32xf32>
    %132 = vector.broadcast %131 : vector<1x32xf32> to vector<32x32xf32>
    %133 = arith.addf %130, %132 : vector<32x32xf32>
    %134 = arith.addf %7, %133 : vector<32x32xf32>
    %c1 = arith.constant 1 : index
    %c0_51 = arith.constant 0 : index
    %135 = vector.load %arg6[%c1, %c0_51] : memref<3x32xf32, #tpu.memory_space<vmem>>, vector<1x32xf32>
    %c1_52 = arith.constant 1 : index
    %c0_53 = arith.constant 0 : index
    %136 = vector.load %arg7[%c1_52, %c0_53] : memref<3x32xf32, #tpu.memory_space<vmem>>, vector<1x32xf32>
    %cst_54 = arith.constant dense<0.000000e+00> : vector<32xf32>
    %137 = vector.multi_reduction <add>, %134, %cst_54 [1] : vector<32x32xf32> to vector<32xf32>
    %138 = vector.shape_cast %137 : vector<32xf32> to vector<32x1xf32>
    %cst_55 = arith.constant 3.200000e+01 : f32
    %139 = vector.broadcast %cst_55 : f32 to vector<32x1xf32>
    %140 = arith.divf %138, %139 : vector<32x1xf32>
    %141 = vector.broadcast %140 : vector<32x1xf32> to vector<32x32xf32>
    %142 = arith.subf %134, %141 : vector<32x32xf32>
    %143 = arith.mulf %142, %142 : vector<32x32xf32>
    %cst_56 = arith.constant dense<0.000000e+00> : vector<32xf32>
    %144 = vector.multi_reduction <add>, %143, %cst_56 [1] : vector<32x32xf32> to vector<32xf32>
    %145 = vector.shape_cast %144 : vector<32xf32> to vector<32x1xf32>
    %cst_57 = arith.constant 0.0322580636 : f32
    %146 = vector.broadcast %cst_57 : f32 to vector<32x1xf32>
    %147 = arith.mulf %145, %146 : vector<32x1xf32>
    %148 = math.sqrt %147 : vector<32x1xf32>
    %cst_58 = arith.constant 9.99999997E-7 : f32
    %149 = vector.broadcast %cst_58 : f32 to vector<32x1xf32>
    %150 = arith.addf %148, %149 : vector<32x1xf32>
    %151 = tpu.reciprocal %150 {approx = true} : vector<32x1xf32> -> vector<32x1xf32>
    %152 = vector.broadcast %140 : vector<32x1xf32> to vector<32x32xf32>
    %153 = arith.subf %134, %152 : vector<32x32xf32>
    %154 = vector.broadcast %151 : vector<32x1xf32> to vector<32x32xf32>
    %155 = arith.mulf %153, %154 : vector<32x32xf32>
    %156 = vector.broadcast %135 : vector<1x32xf32> to vector<32x32xf32>
    %157 = arith.mulf %156, %155 : vector<32x32xf32>
    %158 = vector.broadcast %136 : vector<1x32xf32> to vector<32x32xf32>
    %159 = arith.addf %157, %158 : vector<32x32xf32>
    %160 = arith.truncf %159 : vector<32x32xf32> to vector<32x32xbf16>
    %c0_59 = arith.constant 0 : index
    %c0_60 = arith.constant 0 : index
    %161 = vector.load %arg14[%c0_59, %c0_60] : memref<32x32xbf16, #tpu.memory_space<vmem>>, vector<32x32xbf16>
    %cst_61 = arith.constant dense<0.000000e+00> : vector<32x32xf32>
    %162 = tpu.matmul %160, %161, %cst_61 {dimension_numbers = #tpu.dot_dimension_numbers<[1], [0], [0], [1], [0, 0, 1, 1], [], []>} : vector<32x32xbf16>, vector<32x32xbf16>, vector<32x32xf32> -> vector<32x32xf32>
    %c0_62 = arith.constant 0 : index
    %c0_63 = arith.constant 0 : index
    %163 = vector.load %arg15[%c0_62, %c0_63] : memref<1x32xf32, #tpu.memory_space<vmem>>, vector<1x32xf32>
    %164 = vector.broadcast %163 : vector<1x32xf32> to vector<32x32xf32>
    %165 = arith.addf %162, %164 : vector<32x32xf32>
    %c0_64 = arith.constant 0 : index
    %c0_65 = arith.constant 0 : index
    %166 = vector.load %arg26[%c0_64, %c0_65] : memref<16x64xbf16, #tpu.memory_space<vmem>>, vector<16x64xbf16>
    %cst_66 = arith.constant 0.353553385 : f32
    %167 = vector.broadcast %cst_66 : f32 to vector<32x32xf32>
    %168 = arith.mulf %165, %167 : vector<32x32xf32>
    %169 = arith.truncf %168 : vector<32x32xf32> to vector<32x32xbf16>
    %170 = vector.extract_strided_slice %169 {offsets = [0, 0], sizes = [32, 8], strides = [1, 1]} : vector<32x32xbf16> to vector<32x8xbf16>
    %171 = vector.extract_strided_slice %166 {offsets = [0, 0], sizes = [16, 8], strides = [1, 1]} : vector<16x64xbf16> to vector<16x8xbf16>
    %172 = vector.extract_strided_slice %166 {offsets = [0, 32], sizes = [16, 8], strides = [1, 1]} : vector<16x64xbf16> to vector<16x8xbf16>
    %cst_67 = arith.constant dense<0.000000e+00> : vector<32x16xf32>
    %173 = tpu.matmul %170, %171, %cst_67 {dimension_numbers = #tpu.dot_dimension_numbers<[1], [1], [0], [0], [0, 0, 1, 0], [], []>} : vector<32x8xbf16>, vector<16x8xbf16>, vector<32x16xf32> -> vector<32x16xf32>
    %174 = vector.broadcast %23 : vector<1x16xf32> to vector<32x16xf32>
    %175 = arith.addf %173, %174 : vector<32x16xf32>
    %cst_68 = arith.constant dense<0xFF800000> : vector<32xf32>
    %176 = vector.multi_reduction <maximumf>, %175, %cst_68 [1] : vector<32x16xf32> to vector<32xf32>
    %177 = vector.shape_cast %176 : vector<32xf32> to vector<32x1xf32>
    %178 = vector.broadcast %177 : vector<32x1xf32> to vector<32x16xf32>
    %179 = arith.subf %175, %178 : vector<32x16xf32>
    %180 = math.exp %179 : vector<32x16xf32>
    %cst_69 = arith.constant dense<0.000000e+00> : vector<32xf32>
    %181 = vector.multi_reduction <add>, %180, %cst_69 [1] : vector<32x16xf32> to vector<32xf32>
    %182 = vector.shape_cast %181 : vector<32xf32> to vector<32x1xf32>
    %183 = tpu.reciprocal %182 {approx = true} : vector<32x1xf32> -> vector<32x1xf32>
    %184 = vector.broadcast %183 : vector<32x1xf32> to vector<32x16xf32>
    %185 = arith.mulf %180, %184 : vector<32x16xf32>
    %186 = arith.truncf %185 : vector<32x16xf32> to vector<32x16xbf16>
    %cst_70 = arith.constant dense<0.000000e+00> : vector<32x8xf32>
    %187 = tpu.matmul %186, %172, %cst_70 {dimension_numbers = #tpu.dot_dimension_numbers<[1], [0], [0], [1], [0, 0, 1, 1], [], []>} : vector<32x16xbf16>, vector<16x8xbf16>, vector<32x8xf32> -> vector<32x8xf32>
    %188 = vector.extract_strided_slice %169 {offsets = [0, 8], sizes = [32, 8], strides = [1, 1]} : vector<32x32xbf16> to vector<32x8xbf16>
    %189 = vector.extract_strided_slice %166 {offsets = [0, 8], sizes = [16, 8], strides = [1, 1]} : vector<16x64xbf16> to vector<16x8xbf16>
    %190 = vector.extract_strided_slice %166 {offsets = [0, 40], sizes = [16, 8], strides = [1, 1]} : vector<16x64xbf16> to vector<16x8xbf16>
    %cst_71 = arith.constant dense<0.000000e+00> : vector<32x16xf32>
    %191 = tpu.matmul %188, %189, %cst_71 {dimension_numbers = #tpu.dot_dimension_numbers<[1], [1], [0], [0], [0, 0, 1, 0], [], []>} : vector<32x8xbf16>, vector<16x8xbf16>, vector<32x16xf32> -> vector<32x16xf32>
    %192 = vector.broadcast %23 : vector<1x16xf32> to vector<32x16xf32>
    %193 = arith.addf %191, %192 : vector<32x16xf32>
    %cst_72 = arith.constant dense<0xFF800000> : vector<32xf32>
    %194 = vector.multi_reduction <maximumf>, %193, %cst_72 [1] : vector<32x16xf32> to vector<32xf32>
    %195 = vector.shape_cast %194 : vector<32xf32> to vector<32x1xf32>
    %196 = vector.broadcast %195 : vector<32x1xf32> to vector<32x16xf32>
    %197 = arith.subf %193, %196 : vector<32x16xf32>
    %198 = math.exp %197 : vector<32x16xf32>
    %cst_73 = arith.constant dense<0.000000e+00> : vector<32xf32>
    %199 = vector.multi_reduction <add>, %198, %cst_73 [1] : vector<32x16xf32> to vector<32xf32>
    %200 = vector.shape_cast %199 : vector<32xf32> to vector<32x1xf32>
    %201 = tpu.reciprocal %200 {approx = true} : vector<32x1xf32> -> vector<32x1xf32>
    %202 = vector.broadcast %201 : vector<32x1xf32> to vector<32x16xf32>
    %203 = arith.mulf %198, %202 : vector<32x16xf32>
    %204 = arith.truncf %203 : vector<32x16xf32> to vector<32x16xbf16>
    %cst_74 = arith.constant dense<0.000000e+00> : vector<32x8xf32>
    %205 = tpu.matmul %204, %190, %cst_74 {dimension_numbers = #tpu.dot_dimension_numbers<[1], [0], [0], [1], [0, 0, 1, 1], [], []>} : vector<32x16xbf16>, vector<16x8xbf16>, vector<32x8xf32> -> vector<32x8xf32>
    %206 = vector.extract_strided_slice %169 {offsets = [0, 16], sizes = [32, 8], strides = [1, 1]} : vector<32x32xbf16> to vector<32x8xbf16>
    %207 = vector.extract_strided_slice %166 {offsets = [0, 16], sizes = [16, 8], strides = [1, 1]} : vector<16x64xbf16> to vector<16x8xbf16>
    %208 = vector.extract_strided_slice %166 {offsets = [0, 48], sizes = [16, 8], strides = [1, 1]} : vector<16x64xbf16> to vector<16x8xbf16>
    %cst_75 = arith.constant dense<0.000000e+00> : vector<32x16xf32>
    %209 = tpu.matmul %206, %207, %cst_75 {dimension_numbers = #tpu.dot_dimension_numbers<[1], [1], [0], [0], [0, 0, 1, 0], [], []>} : vector<32x8xbf16>, vector<16x8xbf16>, vector<32x16xf32> -> vector<32x16xf32>
    %210 = vector.broadcast %23 : vector<1x16xf32> to vector<32x16xf32>
    %211 = arith.addf %209, %210 : vector<32x16xf32>
    %cst_76 = arith.constant dense<0xFF800000> : vector<32xf32>
    %212 = vector.multi_reduction <maximumf>, %211, %cst_76 [1] : vector<32x16xf32> to vector<32xf32>
    %213 = vector.shape_cast %212 : vector<32xf32> to vector<32x1xf32>
    %214 = vector.broadcast %213 : vector<32x1xf32> to vector<32x16xf32>
    %215 = arith.subf %211, %214 : vector<32x16xf32>
    %216 = math.exp %215 : vector<32x16xf32>
    %cst_77 = arith.constant dense<0.000000e+00> : vector<32xf32>
    %217 = vector.multi_reduction <add>, %216, %cst_77 [1] : vector<32x16xf32> to vector<32xf32>
    %218 = vector.shape_cast %217 : vector<32xf32> to vector<32x1xf32>
    %219 = tpu.reciprocal %218 {approx = true} : vector<32x1xf32> -> vector<32x1xf32>
    %220 = vector.broadcast %219 : vector<32x1xf32> to vector<32x16xf32>
    %221 = arith.mulf %216, %220 : vector<32x16xf32>
    %222 = arith.truncf %221 : vector<32x16xf32> to vector<32x16xbf16>
    %cst_78 = arith.constant dense<0.000000e+00> : vector<32x8xf32>
    %223 = tpu.matmul %222, %208, %cst_78 {dimension_numbers = #tpu.dot_dimension_numbers<[1], [0], [0], [1], [0, 0, 1, 1], [], []>} : vector<32x16xbf16>, vector<16x8xbf16>, vector<32x8xf32> -> vector<32x8xf32>
    %224 = vector.extract_strided_slice %169 {offsets = [0, 24], sizes = [32, 8], strides = [1, 1]} : vector<32x32xbf16> to vector<32x8xbf16>
    %225 = vector.extract_strided_slice %166 {offsets = [0, 24], sizes = [16, 8], strides = [1, 1]} : vector<16x64xbf16> to vector<16x8xbf16>
    %226 = vector.extract_strided_slice %166 {offsets = [0, 56], sizes = [16, 8], strides = [1, 1]} : vector<16x64xbf16> to vector<16x8xbf16>
    %cst_79 = arith.constant dense<0.000000e+00> : vector<32x16xf32>
    %227 = tpu.matmul %224, %225, %cst_79 {dimension_numbers = #tpu.dot_dimension_numbers<[1], [1], [0], [0], [0, 0, 1, 0], [], []>} : vector<32x8xbf16>, vector<16x8xbf16>, vector<32x16xf32> -> vector<32x16xf32>
    %228 = vector.broadcast %23 : vector<1x16xf32> to vector<32x16xf32>
    %229 = arith.addf %227, %228 : vector<32x16xf32>
    %cst_80 = arith.constant dense<0xFF800000> : vector<32xf32>
    %230 = vector.multi_reduction <maximumf>, %229, %cst_80 [1] : vector<32x16xf32> to vector<32xf32>
    %231 = vector.shape_cast %230 : vector<32xf32> to vector<32x1xf32>
    %232 = vector.broadcast %231 : vector<32x1xf32> to vector<32x16xf32>
    %233 = arith.subf %229, %232 : vector<32x16xf32>
    %234 = math.exp %233 : vector<32x16xf32>
    %cst_81 = arith.constant dense<0.000000e+00> : vector<32xf32>
    %235 = vector.multi_reduction <add>, %234, %cst_81 [1] : vector<32x16xf32> to vector<32xf32>
    %236 = vector.shape_cast %235 : vector<32xf32> to vector<32x1xf32>
    %237 = tpu.reciprocal %236 {approx = true} : vector<32x1xf32> -> vector<32x1xf32>
    %238 = vector.broadcast %237 : vector<32x1xf32> to vector<32x16xf32>
    %239 = arith.mulf %234, %238 : vector<32x16xf32>
    %240 = arith.truncf %239 : vector<32x16xf32> to vector<32x16xbf16>
    %cst_82 = arith.constant dense<0.000000e+00> : vector<32x8xf32>
    %241 = tpu.matmul %240, %226, %cst_82 {dimension_numbers = #tpu.dot_dimension_numbers<[1], [0], [0], [1], [0, 0, 1, 1], [], []>} : vector<32x16xbf16>, vector<16x8xbf16>, vector<32x8xf32> -> vector<32x8xf32>
    %242 = tpu.concatenate %187, %205, %223, %241 in 1 : vector<32x8xf32>, vector<32x8xf32>, vector<32x8xf32>, vector<32x8xf32> -> vector<32x32xf32>
    %243 = arith.truncf %242 : vector<32x32xf32> to vector<32x32xbf16>
    %c0_83 = arith.constant 0 : index
    %c0_84 = arith.constant 0 : index
    %244 = vector.load %arg18[%c0_83, %c0_84] : memref<32x32xbf16, #tpu.memory_space<vmem>>, vector<32x32xbf16>
    %cst_85 = arith.constant dense<0.000000e+00> : vector<32x32xf32>
    %245 = tpu.matmul %243, %244, %cst_85 {dimension_numbers = #tpu.dot_dimension_numbers<[1], [0], [0], [1], [0, 0, 1, 1], [], []>} : vector<32x32xbf16>, vector<32x32xbf16>, vector<32x32xf32> -> vector<32x32xf32>
    %c0_86 = arith.constant 0 : index
    %c0_87 = arith.constant 0 : index
    %246 = vector.load %arg19[%c0_86, %c0_87] : memref<1x32xf32, #tpu.memory_space<vmem>>, vector<1x32xf32>
    %247 = vector.broadcast %246 : vector<1x32xf32> to vector<32x32xf32>
    %248 = arith.addf %245, %247 : vector<32x32xf32>
    %249 = arith.addf %134, %248 : vector<32x32xf32>
    %c2 = arith.constant 2 : index
    %c0_88 = arith.constant 0 : index
    %250 = vector.load %arg6[%c2, %c0_88] : memref<3x32xf32, #tpu.memory_space<vmem>>, vector<1x32xf32>
    %c2_89 = arith.constant 2 : index
    %c0_90 = arith.constant 0 : index
    %251 = vector.load %arg7[%c2_89, %c0_90] : memref<3x32xf32, #tpu.memory_space<vmem>>, vector<1x32xf32>
    %cst_91 = arith.constant dense<0.000000e+00> : vector<32xf32>
    %252 = vector.multi_reduction <add>, %249, %cst_91 [1] : vector<32x32xf32> to vector<32xf32>
    %253 = vector.shape_cast %252 : vector<32xf32> to vector<32x1xf32>
    %cst_92 = arith.constant 3.200000e+01 : f32
    %254 = vector.broadcast %cst_92 : f32 to vector<32x1xf32>
    %255 = arith.divf %253, %254 : vector<32x1xf32>
    %256 = vector.broadcast %255 : vector<32x1xf32> to vector<32x32xf32>
    %257 = arith.subf %249, %256 : vector<32x32xf32>
    %258 = arith.mulf %257, %257 : vector<32x32xf32>
    %cst_93 = arith.constant dense<0.000000e+00> : vector<32xf32>
    %259 = vector.multi_reduction <add>, %258, %cst_93 [1] : vector<32x32xf32> to vector<32xf32>
    %260 = vector.shape_cast %259 : vector<32xf32> to vector<32x1xf32>
    %cst_94 = arith.constant 0.0322580636 : f32
    %261 = vector.broadcast %cst_94 : f32 to vector<32x1xf32>
    %262 = arith.mulf %260, %261 : vector<32x1xf32>
    %263 = math.sqrt %262 : vector<32x1xf32>
    %cst_95 = arith.constant 9.99999997E-7 : f32
    %264 = vector.broadcast %cst_95 : f32 to vector<32x1xf32>
    %265 = arith.addf %263, %264 : vector<32x1xf32>
    %266 = tpu.reciprocal %265 {approx = true} : vector<32x1xf32> -> vector<32x1xf32>
    %267 = vector.broadcast %255 : vector<32x1xf32> to vector<32x32xf32>
    %268 = arith.subf %249, %267 : vector<32x32xf32>
    %269 = vector.broadcast %266 : vector<32x1xf32> to vector<32x32xf32>
    %270 = arith.mulf %268, %269 : vector<32x32xf32>
    %271 = vector.broadcast %250 : vector<1x32xf32> to vector<32x32xf32>
    %272 = arith.mulf %271, %270 : vector<32x32xf32>
    %273 = vector.broadcast %251 : vector<1x32xf32> to vector<32x32xf32>
    %274 = arith.addf %272, %273 : vector<32x32xf32>
    %275 = arith.truncf %274 : vector<32x32xf32> to vector<32x32xbf16>
    %c0_96 = arith.constant 0 : index
    %c0_97 = arith.constant 0 : index
    %276 = vector.load %arg20[%c0_96, %c0_97] : memref<32x64xbf16, #tpu.memory_space<vmem>>, vector<32x64xbf16>
    %cst_98 = arith.constant dense<0.000000e+00> : vector<32x64xf32>
    %277 = tpu.matmul %275, %276, %cst_98 {dimension_numbers = #tpu.dot_dimension_numbers<[1], [0], [0], [1], [0, 0, 1, 1], [], []>} : vector<32x32xbf16>, vector<32x64xbf16>, vector<32x64xf32> -> vector<32x64xf32>
    %c0_99 = arith.constant 0 : index
    %c0_100 = arith.constant 0 : index
    %278 = vector.load %arg21[%c0_99, %c0_100] : memref<1x64xf32, #tpu.memory_space<vmem>>, vector<1x64xf32>
    %279 = vector.broadcast %278 : vector<1x64xf32> to vector<32x64xf32>
    %280 = arith.addf %277, %279 : vector<32x64xf32>
    %cst_101 = arith.constant 0.000000e+00 : f32
    %281 = vector.broadcast %cst_101 : f32 to vector<32x64xf32>
    %282 = arith.maximumf %280, %281 : vector<32x64xf32>
    %283 = arith.truncf %282 : vector<32x64xf32> to vector<32x64xbf16>
    %c0_102 = arith.constant 0 : index
    %c0_103 = arith.constant 0 : index
    %284 = vector.load %arg22[%c0_102, %c0_103] : memref<64x32xbf16, #tpu.memory_space<vmem>>, vector<64x32xbf16>
    %cst_104 = arith.constant dense<0.000000e+00> : vector<32x32xf32>
    %285 = tpu.matmul %283, %284, %cst_104 {dimension_numbers = #tpu.dot_dimension_numbers<[1], [0], [0], [1], [0, 0, 1, 1], [], []>} : vector<32x64xbf16>, vector<64x32xbf16>, vector<32x32xf32> -> vector<32x32xf32>
    %c0_105 = arith.constant 0 : index
    %c0_106 = arith.constant 0 : index
    %286 = vector.load %arg23[%c0_105, %c0_106] : memref<1x32xf32, #tpu.memory_space<vmem>>, vector<1x32xf32>
    %287 = vector.broadcast %286 : vector<1x32xf32> to vector<32x32xf32>
    %288 = arith.addf %285, %287 : vector<32x32xf32>
    %289 = arith.addf %249, %288 : vector<32x32xf32>
    %c0_107 = arith.constant 0 : index
    %c0_108 = arith.constant 0 : index
    %c0_109 = arith.constant 0 : index
    %290 = vector.load %arg24[%c0_107, %c0_108, %c0_109] : memref<1x32x32xf32, #tpu.memory_space<vmem>>, vector<1x32x32xf32>
    %291 = vector.shape_cast %290 : vector<1x32x32xf32> to vector<32x32xf32>
    %292 = vector.shape_cast %289 : vector<32x32xf32> to vector<1x32x32xf32>
    tpu.vector_store %arg24[%c0_107, %c0_108, %c0_109], %292 {strides = array<i32>} : memref<1x32x32xf32, #tpu.memory_space<vmem>>, vector<1x32x32xf32>,
    return
  }
  func.func @transform_0(%arg0: i32, %arg1: i32) -> (i32, i32, i32) {
    %c0_i32 = arith.constant 0 : i32
    %c0_i32_0 = arith.constant 0 : i32
    %c0_i32_1 = arith.constant 0 : i32
    return %arg0, %c0_i32, %c0_i32_0 : i32, i32, i32
  }
  func.func @transform_1(%arg0: i32, %arg1: i32) -> (i32, i32, i32) {
    %c0_i32 = arith.constant 0 : i32
    %c0_i32_0 = arith.constant 0 : i32
    %c0_i32_1 = arith.constant 0 : i32
    return %arg0, %c0_i32, %c0_i32_0 : i32, i32, i32
  }
  func.func @transform_2(%arg0: i32, %arg1: i32) -> (i32, i32, i32) {
    %c0_i32 = arith.constant 0 : i32
    %c0_i32_0 = arith.constant 0 : i32
    return %arg0, %arg1, %c0_i32 : i32, i32, i32
  }
  func.func @transform_3(%arg0: i32, %arg1: i32) -> (i32, i32, i32) {
    %c0_i32 = arith.constant 0 : i32
    %c0_i32_0 = arith.constant 0 : i32
    %c0_i32_1 = arith.constant 0 : i32
    return %arg0, %c0_i32, %c0_i32_0 : i32, i32, i32
  }
  func.func @transform_4(%arg0: i32, %arg1: i32) -> (i32, i32) {
    %c0_i32 = arith.constant 0 : i32
    %c0_i32_0 = arith.constant 0 : i32
    %c0_i32_1 = arith.constant 0 : i32
    return %c0_i32, %c0_i32_0 : i32, i32
  }
  func.func @transform_5(%arg0: i32, %arg1: i32) -> (i32, i32) {
    %c0_i32 = arith.constant 0 : i32
    %c0_i32_0 = arith.constant 0 : i32
    %c0_i32_1 = arith.constant 0 : i32
    return %c0_i32, %c0_i32_0 : i32, i32
  }
  func.func @transform_6(%arg0: i32, %arg1: i32) -> (i32, i32) {
    %c0_i32 = arith.constant 0 : i32
    %c0_i32_0 = arith.constant 0 : i32
    %c0_i32_1 = arith.constant 0 : i32
    return %c0_i32, %c0_i32_0 : i32, i32
  }
  func.func @transform_7(%arg0: i32, %arg1: i32) -> (i32, i32) {
    %c0_i32 = arith.constant 0 : i32
    %c0_i32_0 = arith.constant 0 : i32
    %c0_i32_1 = arith.constant 0 : i32
    return %c0_i32, %c0_i32_0 : i32, i32
  }
  func.func @transform_8(%arg0: i32, %arg1: i32) -> (i32, i32) {
    %c0_i32 = arith.constant 0 : i32
    %c0_i32_0 = arith.constant 0 : i32
    %c0_i32_1 = arith.constant 0 : i32
    return %c0_i32, %c0_i32_0 : i32, i32
  }
  func.func @transform_9(%arg0: i32, %arg1: i32) -> (i32, i32) {
    %c0_i32 = arith.constant 0 : i32
    %c0_i32_0 = arith.constant 0 : i32
    %c0_i32_1 = arith.constant 0 : i32
    return %c0_i32, %c0_i32_0 : i32, i32
  }
  func.func @transform_10(%arg0: i32, %arg1: i32) -> (i32, i32) {
    %c0_i32 = arith.constant 0 : i32
    %c0_i32_0 = arith.constant 0 : i32
    %c0_i32_1 = arith.constant 0 : i32
    return %c0_i32, %c0_i32_0 : i32, i32
  }
  func.func @transform_11(%arg0: i32, %arg1: i32) -> (i32, i32) {
    %c0_i32 = arith.constant 0 : i32
    %c0_i32_0 = arith.constant 0 : i32
    %c0_i32_1 = arith.constant 0 : i32
    return %c0_i32, %c0_i32_0 : i32, i32
  }
  func.func @transform_12(%arg0: i32, %arg1: i32) -> (i32, i32) {
    %c0_i32 = arith.constant 0 : i32
    %c0_i32_0 = arith.constant 0 : i32
    %c0_i32_1 = arith.constant 0 : i32
    return %c0_i32, %c0_i32_0 : i32, i32
  }
  func.func @transform_13(%arg0: i32, %arg1: i32) -> (i32, i32) {
    %c0_i32 = arith.constant 0 : i32
    %c0_i32_0 = arith.constant 0 : i32
    %c0_i32_1 = arith.constant 0 : i32
    return %c0_i32, %c0_i32_0 : i32, i32
  }
  func.func @transform_14(%arg0: i32, %arg1: i32) -> (i32, i32) {
    %c0_i32 = arith.constant 0 : i32
    %c0_i32_0 = arith.constant 0 : i32
    %c0_i32_1 = arith.constant 0 : i32
    return %c0_i32, %c0_i32_0 : i32, i32
  }
  func.func @transform_15(%arg0: i32, %arg1: i32) -> (i32, i32) {
    %c0_i32 = arith.constant 0 : i32
    %c0_i32_0 = arith.constant 0 : i32
    %c0_i32_1 = arith.constant 0 : i32
    return %c0_i32, %c0_i32_0 : i32, i32
  }
  func.func @transform_16(%arg0: i32, %arg1: i32) -> (i32, i32) {
    %c0_i32 = arith.constant 0 : i32
    %c0_i32_0 = arith.constant 0 : i32
    %c0_i32_1 = arith.constant 0 : i32
    return %c0_i32, %c0_i32_0 : i32, i32
  }
  func.func @transform_17(%arg0: i32, %arg1: i32) -> (i32, i32) {
    %c0_i32 = arith.constant 0 : i32
    %c0_i32_0 = arith.constant 0 : i32
    %c0_i32_1 = arith.constant 0 : i32
    return %c0_i32, %c0_i32_0 : i32, i32
  }
  func.func @transform_18(%arg0: i32, %arg1: i32) -> (i32, i32) {
    %c0_i32 = arith.constant 0 : i32
    %c0_i32_0 = arith.constant 0 : i32
    %c0_i32_1 = arith.constant 0 : i32
    return %c0_i32, %c0_i32_0 : i32, i32
  }
  func.func @transform_19(%arg0: i32, %arg1: i32) -> (i32, i32) {
    %c0_i32 = arith.constant 0 : i32
    %c0_i32_0 = arith.constant 0 : i32
    %c0_i32_1 = arith.constant 0 : i32
    return %c0_i32, %c0_i32_0 : i32, i32
  }
  func.func @transform_20(%arg0: i32, %arg1: i32) -> (i32, i32) {
    %c0_i32 = arith.constant 0 : i32
    %c0_i32_0 = arith.constant 0 : i32
    %c0_i32_1 = arith.constant 0 : i32
    return %c0_i32, %c0_i32_0 : i32, i32
  }
  func.func @transform_21(%arg0: i32, %arg1: i32) -> (i32, i32) {
    %c0_i32 = arith.constant 0 : i32
    %c0_i32_0 = arith.constant 0 : i32
    %c0_i32_1 = arith.constant 0 : i32
    return %c0_i32, %c0_i32_0 : i32, i32
  }
  func.func @transform_22(%arg0: i32, %arg1: i32) -> (i32, i32, i32) {
    %c0_i32 = arith.constant 0 : i32
    %c0_i32_0 = arith.constant 0 : i32
    return %arg0, %arg1, %c0_i32 : i32, i32, i32
  }
}

</mosaic_0001>

<llo_original>
// kernel: tpu_custom_call.1
$region0: #{tpu_custom_call.1}
  #allocation0 [shape = 'u32[]', space=smem, size = 0x4, offset = 0x4, fixed_abs, tag = 'smem constant byte address 0x4 - core index']
  #allocation1 [shape = 'u32[144,128]{1,0:T(1,128)}', space=vmem, size = 0x12000, scoped, tag = 'internal scratch']
  #allocation2 [shape = 'bf16[64,64]{1,0:T(16,128)(2,1)}', space=vmem, size = 0x4000, scoped, tag = 'scratch operand']
  #allocation3 [shape = 'bf16[16,64]{1,0:T(16,128)(2,1)}', space=vmem, size = 0x1000, scoped, tag = 'scratch operand']
  %s0 = inlined_call_operand.hbm [shape: f32[2,64,32], index: 0, kind: input, shape index: {}]
  %s1 = inlined_call_operand.hbm [shape: f32[2,16,32], index: 1, kind: input, shape index: {}]
  %s2 = inlined_call_operand.hbm [shape: s8[2,64,64], index: 2, kind: input, shape index: {}]
  %s3 = inlined_call_operand.hbm [shape: s8[2,1,16], index: 3, kind: input, shape index: {}]
  %s4 = inlined_call_operand.hbm [shape: f32[3,32], index: 4, kind: input, shape index: {}]
  %s5 = inlined_call_operand.hbm [shape: f32[3,32], index: 5, kind: input, shape index: {}]
  %s6 = inlined_call_operand.hbm [shape: bf16[32,32], index: 6, kind: input, shape index: {}]
  %s7 = inlined_call_operand.hbm [shape: f32[1,32], index: 7, kind: input, shape index: {}]
  %s8 = inlined_call_operand.hbm [shape: bf16[32,64], index: 8, kind: input, shape index: {}]
  %s9 = inlined_call_operand.hbm [shape: f32[1,64], index: 9, kind: input, shape index: {}]
  %s10 = inlined_call_operand.hbm [shape: bf16[32,32], index: 10, kind: input, shape index: {}]
  %s11 = inlined_call_operand.hbm [shape: f32[1,32], index: 11, kind: input, shape index: {}]
  %s12 = inlined_call_operand.hbm [shape: bf16[32,32], index: 12, kind: input, shape index: {}]
  %s13 = inlined_call_operand.hbm [shape: f32[1,32], index: 13, kind: input, shape index: {}]
  %s14 = inlined_call_operand.hbm [shape: bf16[32,64], index: 14, kind: input, shape index: {}]
  %s15 = inlined_call_operand.hbm [shape: f32[1,64], index: 15, kind: input, shape index: {}]
  %s16 = inlined_call_operand.hbm [shape: bf16[32,32], index: 16, kind: input, shape index: {}]
  %s17 = inlined_call_operand.hbm [shape: f32[1,32], index: 17, kind: input, shape index: {}]
  %s18 = inlined_call_operand.hbm [shape: bf16[32,64], index: 18, kind: input, shape index: {}]
  %s19 = inlined_call_operand.hbm [shape: f32[1,64], index: 19, kind: input, shape index: {}]
  %s20 = inlined_call_operand.hbm [shape: bf16[64,32], index: 20, kind: input, shape index: {}]
  %s21 = inlined_call_operand.hbm [shape: f32[1,32], index: 21, kind: input, shape index: {}]
  %s22 = inlined_call_operand.hbm [shape: f32[2,64,32], index: 22, kind: output, shape index: {}]
  %s23 = sld [smem:[#allocation0]]
  $region213: #{tpu_custom_call.1} parent=0
    _
  %s25 = ssub.s32 1, %s23
  %s26 = scalar_select 0, %s25, %s23
  $region1: #{tpu_custom_call.1} parent=0
    #allocation4 [shape = 'u8[65536]{0}', space=vmem, size = 0x10000, scoped, tag = 'input window, operand 0']
    #allocation5 [shape = 's32[2]{0}', space=sflag, size = 0x8, scoped, tag = 'scoped memory for tpu_custom_call.1']
    #allocation6 [shape = 's32[2]{0}', space=sflag, size = 0x8, scoped, tag = 'scoped memory for tpu_custom_call.1']
    #allocation7 [shape = 'u8[16384]{0}', space=vmem, size = 0x4000, scoped, tag = 'input window, operand 1']
    #allocation8 [shape = 's32[2]{0}', space=sflag, size = 0x8, scoped, tag = 'scoped memory for tpu_custom_call.1']
    #allocation9 [shape = 'u8[8192]{0}', space=vmem, size = 0x2000, scoped, tag = 'input window, operand 2']
    #allocation10 [shape = 'u8[1024]{0}', space=vmem, size = 0x400, scoped, tag = 'input window, operand 3']
    #allocation11 [shape = 's32[2]{0}', space=sflag, size = 0x8, scoped, tag = 'scoped memory for tpu_custom_call.1']
    #allocation12 [shape = 'u8[2048]{0}', space=vmem, size = 0x800, scoped, tag = 'input window, operand 4, single buffered']
    #allocation13 [shape = 'u8[2048]{0}', space=vmem, size = 0x800, scoped, tag = 'input window, operand 5, single buffered']
    #allocation14 [shape = 's32[1]{0}', space=sflag, size = 0x4, scoped, tag = 'scoped memory for tpu_custom_call.1']
    #allocation15 [shape = 'u8[8192]{0}', space=vmem, size = 0x2000, scoped, tag = 'input window, operand 6, single buffered']
    #allocation16 [shape = 'u8[512]{0}', space=vmem, size = 0x400, scoped, tag = 'input window, operand 7, single buffered']
    #allocation17 [shape = 's32[1]{0}', space=sflag, size = 0x4, scoped, tag = 'scoped memory for tpu_custom_call.1']
    #allocation18 [shape = 'u8[8192]{0}', space=vmem, size = 0x2000, scoped, tag = 'input window, operand 8, single buffered']
    #allocation19 [shape = 'u8[512]{0}', space=vmem, size = 0x400, scoped, tag = 'input window, operand 9, single buffered']
    #allocation20 [shape = 's32[1]{0}', space=sflag, size = 0x4, scoped, tag = 'scoped memory for tpu_custom_call.1']
    #allocation21 [shape = 'u8[8192]{0}', space=vmem, size = 0x2000, scoped, tag = 'input window, operand 10, single buffered']
    #allocation22 [shape = 'u8[512]{0}', space=vmem, size = 0x400, scoped, tag = 'input window, operand 11, single buffered']
    #allocation23 [shape = 's32[1]{0}', space=sflag, size = 0x4, scoped, tag = 'scoped memory for tpu_custom_call.1']
    #allocation24 [shape = 'u8[8192]{0}', space=vmem, size = 0x2000, scoped, tag = 'input window, operand 12, single buffered']
    #allocation25 [shape = 'u8[512]{0}', space=vmem, size = 0x400, scoped, tag = 'input window, operand 13, single buffered']
    #allocation26 [shape = 's32[1]{0}', space=sflag, size = 0x4, scoped, tag = 'scoped memory for tpu_custom_call.1']
    #allocation27 [shape = 'u8[8192]{0}', space=vmem, size = 0x2000, scoped, tag = 'input window, operand 14, single buffered']
    #allocation28 [shape = 'u8[512]{0}', space=vmem, size = 0x400, scoped, tag = 'input window, operand 15, single buffered']
    #allocation29 [shape = 's32[1]{0}', space=sflag, size = 0x4, scoped, tag = 'scoped memory for tpu_custom_call.1']
    #allocation30 [shape = 'u8[8192]{0}', space=vmem, size = 0x2000, scoped, tag = 'input window, operand 16, single buffered']
    #allocation31 [shape = 'u8[512]{0}', space=vmem, size = 0x400, scoped, tag = 'input window, operand 17, single buffered']
    #allocation32 [shape = 's32[1]{0}', space=sflag, size = 0x4, scoped, tag = 'scoped memory for tpu_custom_call.1']
    #allocation33 [shape = 'u8[8192]{0}', space=vmem, size = 0x2000, scoped, tag = 'input window, operand 18, single buffered']
    #allocation34 [shape = 'u8[512]{0}', space=vmem, size = 0x400, scoped, tag = 'input window, operand 19, single buffered']
    #allocation35 [shape = 's32[1]{0}', space=sflag, size = 0x4, scoped, tag = 'scoped memory for tpu_custom_call.1']
    #allocation36 [shape = 'u8[16384]{0}', space=vmem, size = 0x4000, scoped, tag = 'input window, operand 20, single buffered']
    #allocation37 [shape = 'u8[512]{0}', space=vmem, size = 0x400, scoped, tag = 'input window, operand 21, single buffered']
    #allocation38 [shape = 's32[1]{0}', space=sflag, size = 0x4, scoped, tag = 'scoped memory for tpu_custom_call.1']
    #allocation39 [shape = 'u8[32768]{0}', space=vmem, size = 0x8000, scoped, tag = 'output window, operand 0']
    %27 = vsyncpa [#allocation5], 0
    %s28 = scalar_lea.sflag [#allocation5], 1
    %29 = vsyncpa %s28, 0
    %30 = vsyncpa [#allocation8], 0
    %s31 = scalar_lea.sflag [#allocation8], 1
    %32 = vsyncpa %s31, 0
    %33 = vsyncpa [#allocation11], 0
    %s34 = scalar_lea.sflag [#allocation11], 1
    %35 = vsyncpa %s34, 0
    %36 = vsyncpa [#allocation14], 0
    %37 = vsyncpa [#allocation17], 0
    %38 = vsyncpa [#allocation20], 0
    %39 = vsyncpa [#allocation23], 0
    %40 = vsyncpa [#allocation26], 0
    %41 = vsyncpa [#allocation29], 0
    %42 = vsyncpa [#allocation32], 0
    %43 = vsyncpa [#allocation35], 0
    %44 = vsyncpa [#allocation38], 0
    %45 = vsyncpa [#allocation6], 0
    %s46 = scalar_lea.sflag [#allocation6], 1
    %47 = vsyncpa %s46, 0
    loop: start=0, step=1, limit=6
    $region2: #{tpu_custom_call.1} parent=1 // loop_pre_header
      _
    $region3: #{tpu_custom_call.1} parent=1 // loop_header
      %s49 = sphi 0, %s53
      %p50 = scmp.ge.s32.totalorder %s49, 6
      %s56 = sphi 0, %s68
      %s57 = sphi 0, %s64
      %s58 = sphi 0, %s56
      %s59 = sphi 0, %s57
      %s60 = sphi 0, %s58
      %s61 = sphi 0, %s59
      %s71 = sphi 0, %s73
      %s74 = sphi 0, %s71
      %s75 = sphi 0, %s74
      %s91 = sphi 0, %s75
      %s97 = sphi 0, %s99
      %s100 = sphi 0, %s97
      %s101 = sphi 0, %s100
      %s117 = sphi 0, %s101
      %s125 = sphi 0, %s127
      %s128 = sphi 0, %s125
      %s129 = sphi 0, %s128
      %s145 = sphi 0, %s129
      %s151 = sphi 0, %s153
      %s154 = sphi 0, %s151
      %s155 = sphi 0, %s154
      %s171 = sphi 0, %s155
      %s175 = sphi 0, %s175
      %s177 = sphi 0, %s175
      %s178 = sphi 0, %s177
      %s192 = sphi 0, %s178
      %s196 = sphi 0, %s196
      %s198 = sphi 0, %s196
      %s199 = sphi 0, %s198
      %s213 = sphi 0, %s199
      %s217 = sphi 0, %s217
      %s219 = sphi 0, %s217
      %s220 = sphi 0, %s219
      %s234 = sphi 0, %s220
      %s238 = sphi 0, %s238
      %s240 = sphi 0, %s238
      %s241 = sphi 0, %s240
      %s255 = sphi 0, %s241
      %s259 = sphi 0, %s259
      %s261 = sphi 0, %s259
      %s262 = sphi 0, %s261
      %s276 = sphi 0, %s262
      %s280 = sphi 0, %s280
      %s282 = sphi 0, %s280
      %s283 = sphi 0, %s282
      %s297 = sphi 0, %s283
      %s301 = sphi 0, %s301
      %s303 = sphi 0, %s301
      %s304 = sphi 0, %s303
      %s318 = sphi 0, %s304
      %s322 = sphi 0, %s322
      %s324 = sphi 0, %s322
      %s325 = sphi 0, %s324
      %s339 = sphi 0, %s325
      %s343 = sphi 0, %s343
      %s345 = sphi 0, %s343
      %s346 = sphi 0, %s345
      %s360 = sphi 0, %s346
      %s364 = sphi 0, %s364
      %s366 = sphi 0, %s364
      %s367 = sphi 0, %s366
      %s381 = sphi 0, %s367
      %s385 = sphi 0, %s385
      %s387 = sphi 0, %s385
      %s388 = sphi 0, %s387
      %s402 = sphi 0, %s388
      %s406 = sphi 0, %s406
      %s408 = sphi 0, %s406
      %s409 = sphi 0, %s408
      %s423 = sphi 0, %s409
      %s427 = sphi 0, %s427
      %s429 = sphi 0, %s427
      %s430 = sphi 0, %s429
      %s444 = sphi 0, %s430
      %s448 = sphi 0, %s448
      %s450 = sphi 0, %s448
      %s451 = sphi 0, %s450
      %s465 = sphi 0, %s451
      %s469 = sphi 0, %s469
      %s471 = sphi 0, %s469
      %s472 = sphi 0, %s471
      %s486 = sphi 0, %s472
      %s490 = sphi 0, %s490
      %s492 = sphi 0, %s490
      %s493 = sphi 0, %s492
      %s507 = sphi 0, %s493
      %s511 = sphi 0, %s511
      %s513 = sphi 0, %s511
      %s514 = sphi 0, %s513
      %s528 = sphi 0, %s514
      %s532 = sphi 0, %s532
      %s534 = sphi 0, %s532
      %s535 = sphi 0, %s534
      %s549 = sphi 0, %s535
      %s557 = sphi 0, %s559
      %s560 = sphi 0, %s557
      %s561 = sphi 0, %s560
      %s577 = sphi 0, %s561
    $region4: #{tpu_custom_call.1} parent=1 // loop_header_branch
      %52 = sbr.rel (%p50) target = $region8
    $region5: #{tpu_custom_call.1} parent=1 // loop_body
      %s54 = ssub.s32 %s49, 1
      %s55 = ssub.s32 %s49, 2
      %s62 = sadd.s32 1, %s57
      %p63 = scmp.ge.s32.totalorder %s62, 2
      %s64 = scalar_select %p63, 0, %s62
      %s65 = sadd.s32 1, %s56
      %s66 = scalar_select %p63, %s65, %s56
      %p67 = scmp.ge.s32.totalorder %s66, 2
      %s68 = scalar_select %p67, 0, %s66
      %s69 = ssub.s32 %s56, %s68
      %p70 = scmp.eq.s32.totalorder %s69, 0
      %s72 = sadd.s32 %s71, 1
      %s73 = scalar_select %p70, %s71, %s72
      %p76 = pneg %p70
      %p77 = scmp.eq.s32.totalorder %s49, 3
      %p78 = por %p76, %p77
      %p79 = scmp.ne.s32.totalorder %s71, %s74
      %p80 = scmp.eq.s32.totalorder %s49, 0
      %p81 = por %p79, %p80
      %p82 = scmp.ne.s32.totalorder %s71, %s74
      %p83 = scmp.eq.s32.totalorder %s54, 3
      %p84 = por %p82, %p83
      %p85 = scmp.ne.s32.totalorder %s74, %s75
      %p86 = scmp.eq.s32.totalorder %s54, 0
      %p87 = por %p85, %p86
      %p88 = scmp.ne.s32.totalorder %s74, %s75
      %p89 = scmp.eq.s32.totalorder %s55, 3
      %p90 = por %p88, %p89
      %p92 = scmp.ne.s32.totalorder %s75, %s91
      %p93 = scmp.eq.s32.totalorder %s55, 0
      %p94 = por %p92, %p93
      %s95 = ssub.s32 %s56, %s68
      %p96 = scmp.eq.s32.totalorder %s95, 0
      %s98 = sadd.s32 %s97, 1
      %s99 = scalar_select %p96, %s97, %s98
      %p102 = pneg %p96
      %p103 = scmp.eq.s32.totalorder %s49, 3
      %p104 = por %p102, %p103
      %p105 = scmp.ne.s32.totalorder %s97, %s100
      %p106 = scmp.eq.s32.totalorder %s49, 0
      %p107 = por %p105, %p106
      %p108 = scmp.ne.s32.totalorder %s97, %s100
      %p109 = scmp.eq.s32.totalorder %s54, 3
      %p110 = por %p108, %p109
      %p111 = scmp.ne.s32.totalorder %s100, %s101
      %p112 = scmp.eq.s32.totalorder %s54, 0
      %p113 = por %p111, %p112
      %p114 = scmp.ne.s32.totalorder %s100, %s101
      %p115 = scmp.eq.s32.totalorder %s55, 3
      %p116 = por %p114, %p115
      %p118 = scmp.ne.s32.totalorder %s101, %s117
      %p119 = scmp.eq.s32.totalorder %s55, 0
      %p120 = por %p118, %p119
      %s121 = ssub.s32 %s56, %s68
      %s122 = ssub.s32 %s57, %s64
      %s123 = sor.u32 %s121, %s122
      %p124 = scmp.eq.s32.totalorder %s123, 0
      %s126 = sadd.s32 %s125, 1
      %s127 = scalar_select %p124, %s125, %s126
      %p130 = pneg %p124
      %p131 = scmp.eq.s32.totalorder %s49, 3
      %p132 = por %p130, %p131
      %p133 = scmp.ne.s32.totalorder %s125, %s128
      %p134 = scmp.eq.s32.totalorder %s49, 0
      %p135 = por %p133, %p134
      %p136 = scmp.ne.s32.totalorder %s125, %s128
      %p137 = scmp.eq.s32.totalorder %s54, 3
      %p138 = por %p136, %p137
      %p139 = scmp.ne.s32.totalorder %s128, %s129
      %p140 = scmp.eq.s32.totalorder %s54, 0
      %p141 = por %p139, %p140
      %p142 = scmp.ne.s32.totalorder %s128, %s129
      %p143 = scmp.eq.s32.totalorder %s55, 3
      %p144 = por %p142, %p143
      %p146 = scmp.ne.s32.totalorder %s129, %s145
      %p147 = scmp.eq.s32.totalorder %s55, 0
      %p148 = por %p146, %p147
      %s149 = ssub.s32 %s56, %s68
      %p150 = scmp.eq.s32.totalorder %s149, 0
      %s152 = sadd.s32 %s151, 1
      %s153 = scalar_select %p150, %s151, %s152
      %p156 = pneg %p150
      %p157 = scmp.eq.s32.totalorder %s49, 3
      %p158 = por %p156, %p157
      %p159 = scmp.ne.s32.totalorder %s151, %s154
      %p160 = scmp.eq.s32.totalorder %s49, 0
      %p161 = por %p159, %p160
      %p162 = scmp.ne.s32.totalorder %s151, %s154
      %p163 = scmp.eq.s32.totalorder %s54, 3
      %p164 = por %p162, %p163
      %p165 = scmp.ne.s32.totalorder %s154, %s155
      %p166 = scmp.eq.s32.totalorder %s54, 0
      %p167 = por %p165, %p166
      %p168 = scmp.ne.s32.totalorder %s154, %s155
      %p169 = scmp.eq.s32.totalorder %s55, 3
      %p170 = por %p168, %p169
      %p172 = scmp.ne.s32.totalorder %s155, %s171
      %p173 = scmp.eq.s32.totalorder %s55, 0
      %p174 = por %p172, %p173
      %s176 = sadd.s32 %s175, 1
      %p179 = scmp.eq.s32.totalorder %s49, 3
      %p180 = scmp.ne.s32.totalorder %s175, %s177
      %p181 = scmp.eq.s32.totalorder %s49, 0
      %p182 = por %p180, %p181
      %p183 = scmp.ne.s32.totalorder %s175, %s177
      %p184 = scmp.eq.s32.totalorder %s54, 3
      %p185 = por %p183, %p184
      %p186 = scmp.ne.s32.totalorder %s177, %s178
      %p187 = scmp.eq.s32.totalorder %s54, 0
      %p188 = por %p186, %p187
      %p189 = scmp.ne.s32.totalorder %s177, %s178
      %p190 = scmp.eq.s32.totalorder %s55, 3
      %p191 = por %p189, %p190
      %p193 = scmp.ne.s32.totalorder %s178, %s192
      %p194 = scmp.eq.s32.totalorder %s55, 0
      %p195 = por %p193, %p194
      %s197 = sadd.s32 %s196, 1
      %p200 = scmp.eq.s32.totalorder %s49, 3
      %p201 = scmp.ne.s32.totalorder %s196, %s198
      %p202 = scmp.eq.s32.totalorder %s49, 0
      %p203 = por %p201, %p202
      %p204 = scmp.ne.s32.totalorder %s196, %s198
      %p205 = scmp.eq.s32.totalorder %s54, 3
      %p206 = por %p204, %p205
      %p207 = scmp.ne.s32.totalorder %s198, %s199
      %p208 = scmp.eq.s32.totalorder %s54, 0
      %p209 = por %p207, %p208
      %p210 = scmp.ne.s32.totalorder %s198, %s199
      %p211 = scmp.eq.s32.totalorder %s55, 3
      %p212 = por %p210, %p211
      %p214 = scmp.ne.s32.totalorder %s199, %s213
      %p215 = scmp.eq.s32.totalorder %s55, 0
      %p216 = por %p214, %p215
      %s218 = sadd.s32 %s217, 1
      %p221 = scmp.eq.s32.totalorder %s49, 3
      %p222 = scmp.ne.s32.totalorder %s217, %s219
      %p223 = scmp.eq.s32.totalorder %s49, 0
      %p224 = por %p222, %p223
      %p225 = scmp.ne.s32.totalorder %s217, %s219
      %p226 = scmp.eq.s32.totalorder %s54, 3
      %p227 = por %p225, %p226
      %p228 = scmp.ne.s32.totalorder %s219, %s220
      %p229 = scmp.eq.s32.totalorder %s54, 0
      %p230 = por %p228, %p229
      %p231 = scmp.ne.s32.totalorder %s219, %s220
      %p232 = scmp.eq.s32.totalorder %s55, 3
      %p233 = por %p231, %p232
      %p235 = scmp.ne.s32.totalorder %s220, %s234
      %p236 = scmp.eq.s32.totalorder %s55, 0
      %p237 = por %p235, %p236
      %s239 = sadd.s32 %s238, 1
      %p242 = scmp.eq.s32.totalorder %s49, 3
      %p243 = scmp.ne.s32.totalorder %s238, %s240
      %p244 = scmp.eq.s32.totalorder %s49, 0
      %p245 = por %p243, %p244
      %p246 = scmp.ne.s32.totalorder %s238, %s240
      %p247 = scmp.eq.s32.totalorder %s54, 3
      %p248 = por %p246, %p247
      %p249 = scmp.ne.s32.totalorder %s240, %s241
      %p250 = scmp.eq.s32.totalorder %s54, 0
      %p251 = por %p249, %p250
      %p252 = scmp.ne.s32.totalorder %s240, %s241
      %p253 = scmp.eq.s32.totalorder %s55, 3
      %p254 = por %p252, %p253
      %p256 = scmp.ne.s32.totalorder %s241, %s255
      %p257 = scmp.eq.s32.totalorder %s55, 0
      %p258 = por %p256, %p257
      %s260 = sadd.s32 %s259, 1
      %p263 = scmp.eq.s32.totalorder %s49, 3
      %p264 = scmp.ne.s32.totalorder %s259, %s261
      %p265 = scmp.eq.s32.totalorder %s49, 0
      %p266 = por %p264, %p265
      %p267 = scmp.ne.s32.totalorder %s259, %s261
      %p268 = scmp.eq.s32.totalorder %s54, 3
      %p269 = por %p267, %p268
      %p270 = scmp.ne.s32.totalorder %s261, %s262
      %p271 = scmp.eq.s32.totalorder %s54, 0
      %p272 = por %p270, %p271
      %p273 = scmp.ne.s32.totalorder %s261, %s262
      %p274 = scmp.eq.s32.totalorder %s55, 3
      %p275 = por %p273, %p274
      %p277 = scmp.ne.s32.totalorder %s262, %s276
      %p278 = scmp.eq.s32.totalorder %s55, 0
      %p279 = por %p277, %p278
      %s281 = sadd.s32 %s280, 1
      %p284 = scmp.eq.s32.totalorder %s49, 3
      %p285 = scmp.ne.s32.totalorder %s280, %s282
      %p286 = scmp.eq.s32.totalorder %s49, 0
      %p287 = por %p285, %p286
      %p288 = scmp.ne.s32.totalorder %s280, %s282
      %p289 = scmp.eq.s32.totalorder %s54, 3
      %p290 = por %p288, %p289
      %p291 = scmp.ne.s32.totalorder %s282, %s283
      %p292 = scmp.eq.s32.totalorder %s54, 0
      %p293 = por %p291, %p292
      %p294 = scmp.ne.s32.totalorder %s282, %s283
      %p295 = scmp.eq.s32.totalorder %s55, 3
      %p296 = por %p294, %p295
      %p298 = scmp.ne.s32.totalorder %s283, %s297
      %p299 = scmp.eq.s32.totalorder %s55, 0
      %p300 = por %p298, %p299
      %s302 = sadd.s32 %s301, 1
      %p305 = scmp.eq.s32.totalorder %s49, 3
      %p306 = scmp.ne.s32.totalorder %s301, %s303
      %p307 = scmp.eq.s32.totalorder %s49, 0
      %p308 = por %p306, %p307
      %p309 = scmp.ne.s32.totalorder %s301, %s303
      %p310 = scmp.eq.s32.totalorder %s54, 3
      %p311 = por %p309, %p310
      %p312 = scmp.ne.s32.totalorder %s303, %s304
      %p313 = scmp.eq.s32.totalorder %s54, 0
      %p314 = por %p312, %p313
      %p315 = scmp.ne.s32.totalorder %s303, %s304
      %p316 = scmp.eq.s32.totalorder %s55, 3
      %p317 = por %p315, %p316
      %p319 = scmp.ne.s32.totalorder %s304, %s318
      %p320 = scmp.eq.s32.totalorder %s55, 0
      %p321 = por %p319, %p320
      %s323 = sadd.s32 %s322, 1
      %p326 = scmp.eq.s32.totalorder %s49, 3
      %p327 = scmp.ne.s32.totalorder %s322, %s324
      %p328 = scmp.eq.s32.totalorder %s49, 0
      %p329 = por %p327, %p328
      %p330 = scmp.ne.s32.totalorder %s322, %s324
      %p331 = scmp.eq.s32.totalorder %s54, 3
      %p332 = por %p330, %p331
      %p333 = scmp.ne.s32.totalorder %s324, %s325
      %p334 = scmp.eq.s32.totalorder %s54, 0
      %p335 = por %p333, %p334
      %p336 = scmp.ne.s32.totalorder %s324, %s325
      %p337 = scmp.eq.s32.totalorder %s55, 3
      %p338 = por %p336, %p337
      %p340 = scmp.ne.s32.totalorder %s325, %s339
      %p341 = scmp.eq.s32.totalorder %s55, 0
      %p342 = por %p340, %p341
      %s344 = sadd.s32 %s343, 1
      %p347 = scmp.eq.s32.totalorder %s49, 3
      %p348 = scmp.ne.s32.totalorder %s343, %s345
      %p349 = scmp.eq.s32.totalorder %s49, 0
      %p350 = por %p348, %p349
      %p351 = scmp.ne.s32.totalorder %s343, %s345
      %p352 = scmp.eq.s32.totalorder %s54, 3
      %p353 = por %p351, %p352
      %p354 = scmp.ne.s32.totalorder %s345, %s346
      %p355 = scmp.eq.s32.totalorder %s54, 0
      %p356 = por %p354, %p355
      %p357 = scmp.ne.s32.totalorder %s345, %s346
      %p358 = scmp.eq.s32.totalorder %s55, 3
      %p359 = por %p357, %p358
      %p361 = scmp.ne.s32.totalorder %s346, %s360
      %p362 = scmp.eq.s32.totalorder %s55, 0
      %p363 = por %p361, %p362
      %s365 = sadd.s32 %s364, 1
      %p368 = scmp.eq.s32.totalorder %s49, 3
      %p369 = scmp.ne.s32.totalorder %s364, %s366
      %p370 = scmp.eq.s32.totalorder %s49, 0
      %p371 = por %p369, %p370
      %p372 = scmp.ne.s32.totalorder %s364, %s366
      %p373 = scmp.eq.s32.totalorder %s54, 3
      %p374 = por %p372, %p373
      %p375 = scmp.ne.s32.totalorder %s366, %s367
      %p376 = scmp.eq.s32.totalorder %s54, 0
      %p377 = por %p375, %p376
      %p378 = scmp.ne.s32.totalorder %s366, %s367
      %p379 = scmp.eq.s32.totalorder %s55, 3
      %p380 = por %p378, %p379
      %p382 = scmp.ne.s32.totalorder %s367, %s381
      %p383 = scmp.eq.s32.totalorder %s55, 0
      %p384 = por %p382, %p383
      %s386 = sadd.s32 %s385, 1
      %p389 = scmp.eq.s32.totalorder %s49, 3
      %p390 = scmp.ne.s32.totalorder %s385, %s387
      %p391 = scmp.eq.s32.totalorder %s49, 0
      %p392 = por %p390, %p391
      %p393 = scmp.ne.s32.totalorder %s385, %s387
      %p394 = scmp.eq.s32.totalorder %s54, 3
      %p395 = por %p393, %p394
      %p396 = scmp.ne.s32.totalorder %s387, %s388
      %p397 = scmp.eq.s32.totalorder %s54, 0
      %p398 = por %p396, %p397
      %p399 = scmp.ne.s32.totalorder %s387, %s388
      %p400 = scmp.eq.s32.totalorder %s55, 3
      %p401 = por %p399, %p400
      %p403 = scmp.ne.s32.totalorder %s388, %s402
      %p404 = scmp.eq.s32.totalorder %s55, 0
      %p405 = por %p403, %p404
      %s407 = sadd.s32 %s406, 1
      %p410 = scmp.eq.s32.totalorder %s49, 3
      %p411 = scmp.ne.s32.totalorder %s406, %s408
      %p412 = scmp.eq.s32.totalorder %s49, 0
      %p413 = por %p411, %p412
      %p414 = scmp.ne.s32.totalorder %s406, %s408
      %p415 = scmp.eq.s32.totalorder %s54, 3
      %p416 = por %p414, %p415
      %p417 = scmp.ne.s32.totalorder %s408, %s409
      %p418 = scmp.eq.s32.totalorder %s54, 0
      %p419 = por %p417, %p418
      %p420 = scmp.ne.s32.totalorder %s408, %s409
      %p421 = scmp.eq.s32.totalorder %s55, 3
      %p422 = por %p420, %p421
      %p424 = scmp.ne.s32.totalorder %s409, %s423
      %p425 = scmp.eq.s32.totalorder %s55, 0
      %p426 = por %p424, %p425
      %s428 = sadd.s32 %s427, 1
      %p431 = scmp.eq.s32.totalorder %s49, 3
      %p432 = scmp.ne.s32.totalorder %s427, %s429
      %p433 = scmp.eq.s32.totalorder %s49, 0
      %p434 = por %p432, %p433
      %p435 = scmp.ne.s32.totalorder %s427, %s429
      %p436 = scmp.eq.s32.totalorder %s54, 3
      %p437 = por %p435, %p436
      %p438 = scmp.ne.s32.totalorder %s429, %s430
      %p439 = scmp.eq.s32.totalorder %s54, 0
      %p440 = por %p438, %p439
      %p441 = scmp.ne.s32.totalorder %s429, %s430
      %p442 = scmp.eq.s32.totalorder %s55, 3
      %p443 = por %p441, %p442
      %p445 = scmp.ne.s32.totalorder %s430, %s444
      %p446 = scmp.eq.s32.totalorder %s55, 0
      %p447 = por %p445, %p446
      %s449 = sadd.s32 %s448, 1
      %p452 = scmp.eq.s32.totalorder %s49, 3
      %p453 = scmp.ne.s32.totalorder %s448, %s450
      %p454 = scmp.eq.s32.totalorder %s49, 0
      %p455 = por %p453, %p454
      %p456 = scmp.ne.s32.totalorder %s448, %s450
      %p457 = scmp.eq.s32.totalorder %s54, 3
      %p458 = por %p456, %p457
      %p459 = scmp.ne.s32.totalorder %s450, %s451
      %p460 = scmp.eq.s32.totalorder %s54, 0
      %p461 = por %p459, %p460
      %p462 = scmp.ne.s32.totalorder %s450, %s451
      %p463 = scmp.eq.s32.totalorder %s55, 3
      %p464 = por %p462, %p463
      %p466 = scmp.ne.s32.totalorder %s451, %s465
      %p467 = scmp.eq.s32.totalorder %s55, 0
      %p468 = por %p466, %p467
      %s470 = sadd.s32 %s469, 1
      %p473 = scmp.eq.s32.totalorder %s49, 3
      %p474 = scmp.ne.s32.totalorder %s469, %s471
      %p475 = scmp.eq.s32.totalorder %s49, 0
      %p476 = por %p474, %p475
      %p477 = scmp.ne.s32.totalorder %s469, %s471
      %p478 = scmp.eq.s32.totalorder %s54, 3
      %p479 = por %p477, %p478
      %p480 = scmp.ne.s32.totalorder %s471, %s472
      %p481 = scmp.eq.s32.totalorder %s54, 0
      %p482 = por %p480, %p481
      %p483 = scmp.ne.s32.totalorder %s471, %s472
      %p484 = scmp.eq.s32.totalorder %s55, 3
      %p485 = por %p483, %p484
      %p487 = scmp.ne.s32.totalorder %s472, %s486
      %p488 = scmp.eq.s32.totalorder %s55, 0
      %p489 = por %p487, %p488
      %s491 = sadd.s32 %s490, 1
      %p494 = scmp.eq.s32.totalorder %s49, 3
      %p495 = scmp.ne.s32.totalorder %s490, %s492
      %p496 = scmp.eq.s32.totalorder %s49, 0
      %p497 = por %p495, %p496
      %p498 = scmp.ne.s32.totalorder %s490, %s492
      %p499 = scmp.eq.s32.totalorder %s54, 3
      %p500 = por %p498, %p499
      %p501 = scmp.ne.s32.totalorder %s492, %s493
      %p502 = scmp.eq.s32.totalorder %s54, 0
      %p503 = por %p501, %p502
      %p504 = scmp.ne.s32.totalorder %s492, %s493
      %p505 = scmp.eq.s32.totalorder %s55, 3
      %p506 = por %p504, %p505
      %p508 = scmp.ne.s32.totalorder %s493, %s507
      %p509 = scmp.eq.s32.totalorder %s55, 0
      %p510 = por %p508, %p509
      %s512 = sadd.s32 %s511, 1
      %p515 = scmp.eq.s32.totalorder %s49, 3
      %p516 = scmp.ne.s32.totalorder %s511, %s513
      %p517 = scmp.eq.s32.totalorder %s49, 0
      %p518 = por %p516, %p517
      %p519 = scmp.ne.s32.totalorder %s511, %s513
      %p520 = scmp.eq.s32.totalorder %s54, 3
      %p521 = por %p519, %p520
      %p522 = scmp.ne.s32.totalorder %s513, %s514
      %p523 = scmp.eq.s32.totalorder %s54, 0
      %p524 = por %p522, %p523
      %p525 = scmp.ne.s32.totalorder %s513, %s514
      %p526 = scmp.eq.s32.totalorder %s55, 3
      %p527 = por %p525, %p526
      %p529 = scmp.ne.s32.totalorder %s514, %s528
      %p530 = scmp.eq.s32.totalorder %s55, 0
      %p531 = por %p529, %p530
      %s533 = sadd.s32 %s532, 1
      %p536 = scmp.eq.s32.totalorder %s49, 3
      %p537 = scmp.ne.s32.totalorder %s532, %s534
      %p538 = scmp.eq.s32.totalorder %s49, 0
      %p539 = por %p537, %p538
      %p540 = scmp.ne.s32.totalorder %s532, %s534
      %p541 = scmp.eq.s32.totalorder %s54, 3
      %p542 = por %p540, %p541
      %p543 = scmp.ne.s32.totalorder %s534, %s535
      %p544 = scmp.eq.s32.totalorder %s54, 0
      %p545 = por %p543, %p544
      %p546 = scmp.ne.s32.totalorder %s534, %s535
      %p547 = scmp.eq.s32.totalorder %s55, 3
      %p548 = por %p546, %p547
      %p550 = scmp.ne.s32.totalorder %s535, %s549
      %p551 = scmp.eq.s32.totalorder %s55, 0
      %p552 = por %p550, %p551
      %s553 = ssub.s32 %s56, %s68
      %s554 = ssub.s32 %s57, %s64
      %s555 = sor.u32 %s553, %s554
      %p556 = scmp.eq.s32.totalorder %s555, 0
      %s558 = sadd.s32 %s557, 1
      %s559 = scalar_select %p556, %s557, %s558
      %p562 = pneg %p556
      %p563 = scmp.eq.s32.totalorder %s49, 3
      %p564 = por %p562, %p563
      %p565 = scmp.ne.s32.totalorder %s557, %s560
      %p566 = scmp.eq.s32.totalorder %s49, 0
      %p567 = por %p565, %p566
      %p568 = scmp.ne.s32.totalorder %s557, %s560
      %p569 = scmp.eq.s32.totalorder %s54, 3
      %p570 = por %p568, %p569
      %p571 = scmp.ne.s32.totalorder %s560, %s561
      %p572 = scmp.eq.s32.totalorder %s54, 0
      %p573 = por %p571, %p572
      %p574 = scmp.ne.s32.totalorder %s560, %s561
      %p575 = scmp.eq.s32.totalorder %s55, 3
      %p576 = por %p574, %p575
      %p578 = scmp.ne.s32.totalorder %s561, %s577
      %p579 = scmp.eq.s32.totalorder %s55, 0
      %p580 = por %p578, %p579
      %p581 = scmp.le.s32.totalorder 1, %s49
      %p582 = scmp.lt.s32.totalorder %s49, 5
      %p583 = pnand %p581, %p582
      %p584 = pneg %p583
      // Predicated region
      $region9: #{tpu_custom_call.1} parent=5 // pred_check
        _
      $region10: #{tpu_custom_call.1} parent=5 // pred_check_branch
        %586 = sbr.rel (%p583) target = $region12
      $region11: #{tpu_custom_call.1} parent=5 // pred_region
        %s587 = ssub.s32 %s49, 1
        // Predicated region
        $region13: #{tpu_custom_call.1} parent=11 // pred_check
          %p588 = pneg %p188
        $region14: #{tpu_custom_call.1} parent=11 // pred_check_branch
          %590 = sbr.rel (%p588) target = $region16
        $region15: #{tpu_custom_call.1} parent=11 // pred_region
          %s592 = ssub.s32 64, 64
          %593 = vsyncadd [#allocation11], %s592
          %s595 = sshll.u32 [#allocation12], 4
          %s596 = int_to_ptr.vmem [resolvable:$true] %s595
          %598 = dma.hbm_to_vmem [thread:$0]  %s4, 64, %s596, [#allocation11]
        $region16: #{tpu_custom_call.1} parent=11 // pred_fallthru
          _
        // Predicated region
        $region17: #{tpu_custom_call.1} parent=11 // pred_check
          %p599 = pneg %p209
        $region18: #{tpu_custom_call.1} parent=11 // pred_check_branch
          %601 = sbr.rel (%p599) target = $region20
        $region19: #{tpu_custom_call.1} parent=11 // pred_region
          %s603 = ssub.s32 64, 64
          %604 = vsyncadd [#allocation14], %s603
          %s606 = sshll.u32 [#allocation13], 4
          %s607 = int_to_ptr.vmem [resolvable:$true] %s606
          %609 = dma.hbm_to_vmem [thread:$0]  %s5, 64, %s607, [#allocation14]
        $region20: #{tpu_custom_call.1} parent=11 // pred_fallthru
          _
        // Predicated region
        $region21: #{tpu_custom_call.1} parent=11 // pred_check
          %p610 = pneg %p230
        $region22: #{tpu_custom_call.1} parent=11 // pred_check_branch
          %612 = sbr.rel (%p610) target = $region24
        $region23: #{tpu_custom_call.1} parent=11 // pred_region
          %s614 = ssub.s32 256, 256
          %615 = vsyncadd [#allocation14], %s614
          %s616 = sshll.u32 [#allocation15], 4
          %s617 = int_to_ptr.vmem [resolvable:$true] %s616
          %622 = dma.hbm_to_vmem [thread:$0]  %s6, 256, %s617, [#allocation14], 64, 64, 4
        $region24: #{tpu_custom_call.1} parent=11 // pred_fallthru
          _
        // Predicated region
        $region25: #{tpu_custom_call.1} parent=11 // pred_check
          %p623 = pneg %p251
        $region26: #{tpu_custom_call.1} parent=11 // pred_check_branch
          %625 = sbr.rel (%p623) target = $region28
        $region27: #{tpu_custom_call.1} parent=11 // pred_region
          %s627 = ssub.s32 16, 16
          %628 = vsyncadd [#allocation17], %s627
          %s630 = sshll.u32 [#allocation16], 4
          %s631 = int_to_ptr.vmem [resolvable:$true] %s630
          %633 = dma.hbm_to_vmem [thread:$0]  %s7, 16, %s631, [#allocation17]
        $region28: #{tpu_custom_call.1} parent=11 // pred_fallthru
          _
        // Predicated region
        $region29: #{tpu_custom_call.1} parent=11 // pred_check
          %p634 = pneg %p272
        $region30: #{tpu_custom_call.1} parent=11 // pred_check_branch
          %636 = sbr.rel (%p634) target = $region32
        $region31: #{tpu_custom_call.1} parent=11 // pred_region
          %s638 = ssub.s32 256, 256
          %639 = vsyncadd [#allocation17], %s638
          %s640 = sshll.u32 [#allocation18], 4
          %s641 = int_to_ptr.vmem [resolvable:$true] %s640
          %646 = dma.hbm_to_vmem [thread:$0]  %s8, 256, %s641, [#allocation17], 64, 64, 4
        $region32: #{tpu_custom_call.1} parent=11 // pred_fallthru
          _
        // Predicated region
        $region33: #{tpu_custom_call.1} parent=11 // pred_check
          %p647 = pneg %p293
        $region34: #{tpu_custom_call.1} parent=11 // pred_check_branch
          %649 = sbr.rel (%p647) target = $region36
        $region35: #{tpu_custom_call.1} parent=11 // pred_region
          %s651 = ssub.s32 16, 16
          %652 = vsyncadd [#allocation20], %s651
          %s654 = sshll.u32 [#allocation19], 4
          %s655 = int_to_ptr.vmem [resolvable:$true] %s654
          %657 = dma.hbm_to_vmem [thread:$0]  %s9, 16, %s655, [#allocation20]
        $region36: #{tpu_custom_call.1} parent=11 // pred_fallthru
          _
        // Predicated region
        $region37: #{tpu_custom_call.1} parent=11 // pred_check
          %p658 = pneg %p314
        $region38: #{tpu_custom_call.1} parent=11 // pred_check_branch
          %660 = sbr.rel (%p658) target = $region40
        $region39: #{tpu_custom_call.1} parent=11 // pred_region
          %s662 = ssub.s32 256, 256
          %663 = vsyncadd [#allocation20], %s662
          %s664 = sshll.u32 [#allocation21], 4
          %s665 = int_to_ptr.vmem [resolvable:$true] %s664
          %670 = dma.hbm_to_vmem [thread:$0]  %s10, 256, %s665, [#allocation20], 64, 64, 4
        $region40: #{tpu_custom_call.1} parent=11 // pred_fallthru
          _
        // Predicated region
        $region41: #{tpu_custom_call.1} parent=11 // pred_check
          %p671 = pneg %p335
        $region42: #{tpu_custom_call.1} parent=11 // pred_check_branch
          %673 = sbr.rel (%p671) target = $region44
        $region43: #{tpu_custom_call.1} parent=11 // pred_region
          %s675 = ssub.s32 16, 16
          %676 = vsyncadd [#allocation23], %s675
          %s678 = sshll.u32 [#allocation22], 4
          %s679 = int_to_ptr.vmem [resolvable:$true] %s678
          %681 = dma.hbm_to_vmem [thread:$0]  %s11, 16, %s679, [#allocation23]
        $region44: #{tpu_custom_call.1} parent=11 // pred_fallthru
          _
        // Predicated region
        $region45: #{tpu_custom_call.1} parent=11 // pred_check
          %p682 = pneg %p356
        $region46: #{tpu_custom_call.1} parent=11 // pred_check_branch
          %684 = sbr.rel (%p682) target = $region48
        $region47: #{tpu_custom_call.1} parent=11 // pred_region
          %s686 = ssub.s32 256, 256
          %687 = vsyncadd [#allocation23], %s686
          %s688 = sshll.u32 [#allocation24], 4
          %s689 = int_to_ptr.vmem [resolvable:$true] %s688
          %694 = dma.hbm_to_vmem [thread:$0]  %s12, 256, %s689, [#allocation23], 64, 64, 4
        $region48: #{tpu_custom_call.1} parent=11 // pred_fallthru
          _
        // Predicated region
        $region49: #{tpu_custom_call.1} parent=11 // pred_check
          %p695 = pneg %p377
        $region50: #{tpu_custom_call.1} parent=11 // pred_check_branch
          %697 = sbr.rel (%p695) target = $region52
        $region51: #{tpu_custom_call.1} parent=11 // pred_region
          %s699 = ssub.s32 16, 16
          %700 = vsyncadd [#allocation26], %s699
          %s702 = sshll.u32 [#allocation25], 4
          %s703 = int_to_ptr.vmem [resolvable:$true] %s702
          %705 = dma.hbm_to_vmem [thread:$0]  %s13, 16, %s703, [#allocation26]
        $region52: #{tpu_custom_call.1} parent=11 // pred_fallthru
          _
        // Predicated region
        $region53: #{tpu_custom_call.1} parent=11 // pred_check
          %p706 = pneg %p398
        $region54: #{tpu_custom_call.1} parent=11 // pred_check_branch
          %708 = sbr.rel (%p706) target = $region56
        $region55: #{tpu_custom_call.1} parent=11 // pred_region
          %s710 = ssub.s32 256, 256
          %711 = vsyncadd [#allocation26], %s710
          %s712 = sshll.u32 [#allocation27], 4
          %s713 = int_to_ptr.vmem [resolvable:$true] %s712
          %718 = dma.hbm_to_vmem [thread:$0]  %s14, 256, %s713, [#allocation26], 64, 64, 4
        $region56: #{tpu_custom_call.1} parent=11 // pred_fallthru
          _
        // Predicated region
        $region57: #{tpu_custom_call.1} parent=11 // pred_check
          %p719 = pneg %p419
        $region58: #{tpu_custom_call.1} parent=11 // pred_check_branch
          %721 = sbr.rel (%p719) target = $region60
        $region59: #{tpu_custom_call.1} parent=11 // pred_region
          %s723 = ssub.s32 16, 16
          %724 = vsyncadd [#allocation29], %s723
          %s726 = sshll.u32 [#allocation28], 4
          %s727 = int_to_ptr.vmem [resolvable:$true] %s726
          %729 = dma.hbm_to_vmem [thread:$0]  %s15, 16, %s727, [#allocation29]
        $region60: #{tpu_custom_call.1} parent=11 // pred_fallthru
          _
        // Predicated region
        $region61: #{tpu_custom_call.1} parent=11 // pred_check
          %p730 = pneg %p440
        $region62: #{tpu_custom_call.1} parent=11 // pred_check_branch
          %732 = sbr.rel (%p730) target = $region64
        $region63: #{tpu_custom_call.1} parent=11 // pred_region
          %s734 = ssub.s32 256, 256
          %735 = vsyncadd [#allocation29], %s734
          %s736 = sshll.u32 [#allocation30], 4
          %s737 = int_to_ptr.vmem [resolvable:$true] %s736
          %742 = dma.hbm_to_vmem [thread:$0]  %s16, 256, %s737, [#allocation29], 64, 64, 4
        $region64: #{tpu_custom_call.1} parent=11 // pred_fallthru
          _
        // Predicated region
        $region65: #{tpu_custom_call.1} parent=11 // pred_check
          %p743 = pneg %p461
        $region66: #{tpu_custom_call.1} parent=11 // pred_check_branch
          %745 = sbr.rel (%p743) target = $region68
        $region67: #{tpu_custom_call.1} parent=11 // pred_region
          %s747 = ssub.s32 16, 16
          %748 = vsyncadd [#allocation32], %s747
          %s750 = sshll.u32 [#allocation31], 4
          %s751 = int_to_ptr.vmem [resolvable:$true] %s750
          %753 = dma.hbm_to_vmem [thread:$0]  %s17, 16, %s751, [#allocation32]
        $region68: #{tpu_custom_call.1} parent=11 // pred_fallthru
          _
        // Predicated region
        $region69: #{tpu_custom_call.1} parent=11 // pred_check
          %p754 = pneg %p482
        $region70: #{tpu_custom_call.1} parent=11 // pred_check_branch
          %756 = sbr.rel (%p754) target = $region72
        $region71: #{tpu_custom_call.1} parent=11 // pred_region
          %s758 = ssub.s32 256, 256
          %759 = vsyncadd [#allocation32], %s758
          %s760 = sshll.u32 [#allocation33], 4
          %s761 = int_to_ptr.vmem [resolvable:$true] %s760
          %766 = dma.hbm_to_vmem [thread:$0]  %s18, 256, %s761, [#allocation32], 64, 64, 4
        $region72: #{tpu_custom_call.1} parent=11 // pred_fallthru
          _
        // Predicated region
        $region73: #{tpu_custom_call.1} parent=11 // pred_check
          %p767 = pneg %p503
        $region74: #{tpu_custom_call.1} parent=11 // pred_check_branch
          %769 = sbr.rel (%p767) target = $region76
        $region75: #{tpu_custom_call.1} parent=11 // pred_region
          %s771 = ssub.s32 16, 16
          %772 = vsyncadd [#allocation35], %s771
          %s774 = sshll.u32 [#allocation34], 4
          %s775 = int_to_ptr.vmem [resolvable:$true] %s774
          %777 = dma.hbm_to_vmem [thread:$0]  %s19, 16, %s775, [#allocation35]
        $region76: #{tpu_custom_call.1} parent=11 // pred_fallthru
          _
        // Predicated region
        $region77: #{tpu_custom_call.1} parent=11 // pred_check
          %p778 = pneg %p524
        $region78: #{tpu_custom_call.1} parent=11 // pred_check_branch
          %780 = sbr.rel (%p778) target = $region80
        $region79: #{tpu_custom_call.1} parent=11 // pred_region
          %s782 = ssub.s32 512, 512
          %783 = vsyncadd [#allocation35], %s782
          %s784 = sshll.u32 [#allocation36], 4
          %s785 = int_to_ptr.vmem [resolvable:$true] %s784
          %790 = dma.hbm_to_vmem [thread:$0]  %s20, 512, %s785, [#allocation35], 64, 64, 4
        $region80: #{tpu_custom_call.1} parent=11 // pred_fallthru
          _
        // Predicated region
        $region81: #{tpu_custom_call.1} parent=11 // pred_check
          %p791 = pneg %p545
        $region82: #{tpu_custom_call.1} parent=11 // pred_check_branch
          %793 = sbr.rel (%p791) target = $region84
        $region83: #{tpu_custom_call.1} parent=11 // pred_region
          %s795 = ssub.s32 16, 16
          %796 = vsyncadd [#allocation38], %s795
          %s798 = sshll.u32 [#allocation37], 4
          %s799 = int_to_ptr.vmem [resolvable:$true] %s798
          %801 = dma.hbm_to_vmem [thread:$0]  %s21, 16, %s799, [#allocation38]
        $region84: #{tpu_custom_call.1} parent=11 // pred_fallthru
          _
      $region12: #{tpu_custom_call.1} parent=5 // pred_fallthru
        _
      %p802 = scmp.lt.s32.totalorder %s49, 4
      // Predicated region
      $region85: #{tpu_custom_call.1} parent=5 // pred_check
        %p803 = pneg %p802
      $region86: #{tpu_custom_call.1} parent=5 // pred_check_branch
        %805 = sbr.rel (%p803) target = $region88
      $region87: #{tpu_custom_call.1} parent=5 // pred_region
        // Predicated region
        $region89: #{tpu_custom_call.1} parent=87 // pred_check
          %p806 = pneg %p81
        $region90: #{tpu_custom_call.1} parent=87 // pred_check_branch
          %808 = sbr.rel (%p806) target = $region92
        $region91: #{tpu_custom_call.1} parent=87 // pred_region
          %s809 = sand.u32 %s71, 1
          %s810 = scalar_lea.sflag [#allocation5], %s809
          %s811 = sand.u32 %s71, 1
          %s812 = smul.addr %s811, 64
          %s813 = scalar_lea.vmem [#allocation4], %s812
          %s815 = ssub.s32 1024, 1024
          %816 = vsyncadd %s810, %s815
          %s817 = smul.addr %s56, 8
          %s818 = smul.addr %s817, 128
          %s819 = scalar_lea.hbm %s0, %s818
          %s820 = sshll.u32 %s813, 4
          %s821 = int_to_ptr.vmem [resolvable:$true] %s820
          %826 = dma.hbm_to_vmem [thread:$0]  %s819, 1024, %s821, %s810, 128, 128, 8
        $region92: #{tpu_custom_call.1} parent=87 // pred_fallthru
          _
        // Predicated region
        $region93: #{tpu_custom_call.1} parent=87 // pred_check
          %p827 = pneg %p107
        $region94: #{tpu_custom_call.1} parent=87 // pred_check_branch
          %829 = sbr.rel (%p827) target = $region96
        $region95: #{tpu_custom_call.1} parent=87 // pred_region
          %s830 = sand.u32 %s49, 1
          %s831 = scalar_lea.sflag [#allocation8], %s830
          %s832 = sand.u32 %s97, 1
          %s833 = smul.addr %s832, 16
          %s834 = scalar_lea.vmem [#allocation7], %s833
          %s836 = ssub.s32 256, 256
          %837 = vsyncadd %s831, %s836
          %s838 = smul.addr %s56, 2
          %s839 = smul.addr %s838, 128
          %s840 = scalar_lea.hbm %s1, %s839
          %s841 = sshll.u32 %s834, 4
          %s842 = int_to_ptr.vmem [resolvable:$true] %s841
          %847 = dma.hbm_to_vmem [thread:$0]  %s840, 256, %s842, %s831, 128, 128, 8
        $region96: #{tpu_custom_call.1} parent=87 // pred_fallthru
          _
        // Predicated region
        $region97: #{tpu_custom_call.1} parent=87 // pred_check
          %p848 = pneg %p135
        $region98: #{tpu_custom_call.1} parent=87 // pred_check_branch
          %850 = sbr.rel (%p848) target = $region100
        $region99: #{tpu_custom_call.1} parent=87 // pred_region
          %s851 = sand.u32 %s49, 1
          %s852 = scalar_lea.sflag [#allocation8], %s851
          %s853 = sand.u32 %s125, 1
          %s854 = smul.addr %s853, 8
          %s855 = scalar_lea.vmem [#allocation9], %s854
          %s857 = ssub.s32 128, 128
          %858 = vsyncadd %s852, %s857
          %s859 = smul.addr %s56, 2
          %s860 = sadd.s32 %s57, %s859
          %s861 = smul.addr %s860, 128
          %s862 = scalar_lea.hbm %s2, %s861
          %s864 = sshll.u32 %s855, 4
          %s865 = int_to_ptr.vmem [resolvable:$true] %s864
          %867 = dma.hbm_to_vmem [thread:$0]  %s862, 128, %s865, %s852
        $region100: #{tpu_custom_call.1} parent=87 // pred_fallthru
          _
        // Predicated region
        $region101: #{tpu_custom_call.1} parent=87 // pred_check
          %p868 = pneg %p161
        $region102: #{tpu_custom_call.1} parent=87 // pred_check_branch
          %870 = sbr.rel (%p868) target = $region104
        $region103: #{tpu_custom_call.1} parent=87 // pred_region
          %s871 = sand.u32 %s49, 1
          %s872 = scalar_lea.sflag [#allocation11], %s871
          %s873 = sand.u32 %s151, 1
          %s874 = scalar_lea.vmem [#allocation10], %s873
          %s876 = ssub.s32 16, 16
          %877 = vsyncadd %s872, %s876
          %s878 = smul.addr %s56, 16
          %s879 = scalar_lea.hbm %s3, %s878
          %s881 = sshll.u32 %s874, 4
          %s882 = int_to_ptr.vmem [resolvable:$true] %s881
          %884 = dma.hbm_to_vmem [thread:$0]  %s879, 16, %s882, %s872
        $region104: #{tpu_custom_call.1} parent=87 // pred_fallthru
          _
      $region88: #{tpu_custom_call.1} parent=5 // pred_fallthru
        _
      %p885 = scmp.le.s32.totalorder 1, %s49
      %p886 = scmp.lt.s32.totalorder %s49, 5
      %p887 = pnand %p885, %p886
      %p888 = pneg %p887
      // Predicated region
      $region105: #{tpu_custom_call.1} parent=5 // pred_check
        _
      $region106: #{tpu_custom_call.1} parent=5 // pred_check_branch
        %890 = sbr.rel (%p887) target = $region108
      $region107: #{tpu_custom_call.1} parent=5 // pred_region
        %s891 = ssub.s32 %s49, 1
        %s892 = sand.u32 %s74, 1
        %s893 = scalar_lea.sflag [#allocation5], %s892
        %s894 = sand.u32 %s74, 1
        %s895 = smul.addr %s894, 64
        %s896 = scalar_lea.vmem [#allocation4], %s895
        // Predicated region
        $region109: #{tpu_custom_call.1} parent=107 // pred_check
          %p897 = pneg %p87
        $region110: #{tpu_custom_call.1} parent=107 // pred_check_branch
          %899 = sbr.rel (%p897) target = $region112
        $region111: #{tpu_custom_call.1} parent=107 // pred_region
          %900 = dma.done %s893, 1024
        $region112: #{tpu_custom_call.1} parent=107 // pred_fallthru
          _
        %s901 = sand.u32 %s54, 1
        %s902 = scalar_lea.sflag [#allocation8], %s901
        %s903 = sand.u32 %s100, 1
        %s904 = smul.addr %s903, 16
        %s905 = scalar_lea.vmem [#allocation7], %s904
        // Predicated region
        $region113: #{tpu_custom_call.1} parent=107 // pred_check
          %p906 = pneg %p113
        $region114: #{tpu_custom_call.1} parent=107 // pred_check_branch
          %908 = sbr.rel (%p906) target = $region116
        $region115: #{tpu_custom_call.1} parent=107 // pred_region
          %909 = dma.done %s902, 256
        $region116: #{tpu_custom_call.1} parent=107 // pred_fallthru
          _
        %s910 = sand.u32 %s54, 1
        %s911 = scalar_lea.sflag [#allocation8], %s910
        %s912 = sand.u32 %s128, 1
        %s913 = smul.addr %s912, 8
        %s914 = scalar_lea.vmem [#allocation9], %s913
        // Predicated region
        $region117: #{tpu_custom_call.1} parent=107 // pred_check
          %p915 = pneg %p141
        $region118: #{tpu_custom_call.1} parent=107 // pred_check_branch
          %917 = sbr.rel (%p915) target = $region120
        $region119: #{tpu_custom_call.1} parent=107 // pred_region
          %918 = dma.done %s911, 128
        $region120: #{tpu_custom_call.1} parent=107 // pred_fallthru
          _
        %s919 = sand.u32 %s54, 1
        %s920 = scalar_lea.sflag [#allocation11], %s919
        %s921 = sand.u32 %s154, 1
        %s922 = scalar_lea.vmem [#allocation10], %s921
        // Predicated region
        $region121: #{tpu_custom_call.1} parent=107 // pred_check
          %p923 = pneg %p167
        $region122: #{tpu_custom_call.1} parent=107 // pred_check_branch
          %925 = sbr.rel (%p923) target = $region124
        $region123: #{tpu_custom_call.1} parent=107 // pred_region
          %926 = dma.done %s920, 16
        $region124: #{tpu_custom_call.1} parent=107 // pred_fallthru
          _
        // Predicated region
        $region125: #{tpu_custom_call.1} parent=107 // pred_check
          %p927 = pneg %p188
        $region126: #{tpu_custom_call.1} parent=107 // pred_check_branch
          %929 = sbr.rel (%p927) target = $region128
        $region127: #{tpu_custom_call.1} parent=107 // pred_region
          %930 = dma.done [#allocation11], 64
        $region128: #{tpu_custom_call.1} parent=107 // pred_fallthru
          _
        // Predicated region
        $region129: #{tpu_custom_call.1} parent=107 // pred_check
          %p931 = pneg %p209
        $region130: #{tpu_custom_call.1} parent=107 // pred_check_branch
          %933 = sbr.rel (%p931) target = $region132
        $region131: #{tpu_custom_call.1} parent=107 // pred_region
          %934 = dma.done [#allocation14], 64
        $region132: #{tpu_custom_call.1} parent=107 // pred_fallthru
          _
        // Predicated region
        $region133: #{tpu_custom_call.1} parent=107 // pred_check
          %p935 = pneg %p230
        $region134: #{tpu_custom_call.1} parent=107 // pred_check_branch
          %937 = sbr.rel (%p935) target = $region136
        $region135: #{tpu_custom_call.1} parent=107 // pred_region
          %938 = dma.done [#allocation14], 256
        $region136: #{tpu_custom_call.1} parent=107 // pred_fallthru
          _
        // Predicated region
        $region137: #{tpu_custom_call.1} parent=107 // pred_check
          %p939 = pneg %p251
        $region138: #{tpu_custom_call.1} parent=107 // pred_check_branch
          %941 = sbr.rel (%p939) target = $region140
        $region139: #{tpu_custom_call.1} parent=107 // pred_region
          %942 = dma.done [#allocation17], 16
        $region140: #{tpu_custom_call.1} parent=107 // pred_fallthru
          _
        // Predicated region
        $region141: #{tpu_custom_call.1} parent=107 // pred_check
          %p943 = pneg %p272
        $region142: #{tpu_custom_call.1} parent=107 // pred_check_branch
          %945 = sbr.rel (%p943) target = $region144
        $region143: #{tpu_custom_call.1} parent=107 // pred_region
          %946 = dma.done [#allocation17], 256
        $region144: #{tpu_custom_call.1} parent=107 // pred_fallthru
          _
        // Predicated region
        $region145: #{tpu_custom_call.1} parent=107 // pred_check
          %p947 = pneg %p293
        $region146: #{tpu_custom_call.1} parent=107 // pred_check_branch
          %949 = sbr.rel (%p947) target = $region148
        $region147: #{tpu_custom_call.1} parent=107 // pred_region
          %950 = dma.done [#allocation20], 16
        $region148: #{tpu_custom_call.1} parent=107 // pred_fallthru
          _
        // Predicated region
        $region149: #{tpu_custom_call.1} parent=107 // pred_check
          %p951 = pneg %p314
        $region150: #{tpu_custom_call.1} parent=107 // pred_check_branch
          %953 = sbr.rel (%p951) target = $region152
        $region151: #{tpu_custom_call.1} parent=107 // pred_region
          %954 = dma.done [#allocation20], 256
        $region152: #{tpu_custom_call.1} parent=107 // pred_fallthru
          _
        // Predicated region
        $region153: #{tpu_custom_call.1} parent=107 // pred_check
          %p955 = pneg %p335
        $region154: #{tpu_custom_call.1} parent=107 // pred_check_branch
          %957 = sbr.rel (%p955) target = $region156
        $region155: #{tpu_custom_call.1} parent=107 // pred_region
          %958 = dma.done [#allocation23], 16
        $region156: #{tpu_custom_call.1} parent=107 // pred_fallthru
          _
        // Predicated region
        $region157: #{tpu_custom_call.1} parent=107 // pred_check
          %p959 = pneg %p356
        $region158: #{tpu_custom_call.1} parent=107 // pred_check_branch
          %961 = sbr.rel (%p959) target = $region160
        $region159: #{tpu_custom_call.1} parent=107 // pred_region
          %962 = dma.done [#allocation23], 256
        $region160: #{tpu_custom_call.1} parent=107 // pred_fallthru
          _
        // Predicated region
        $region161: #{tpu_custom_call.1} parent=107 // pred_check
          %p963 = pneg %p377
        $region162: #{tpu_custom_call.1} parent=107 // pred_check_branch
          %965 = sbr.rel (%p963) target = $region164
        $region163: #{tpu_custom_call.1} parent=107 // pred_region
          %966 = dma.done [#allocation26], 16
        $region164: #{tpu_custom_call.1} parent=107 // pred_fallthru
          _
        // Predicated region
        $region165: #{tpu_custom_call.1} parent=107 // pred_check
          %p967 = pneg %p398
        $region166: #{tpu_custom_call.1} parent=107 // pred_check_branch
          %969 = sbr.rel (%p967) target = $region168
        $region167: #{tpu_custom_call.1} parent=107 // pred_region
          %970 = dma.done [#allocation26], 256
        $region168: #{tpu_custom_call.1} parent=107 // pred_fallthru
          _
        // Predicated region
        $region169: #{tpu_custom_call.1} parent=107 // pred_check
          %p971 = pneg %p419
        $region170: #{tpu_custom_call.1} parent=107 // pred_check_branch
          %973 = sbr.rel (%p971) target = $region172
        $region171: #{tpu_custom_call.1} parent=107 // pred_region
          %974 = dma.done [#allocation29], 16
        $region172: #{tpu_custom_call.1} parent=107 // pred_fallthru
          _
        // Predicated region
        $region173: #{tpu_custom_call.1} parent=107 // pred_check
          %p975 = pneg %p440
        $region174: #{tpu_custom_call.1} parent=107 // pred_check_branch
          %977 = sbr.rel (%p975) target = $region176
        $region175: #{tpu_custom_call.1} parent=107 // pred_region
          %978 = dma.done [#allocation29], 256
        $region176: #{tpu_custom_call.1} parent=107 // pred_fallthru
          _
        // Predicated region
        $region177: #{tpu_custom_call.1} parent=107 // pred_check
          %p979 = pneg %p461
        $region178: #{tpu_custom_call.1} parent=107 // pred_check_branch
          %981 = sbr.rel (%p979) target = $region180
        $region179: #{tpu_custom_call.1} parent=107 // pred_region
          %982 = dma.done [#allocation32], 16
        $region180: #{tpu_custom_call.1} parent=107 // pred_fallthru
          _
        // Predicated region
        $region181: #{tpu_custom_call.1} parent=107 // pred_check
          %p983 = pneg %p482
        $region182: #{tpu_custom_call.1} parent=107 // pred_check_branch
          %985 = sbr.rel (%p983) target = $region184
        $region183: #{tpu_custom_call.1} parent=107 // pred_region
          %986 = dma.done [#allocation32], 256
        $region184: #{tpu_custom_call.1} parent=107 // pred_fallthru
          _
        // Predicated region
        $region185: #{tpu_custom_call.1} parent=107 // pred_check
          %p987 = pneg %p503
        $region186: #{tpu_custom_call.1} parent=107 // pred_check_branch
          %989 = sbr.rel (%p987) target = $region188
        $region187: #{tpu_custom_call.1} parent=107 // pred_region
          %990 = dma.done [#allocation35], 16
        $region188: #{tpu_custom_call.1} parent=107 // pred_fallthru
          _
        // Predicated region
        $region189: #{tpu_custom_call.1} parent=107 // pred_check
          %p991 = pneg %p524
        $region190: #{tpu_custom_call.1} parent=107 // pred_check_branch
          %993 = sbr.rel (%p991) target = $region192
        $region191: #{tpu_custom_call.1} parent=107 // pred_region
          %994 = dma.done [#allocation35], 512
        $region192: #{tpu_custom_call.1} parent=107 // pred_fallthru
          _
        // Predicated region
        $region193: #{tpu_custom_call.1} parent=107 // pred_check
          %p995 = pneg %p545
        $region194: #{tpu_custom_call.1} parent=107 // pred_check_branch
          %997 = sbr.rel (%p995) target = $region196
        $region195: #{tpu_custom_call.1} parent=107 // pred_region
          %998 = dma.done [#allocation38], 16
        $region196: #{tpu_custom_call.1} parent=107 // pred_fallthru
          _
        %s999 = sand.u32 %s74, 1
        %s1000 = scalar_lea.sflag [#allocation5], %s999
        %s1001 = sand.u32 %s74, 1
        %s1002 = smul.addr %s1001, 64
        %s1003 = scalar_lea.vmem [#allocation4], %s1002
        %p1004 = pneg %p87
        %p1005 = pneg %p84
        %s1006 = sand.u32 %s54, 1
        %s1007 = scalar_lea.sflag [#allocation8], %s1006
        %s1008 = sand.u32 %s100, 1
        %s1009 = smul.addr %s1008, 16
        %s1010 = scalar_lea.vmem [#allocation7], %s1009
        %p1011 = pneg %p113
        %p1012 = pneg %p110
        %s1013 = sand.u32 %s54, 1
        %s1014 = scalar_lea.sflag [#allocation8], %s1013
        %s1015 = sand.u32 %s128, 1
        %s1016 = smul.addr %s1015, 8
        %s1017 = scalar_lea.vmem [#allocation9], %s1016
        %p1018 = pneg %p141
        %p1019 = pneg %p138
        %s1020 = sand.u32 %s54, 1
        %s1021 = scalar_lea.sflag [#allocation11], %s1020
        %s1022 = sand.u32 %s154, 1
        %s1023 = scalar_lea.vmem [#allocation10], %s1022
        %p1024 = pneg %p167
        %p1025 = pneg %p164
        %p1026 = pneg %p188
        %p1027 = pneg %p185
        %p1028 = pneg %p209
        %p1029 = pneg %p206
        %p1030 = pneg %p230
        %p1031 = pneg %p227
        %p1032 = pneg %p251
        %p1033 = pneg %p248
        %p1034 = pneg %p272
        %p1035 = pneg %p269
        %p1036 = pneg %p293
        %p1037 = pneg %p290
        %p1038 = pneg %p314
        %p1039 = pneg %p311
        %p1040 = pneg %p335
        %p1041 = pneg %p332
        %p1042 = pneg %p356
        %p1043 = pneg %p353
        %p1044 = pneg %p377
        %p1045 = pneg %p374
        %p1046 = pneg %p398
        %p1047 = pneg %p395
        %p1048 = pneg %p419
        %p1049 = pneg %p416
        %p1050 = pneg %p440
        %p1051 = pneg %p437
        %p1052 = pneg %p461
        %p1053 = pneg %p458
        %p1054 = pneg %p482
        %p1055 = pneg %p479
        %p1056 = pneg %p503
        %p1057 = pneg %p500
        %p1058 = pneg %p524
        %p1059 = pneg %p521
        %p1060 = pneg %p545
        %p1061 = pneg %p542
        %p1062 = pneg %p573
        %p1063 = pneg %p570
        %s1064 = sand.u32 %s560, 1
        %s1065 = scalar_lea.sflag [#allocation6], %s1064
        %s1066 = sand.u32 %s560, 1
        %s1067 = smul.addr %s1066, 32
        %s1068 = scalar_lea.vmem [#allocation39], %s1067
        %s1069 = smul.u32 4, %s59
        %p1071 = scmp.eq.s32.totalorder %s59, 0
        // Predicated region
        $region197: #{tpu_custom_call.1} parent=107 // pred_check
          %p1072 = pneg %p1071
        $region198: #{tpu_custom_call.1} parent=107 // pred_check_branch
          %1074 = sbr.rel (%p1072) target = $region200
        $region199: #{tpu_custom_call.1} parent=107 // pred_region
          %v1075 = vld [vmem:[%s896] sm:$0xff]
          %v1076 = vld [vmem:[%s896 + $0x8] sm:$0xff]
          %v1077 = vld [vmem:[%s896 + $0x10] sm:$0xff]
          %v1078 = vld [vmem:[%s896 + $0x18] sm:$0xff]
          %v1079 = vld [vmem:[%s896 + $0x20] sm:$0xff]
          %v1080 = vld [vmem:[%s896 + $0x28] sm:$0xff]
          %v1081 = vld [vmem:[%s896 + $0x30] sm:$0xff]
          %v1082 = vld [vmem:[%s896 + $0x38] sm:$0xff]
          %v1083 = vld [vmem:[#allocation12] sm:$0x1]
          %v1084 = vld [vmem:[#allocation13] sm:$0x1]
          %vm1085 = vcmask 261120
          %v1086 = vsel %vm1085, %v1075, 0.0
          %1087 = vadd.xlane.f32.xlu0 %v1086
          %v1088 = vpop.xlane.xlu0 %1087
          %v1089 = vsel %vm1085, %v1076, 0.0
          %1090 = vadd.xlane.f32.xlu0 %v1089
          %v1091 = vpop.xlane.xlu0 %1090
          %v1092 = vsel %vm1085, %v1077, 0.0
          %1093 = vadd.xlane.f32.xlu0 %v1092
          %v1094 = vpop.xlane.xlu0 %1093
          %v1095 = vsel %vm1085, %v1078, 0.0
          %1096 = vadd.xlane.f32.xlu0 %v1095
          %v1097 = vpop.xlane.xlu0 %1096
          %v1098 = vsel %vm1085, %v1079, 0.0
          %1099 = vadd.xlane.f32.xlu0 %v1098
          %v1100 = vpop.xlane.xlu0 %1099
          %v1101 = vsel %vm1085, %v1080, 0.0
          %1102 = vadd.xlane.f32.xlu0 %v1101
          %v1103 = vpop.xlane.xlu0 %1102
          %v1104 = vsel %vm1085, %v1081, 0.0
          %1105 = vadd.xlane.f32.xlu0 %v1104
          %v1106 = vpop.xlane.xlu0 %1105
          %v1107 = vsel %vm1085, %v1082, 0.0
          %1108 = vadd.xlane.f32.xlu0 %v1107
          %v1109 = vpop.xlane.xlu0 %1108
          %v1110 = vrcp.pop 32.0
          %v1111 = vmul.f32 %v1088, %v1110
          %v1112 = vmul.f32 %v1091, %v1110
          %v1113 = vmul.f32 %v1094, %v1110
          %v1114 = vmul.f32 %v1097, %v1110
          %v1115 = vmul.f32 %v1100, %v1110
          %v1116 = vmul.f32 %v1103, %v1110
          %v1117 = vmul.f32 %v1106, %v1110
          %v1118 = vmul.f32 %v1109, %v1110
          %v1119 = vsub.f32 %v1075, %v1111
          %v1120 = vsub.f32 %v1076, %v1112
          %v1121 = vsub.f32 %v1077, %v1113
          %v1122 = vsub.f32 %v1078, %v1114
          %v1123 = vsub.f32 %v1079, %v1115
          %v1124 = vsub.f32 %v1080, %v1116
          %v1125 = vsub.f32 %v1081, %v1117
          %v1126 = vsub.f32 %v1082, %v1118
          %v1127 = vmul.f32 %v1119, %v1119
          %v1128 = vmul.f32 %v1120, %v1120
          %v1129 = vmul.f32 %v1121, %v1121
          %v1130 = vmul.f32 %v1122, %v1122
          %v1131 = vmul.f32 %v1123, %v1123
          %v1132 = vmul.f32 %v1124, %v1124
          %v1133 = vmul.f32 %v1125, %v1125
          %v1134 = vmul.f32 %v1126, %v1126
          %v1135 = vsel %vm1085, %v1127, 0.0
          %1136 = vadd.xlane.f32.xlu0 %v1135
          %v1137 = vpop.xlane.xlu0 %1136
          %v1138 = vsel %vm1085, %v1128, 0.0
          %1139 = vadd.xlane.f32.xlu0 %v1138
          %v1140 = vpop.xlane.xlu0 %1139
          %v1141 = vsel %vm1085, %v1129, 0.0
          %1142 = vadd.xlane.f32.xlu0 %v1141
          %v1143 = vpop.xlane.xlu0 %1142
          %v1144 = vsel %vm1085, %v1130, 0.0
          %1145 = vadd.xlane.f32.xlu0 %v1144
          %v1146 = vpop.xlane.xlu0 %1145
          %v1147 = vsel %vm1085, %v1131, 0.0
          %1148 = vadd.xlane.f32.xlu0 %v1147
          %v1149 = vpop.xlane.xlu0 %1148
          %v1150 = vsel %vm1085, %v1132, 0.0
          %1151 = vadd.xlane.f32.xlu0 %v1150
          %v1152 = vpop.xlane.xlu0 %1151
          %v1153 = vsel %vm1085, %v1133, 0.0
          %1154 = vadd.xlane.f32.xlu0 %v1153
          %v1155 = vpop.xlane.xlu0 %1154
          %v1156 = vsel %vm1085, %v1134, 0.0
          %1157 = vadd.xlane.f32.xlu0 %v1156
          %v1158 = vpop.xlane.xlu0 %1157
          %v1159 = vmul.f32 %v1137, 0.032258064
          %v1160 = vmul.f32 %v1140, 0.032258064
          %v1161 = vmul.f32 %v1143, 0.032258064
          %v1162 = vmul.f32 %v1146, 0.032258064
          %v1163 = vmul.f32 %v1149, 0.032258064
          %v1164 = vmul.f32 %v1152, 0.032258064
          %v1165 = vmul.f32 %v1155, 0.032258064
          %v1166 = vmul.f32 %v1158, 0.032258064
          %v1167 = vrsqrt.pop %v1159
          %v1168 = vmul.f32 %v1159, %v1167
          %vm1169 = vcmp.eq.f32.partialorder %v1159, inf
          %v1170 = vsel %vm1169, %v1159, %v1168
          %vm1171 = vcmp.eq.f32.partialorder %v1159, 0.0
          %v1172 = vand.u32 %v1159, 2147483648
          %v1173 = vsel %vm1171, %v1172, %v1170
          %v1174 = vrsqrt.pop %v1160
          %v1175 = vmul.f32 %v1160, %v1174
          %vm1176 = vcmp.eq.f32.partialorder %v1160, inf
          %v1177 = vsel %vm1176, %v1160, %v1175
          %vm1178 = vcmp.eq.f32.partialorder %v1160, 0.0
          %v1179 = vand.u32 %v1160, 2147483648
          %v1180 = vsel %vm1178, %v1179, %v1177
          %v1181 = vrsqrt.pop %v1161
          %v1182 = vmul.f32 %v1161, %v1181
          %vm1183 = vcmp.eq.f32.partialorder %v1161, inf
          %v1184 = vsel %vm1183, %v1161, %v1182
          %vm1185 = vcmp.eq.f32.partialorder %v1161, 0.0
          %v1186 = vand.u32 %v1161, 2147483648
          %v1187 = vsel %vm1185, %v1186, %v1184
          %v1188 = vrsqrt.pop %v1162
          %v1189 = vmul.f32 %v1162, %v1188
          %vm1190 = vcmp.eq.f32.partialorder %v1162, inf
          %v1191 = vsel %vm1190, %v1162, %v1189
          %vm1192 = vcmp.eq.f32.partialorder %v1162, 0.0
          %v1193 = vand.u32 %v1162, 2147483648
          %v1194 = vsel %vm1192, %v1193, %v1191
          %v1195 = vrsqrt.pop %v1163
          %v1196 = vmul.f32 %v1163, %v1195
          %vm1197 = vcmp.eq.f32.partialorder %v1163, inf
          %v1198 = vsel %vm1197, %v1163, %v1196
          %vm1199 = vcmp.eq.f32.partialorder %v1163, 0.0
          %v1200 = vand.u32 %v1163, 2147483648
          %v1201 = vsel %vm1199, %v1200, %v1198
          %v1202 = vrsqrt.pop %v1164
          %v1203 = vmul.f32 %v1164, %v1202
          %vm1204 = vcmp.eq.f32.partialorder %v1164, inf
          %v1205 = vsel %vm1204, %v1164, %v1203
          %vm1206 = vcmp.eq.f32.partialorder %v1164, 0.0
          %v1207 = vand.u32 %v1164, 2147483648
          %v1208 = vsel %vm1206, %v1207, %v1205
          %v1209 = vrsqrt.pop %v1165
          %v1210 = vmul.f32 %v1165, %v1209
          %vm1211 = vcmp.eq.f32.partialorder %v1165, inf
          %v1212 = vsel %vm1211, %v1165, %v1210
          %vm1213 = vcmp.eq.f32.partialorder %v1165, 0.0
          %v1214 = vand.u32 %v1165, 2147483648
          %v1215 = vsel %vm1213, %v1214, %v1212
          %v1216 = vrsqrt.pop %v1166
          %v1217 = vmul.f32 %v1166, %v1216
          %vm1218 = vcmp.eq.f32.partialorder %v1166, inf
          %v1219 = vsel %vm1218, %v1166, %v1217
          %vm1220 = vcmp.eq.f32.partialorder %v1166, 0.0
          %v1221 = vand.u32 %v1166, 2147483648
          %v1222 = vsel %vm1220, %v1221, %v1219
          %v1223 = vadd.f32 %v1173, 1e-06
          %v1224 = vadd.f32 %v1180, 1e-06
          %v1225 = vadd.f32 %v1187, 1e-06
          %v1226 = vadd.f32 %v1194, 1e-06
          %v1227 = vadd.f32 %v1201, 1e-06
          %v1228 = vadd.f32 %v1208, 1e-06
          %v1229 = vadd.f32 %v1215, 1e-06
          %v1230 = vadd.f32 %v1222, 1e-06
          %v1231 = vrcp.pop %v1223
          %v1232 = vrcp.pop %v1224
          %v1233 = vrcp.pop %v1225
          %v1234 = vrcp.pop %v1226
          %v1235 = vrcp.pop %v1227
          %v1236 = vrcp.pop %v1228
          %v1237 = vrcp.pop %v1229
          %v1238 = vrcp.pop %v1230
          %v1239 = vmul.f32 %v1119, %v1231
          %v1240 = vmul.f32 %v1120, %v1232
          %v1241 = vmul.f32 %v1121, %v1233
          %v1242 = vmul.f32 %v1122, %v1234
          %v1243 = vmul.f32 %v1123, %v1235
          %v1244 = vmul.f32 %v1124, %v1236
          %v1245 = vmul.f32 %v1125, %v1237
          %v1246 = vmul.f32 %v1126, %v1238
          %v1247 = vlaneseq
          %v1248 = vshrl.u32 %v1247, 7
          %v1249 = vsub.s32 0, %v1248
          %v1250 = vrot.slane %v1083, %v1249
          %v1251 = vmul.f32 %v1250, %v1239
          %v1252 = vmul.f32 %v1250, %v1240
          %v1253 = vmul.f32 %v1250, %v1241
          %v1254 = vmul.f32 %v1250, %v1242
          %v1255 = vmul.f32 %v1250, %v1243
          %v1256 = vmul.f32 %v1250, %v1244
          %v1257 = vmul.f32 %v1250, %v1245
          %v1258 = vmul.f32 %v1250, %v1246
          %v1259 = vlaneseq
          %v1260 = vshrl.u32 %v1259, 7
          %v1261 = vsub.s32 0, %v1260
          %v1262 = vrot.slane %v1084, %v1261
          %v1263 = vadd.f32 %v1251, %v1262
          %v1264 = vadd.f32 %v1252, %v1262
          %v1265 = vadd.f32 %v1253, %v1262
          %v1266 = vadd.f32 %v1254, %v1262
          %v1267 = vadd.f32 %v1255, %v1262
          %v1268 = vadd.f32 %v1256, %v1262
          %v1269 = vadd.f32 %v1257, %v1262
          %v1270 = vadd.f32 %v1258, %v1262
          %v1271 = vpack.c.bf16 %v1264, %v1263
          %v1272 = vpack.c.bf16 %v1266, %v1265
          %v1273 = vpack.c.bf16 %v1268, %v1267
          %v1274 = vpack.c.bf16 %v1270, %v1269
          %v1275 = vld [vmem:[#allocation18] sm:$0xf]
          %v1276 = vld [vmem:[#allocation18 + $0x4] sm:$0xf]
          %v1277 = vld [vmem:[#allocation18 + $0x8] sm:$0xf]
          %v1278 = vld [vmem:[#allocation18 + $0xc] sm:$0xf]
          %v1279 = vld [vmem:[#allocation19] sm:$0x1]
          %v1281 = vlaneseq
          %v1282 = vshrl.u32 %v1281, 7
          %v1283 = vsub.s32 0, %v1282
          %v1284 = vrot.slane %v1279, %v1283
          %v1290 = vunpack.c.l.b16 %v1275
          %v1291 = vunpack.c.l.b16 %v1276
          %v1292 = vunpack.c.l.b16 %v1277
          %v1293 = vunpack.c.l.b16 %v1278
          %v1294 = vpack.c.b16 %v1291, %v1290
          %v1295 = vpack.c.b16 %v1293, %v1292
          %v1299 = vsel %vm1085, %v1271, 0
          %v1302 = vsel %vm1085, %v1272, 0
          %v1305 = vsel %vm1085, %v1273, 0
          %v1308 = vsel %vm1085, %v1274, 0
          %1310 = vmatprep.subr.bf16.mxu0 0
          %1311 = vmatpush1.bf16.msra.mxu0 %v1294
          %1312 = vmatprep.subr.bf16.mxu0 0
          %1313 = vmatpush1.bf16.msra.mxu0 %v1295
          %1314 = vmatprep.subr.bf16.mxu0 0
          %1315 = vmatpush1.bf16.msra.mxu0 0
          %1316 = vmatprep.subr.bf16.mxu0 0
          %1317 = vmatpush1.bf16.msra.mxu0 0
          %1318 = vmatprep.subr.bf16.mxu0 0
          %1319 = vmatpush1.bf16.msra.mxu0 0
          %1320 = vmatprep.subr.bf16.mxu0 0
          %1321 = vmatpush1.bf16.msra.mxu0 0
          %1322 = vmatprep.subr.bf16.mxu0 0
          %1323 = vmatpush1.bf16.msra.mxu0 0
          %1324 = vmatprep.subr.bf16.mxu0 0
          %1325 = vmatpush1.bf16.msra.mxu0 0
          %1326 = vmatprep.subr.bf16.mxu0 0
          %1327 = vmatpush1.bf16.msra.mxu0 0
          %1328 = vmatprep.subr.bf16.mxu0 0
          %1329 = vmatpush1.bf16.msra.mxu0 0
          %1330 = vmatprep.subr.bf16.mxu0 0
          %1331 = vmatpush1.bf16.msra.mxu0 0
          %1332 = vmatprep.subr.bf16.mxu0 0
          %1333 = vmatpush1.bf16.msra.mxu0 0
          %1334 = vmatprep.subr.bf16.mxu0 0
          %1335 = vmatpush1.bf16.msra.mxu0 0
          %1336 = vmatprep.subr.bf16.mxu0 0
          %1337 = vmatpush1.bf16.msra.mxu0 0
          %1338 = vmatprep.subr.bf16.mxu0 0
          %1339 = vmatpush1.bf16.msra.mxu0 0
          %1340 = vmatprep.subr.bf16.mxu0 0
          %1341 = vmatpush1.bf16.msra.mxu0 0
          %1342 = vmatprep.mubr.bf16.mxu0 0
          %1343 = vmatmul.mubr.bf16.gmra.mrb[0].mxu0 %v1299
          %v1344 = vpop.f32.mrb[0].mxu0
          %v1345 = vadd.f32 %v1284, %v1344
          %v1346 = vpop.f32.mrb[0].mxu0
          %v1347 = vpop.f32.mrb[0].mxu0
          %v1348 = vadd.f32 %v1284, %v1347
          %v1349 = vpop.f32.mrb[0].mxu0
          %1350 = vmatprep.mubr.bf16.mxu0 0
          %1351 = vmatmul.mubr.bf16.gmra.mrb[0].mxu0 %v1302
          %v1352 = vpop.f32.mrb[0].mxu0
          %v1353 = vadd.f32 %v1284, %v1352
          %v1354 = vpop.f32.mrb[0].mxu0
          %v1355 = vpop.f32.mrb[0].mxu0
          %v1356 = vadd.f32 %v1284, %v1355
          %v1357 = vpop.f32.mrb[0].mxu0
          %1358 = vmatprep.mubr.bf16.mxu0 0
          %1359 = vmatmul.mubr.bf16.gmra.mrb[0].mxu0 %v1305
          %v1360 = vpop.f32.mrb[0].mxu0
          %v1361 = vadd.f32 %v1284, %v1360
          %v1362 = vpop.f32.mrb[0].mxu0
          %v1363 = vpop.f32.mrb[0].mxu0
          %v1364 = vadd.f32 %v1284, %v1363
          %v1365 = vpop.f32.mrb[0].mxu0
          %1366 = vmatprep.mubr.bf16.mxu0 0
          %1367 = vmatmul.mubr.bf16.gmra.mrb[0].mxu0 %v1308
          %v1368 = vpop.f32.mrb[0].mxu0
          %v1369 = vadd.f32 %v1284, %v1368
          %v1370 = vpop.f32.mrb[0].mxu0
          %v1371 = vpop.f32.mrb[0].mxu0
          %v1372 = vadd.f32 %v1284, %v1371
          %v1373 = vpop.f32.mrb[0].mxu0
          %1374 = vdwg.mxu0
          %v1375 = vpack.c.bf16 %v1348, %v1345
          %v1376 = vpack.c.bf16 %v1356, %v1353
          %v1377 = vpack.c.bf16 %v1364, %v1361
          %v1378 = vpack.c.bf16 %v1372, %v1369
          %vm1379 = vcmask 523264
          %1380 = vst.msk [vmem:[#allocation2] sm:$0xff] %vm1379, %v1375
          %1381 = vst.msk [vmem:[#allocation2 + $0x8] sm:$0xff] %vm1379, %v1376
          %1382 = vst.msk [vmem:[#allocation2 + $0x10] sm:$0xff] %vm1379, %v1377
          %1383 = vst.msk [vmem:[#allocation2 + $0x18] sm:$0xff] %vm1379, %v1378
          %v1384 = vld [vmem:[%s905] sm:$0xff]
          %v1385 = vld [vmem:[%s905 + $0x8] sm:$0xff]
          %v1386 = vpack.c.bf16 %v1385, %v1384
          %v1387 = vld [vmem:[#allocation27] sm:$0xf]
          %v1388 = vld [vmem:[#allocation27 + $0x4] sm:$0xf]
          %v1389 = vld [vmem:[#allocation27 + $0x8] sm:$0xf]
          %v1390 = vld [vmem:[#allocation27 + $0xc] sm:$0xf]
          %v1391 = vld [vmem:[#allocation28] sm:$0x1]
          %v1393 = vlaneseq
          %v1394 = vshrl.u32 %v1393, 7
          %v1395 = vsub.s32 0, %v1394
          %v1396 = vrot.slane %v1391, %v1395
          %v1402 = vunpack.c.l.b16 %v1387
          %v1403 = vunpack.c.l.b16 %v1388
          %v1404 = vunpack.c.l.b16 %v1389
          %v1405 = vunpack.c.l.b16 %v1390
          %v1406 = vpack.c.b16 %v1403, %v1402
          %v1407 = vpack.c.b16 %v1405, %v1404
          %v1411 = vsel %vm1085, %v1386, 0
          %1413 = vmatprep.subr.bf16.mxu0 0
          %1414 = vmatpush1.bf16.msra.mxu0 %v1406
          %1415 = vmatprep.subr.bf16.mxu0 0
          %1416 = vmatpush1.bf16.msra.mxu0 %v1407
          %1417 = vmatprep.subr.bf16.mxu0 0
          %1418 = vmatpush1.bf16.msra.mxu0 0
          %1419 = vmatprep.subr.bf16.mxu0 0
          %1420 = vmatpush1.bf16.msra.mxu0 0
          %1421 = vmatprep.subr.bf16.mxu0 0
          %1422 = vmatpush1.bf16.msra.mxu0 0
          %1423 = vmatprep.subr.bf16.mxu0 0
          %1424 = vmatpush1.bf16.msra.mxu0 0
          %1425 = vmatprep.subr.bf16.mxu0 0
          %1426 = vmatpush1.bf16.msra.mxu0 0
          %1427 = vmatprep.subr.bf16.mxu0 0
          %1428 = vmatpush1.bf16.msra.mxu0 0
          %1429 = vmatprep.subr.bf16.mxu0 0
          %1430 = vmatpush1.bf16.msra.mxu0 0
          %1431 = vmatprep.subr.bf16.mxu0 0
          %1432 = vmatpush1.bf16.msra.mxu0 0
          %1433 = vmatprep.subr.bf16.mxu0 0
          %1434 = vmatpush1.bf16.msra.mxu0 0
          %1435 = vmatprep.subr.bf16.mxu0 0
          %1436 = vmatpush1.bf16.msra.mxu0 0
          %1437 = vmatprep.subr.bf16.mxu0 0
          %1438 = vmatpush1.bf16.msra.mxu0 0
          %1439 = vmatprep.subr.bf16.mxu0 0
          %1440 = vmatpush1.bf16.msra.mxu0 0
          %1441 = vmatprep.subr.bf16.mxu0 0
          %1442 = vmatpush1.bf16.msra.mxu0 0
          %1443 = vmatprep.subr.bf16.mxu0 0
          %1444 = vmatpush1.bf16.msra.mxu0 0
          %1445 = vmatprep.mubr.bf16.mxu0 0
          %1446 = vmatmul.mubr.bf16.gmra.mrb[0].mxu0 %v1411
          %v1447 = vpop.f32.mrb[0].mxu0
          %v1448 = vadd.f32 %v1396, %v1447
          %v1449 = vpop.f32.mrb[0].mxu0
          %v1450 = vpop.f32.mrb[0].mxu0
          %v1451 = vadd.f32 %v1396, %v1450
          %v1452 = vpop.f32.mrb[0].mxu0
          %1453 = vdwg.mxu0
          %v1454 = vpack.c.bf16 %v1451, %v1448
          %1455 = vst.msk [vmem:[#allocation3] sm:$0xff] %vm1379, %v1454
        $region200: #{tpu_custom_call.1} parent=107 // pred_fallthru
          _
        %s1456 = smul.u32 %s59, 32
        %s1457 = scalar_lea.vmem %s896, %s1456 [#allocation4]
        %v1458 = vld [vmem:[%s1457] sm:$0xff]
        %v1459 = vld [vmem:[%s1457 + $0x8] sm:$0xff]
        %v1460 = vld [vmem:[%s1457 + $0x10] sm:$0xff]
        %v1461 = vld [vmem:[%s1457 + $0x18] sm:$0xff]
        %v1462 = vld [vmem:[%s914] sm:$0xff]
        %v1463 = vunpack.c.0.s8 %v1462
        %v1464 = vunpack.c.1.s8 %v1462
        %v1465 = vunpack.c.2.s8 %v1462
        %v1466 = vunpack.c.3.s8 %v1462
        %v1467 = vcvt.s32.f32 %v1463
        %v1468 = vcvt.s32.f32 %v1464
        %v1469 = vcvt.s32.f32 %v1465
        %v1470 = vcvt.s32.f32 %v1466
        %vm1471 = vcmp.eq.f32.partialorder %v1467, 0.0
        %vm1472 = vcmp.eq.f32.partialorder %v1468, 0.0
        %vm1473 = vcmp.eq.f32.partialorder %v1469, 0.0
        %vm1474 = vcmp.eq.f32.partialorder %v1470, 0.0
        %v1475 = vsel %vm1471, -1e+09, 0.0
        %v1476 = vsel %vm1472, -1e+09, 0.0
        %v1477 = vsel %vm1473, -1e+09, 0.0
        %v1478 = vsel %vm1474, -1e+09, 0.0
        %v1479 = vld [vmem:[%s922] sm:$0x1]
        %v1480 = vunpack.c.0.s8 %v1479
        %v1481 = vcvt.s32.f32 %v1480
        %vm1482 = vcmp.eq.f32.partialorder %v1481, 0.0
        %v1483 = vsel %vm1482, -1e+09, 0.0
        %v1484 = vld [vmem:[#allocation12] sm:$0x1]
        %v1485 = vld [vmem:[#allocation13] sm:$0x1]
        %vm1486 = vcmask 261120
        %v1487 = vsel %vm1486, %v1458, 0.0
        %1488 = vadd.xlane.f32.xlu0 %v1487
        %v1489 = vpop.xlane.xlu0 %1488
        %v1490 = vsel %vm1486, %v1459, 0.0
        %1491 = vadd.xlane.f32.xlu0 %v1490
        %v1492 = vpop.xlane.xlu0 %1491
        %v1493 = vsel %vm1486, %v1460, 0.0
        %1494 = vadd.xlane.f32.xlu0 %v1493
        %v1495 = vpop.xlane.xlu0 %1494
        %v1496 = vsel %vm1486, %v1461, 0.0
        %1497 = vadd.xlane.f32.xlu0 %v1496
        %v1498 = vpop.xlane.xlu0 %1497
        %v1499 = vrcp.pop 32.0
        %v1500 = vmul.f32 %v1489, %v1499
        %v1501 = vmul.f32 %v1492, %v1499
        %v1502 = vmul.f32 %v1495, %v1499
        %v1503 = vmul.f32 %v1498, %v1499
        %v1504 = vsub.f32 %v1458, %v1500
        %v1505 = vsub.f32 %v1459, %v1501
        %v1506 = vsub.f32 %v1460, %v1502
        %v1507 = vsub.f32 %v1461, %v1503
        %v1508 = vmul.f32 %v1504, %v1504
        %v1509 = vmul.f32 %v1505, %v1505
        %v1510 = vmul.f32 %v1506, %v1506
        %v1511 = vmul.f32 %v1507, %v1507
        %v1512 = vsel %vm1486, %v1508, 0.0
        %1513 = vadd.xlane.f32.xlu0 %v1512
        %v1514 = vpop.xlane.xlu0 %1513
        %v1515 = vsel %vm1486, %v1509, 0.0
        %1516 = vadd.xlane.f32.xlu0 %v1515
        %v1517 = vpop.xlane.xlu0 %1516
        %v1518 = vsel %vm1486, %v1510, 0.0
        %1519 = vadd.xlane.f32.xlu0 %v1518
        %v1520 = vpop.xlane.xlu0 %1519
        %v1521 = vsel %vm1486, %v1511, 0.0
        %1522 = vadd.xlane.f32.xlu0 %v1521
        %v1523 = vpop.xlane.xlu0 %1522
        %v1524 = vmul.f32 %v1514, 0.032258064
        %v1525 = vmul.f32 %v1517, 0.032258064
        %v1526 = vmul.f32 %v1520, 0.032258064
        %v1527 = vmul.f32 %v1523, 0.032258064
        %v1528 = vrsqrt.pop %v1524
        %v1529 = vmul.f32 %v1524, %v1528
        %vm1530 = vcmp.eq.f32.partialorder %v1524, inf
        %v1531 = vsel %vm1530, %v1524, %v1529
        %vm1532 = vcmp.eq.f32.partialorder %v1524, 0.0
        %v1533 = vand.u32 %v1524, 2147483648
        %v1534 = vsel %vm1532, %v1533, %v1531
        %v1535 = vrsqrt.pop %v1525
        %v1536 = vmul.f32 %v1525, %v1535
        %vm1537 = vcmp.eq.f32.partialorder %v1525, inf
        %v1538 = vsel %vm1537, %v1525, %v1536
        %vm1539 = vcmp.eq.f32.partialorder %v1525, 0.0
        %v1540 = vand.u32 %v1525, 2147483648
        %v1541 = vsel %vm1539, %v1540, %v1538
        %v1542 = vrsqrt.pop %v1526
        %v1543 = vmul.f32 %v1526, %v1542
        %vm1544 = vcmp.eq.f32.partialorder %v1526, inf
        %v1545 = vsel %vm1544, %v1526, %v1543
        %vm1546 = vcmp.eq.f32.partialorder %v1526, 0.0
        %v1547 = vand.u32 %v1526, 2147483648
        %v1548 = vsel %vm1546, %v1547, %v1545
        %v1549 = vrsqrt.pop %v1527
        %v1550 = vmul.f32 %v1527, %v1549
        %vm1551 = vcmp.eq.f32.partialorder %v1527, inf
        %v1552 = vsel %vm1551, %v1527, %v1550
        %vm1553 = vcmp.eq.f32.partialorder %v1527, 0.0
        %v1554 = vand.u32 %v1527, 2147483648
        %v1555 = vsel %vm1553, %v1554, %v1552
        %v1556 = vadd.f32 %v1534, 1e-06
        %v1557 = vadd.f32 %v1541, 1e-06
        %v1558 = vadd.f32 %v1548, 1e-06
        %v1559 = vadd.f32 %v1555, 1e-06
        %v1560 = vrcp.pop %v1556
        %v1561 = vrcp.pop %v1557
        %v1562 = vrcp.pop %v1558
        %v1563 = vrcp.pop %v1559
        %v1564 = vmul.f32 %v1504, %v1560
        %v1565 = vmul.f32 %v1505, %v1561
        %v1566 = vmul.f32 %v1506, %v1562
        %v1567 = vmul.f32 %v1507, %v1563
        %v1568 = vlaneseq
        %v1569 = vshrl.u32 %v1568, 7
        %v1570 = vsub.s32 0, %v1569
        %v1571 = vrot.slane %v1484, %v1570
        %v1572 = vmul.f32 %v1571, %v1564
        %v1573 = vmul.f32 %v1571, %v1565
        %v1574 = vmul.f32 %v1571, %v1566
        %v1575 = vmul.f32 %v1571, %v1567
        %v1576 = vlaneseq
        %v1577 = vshrl.u32 %v1576, 7
        %v1578 = vsub.s32 0, %v1577
        %v1579 = vrot.slane %v1485, %v1578
        %v1580 = vadd.f32 %v1572, %v1579
        %v1581 = vadd.f32 %v1573, %v1579
        %v1582 = vadd.f32 %v1574, %v1579
        %v1583 = vadd.f32 %v1575, %v1579
        %v1584 = vpack.c.bf16 %v1581, %v1580
        %v1585 = vpack.c.bf16 %v1583, %v1582
        %v1586 = vld [vmem:[#allocation15] sm:$0xf]
        %v1587 = vld [vmem:[#allocation15 + $0x4] sm:$0xf]
        %v1588 = vld [vmem:[#allocation15 + $0x8] sm:$0xf]
        %v1589 = vld [vmem:[#allocation15 + $0xc] sm:$0xf]
        %v1590 = vld [vmem:[#allocation16] sm:$0x1]
        %v1592 = vlaneseq
        %v1593 = vshrl.u32 %v1592, 7
        %v1594 = vsub.s32 0, %v1593
        %v1595 = vrot.slane %v1590, %v1594
        %v1601 = vunpack.c.l.b16 %v1586
        %v1602 = vunpack.c.l.b16 %v1587
        %v1603 = vunpack.c.l.b16 %v1588
        %v1604 = vunpack.c.l.b16 %v1589
        %v1605 = vpack.c.b16 %v1602, %v1601
        %v1606 = vpack.c.b16 %v1604, %v1603
        %v1610 = vsel %vm1486, %v1584, 0
        %v1613 = vsel %vm1486, %v1585, 0
        %1615 = vmatprep.subr.bf16.mxu0 0
        %1616 = vmatpush1.bf16.msra.mxu0 %v1605
        %1617 = vmatprep.subr.bf16.mxu0 0
        %1618 = vmatpush1.bf16.msra.mxu0 %v1606
        %1619 = vmatprep.subr.bf16.mxu0 0
        %1620 = vmatpush1.bf16.msra.mxu0 0
        %1621 = vmatprep.subr.bf16.mxu0 0
        %1622 = vmatpush1.bf16.msra.mxu0 0
        %1623 = vmatprep.subr.bf16.mxu0 0
        %1624 = vmatpush1.bf16.msra.mxu0 0
        %1625 = vmatprep.subr.bf16.mxu0 0
        %1626 = vmatpush1.bf16.msra.mxu0 0
        %1627 = vmatprep.subr.bf16.mxu0 0
        %1628 = vmatpush1.bf16.msra.mxu0 0
        %1629 = vmatprep.subr.bf16.mxu0 0
        %1630 = vmatpush1.bf16.msra.mxu0 0
        %1631 = vmatprep.subr.bf16.mxu0 0
        %1632 = vmatpush1.bf16.msra.mxu0 0
        %1633 = vmatprep.subr.bf16.mxu0 0
        %1634 = vmatpush1.bf16.msra.mxu0 0
        %1635 = vmatprep.subr.bf16.mxu0 0
        %1636 = vmatpush1.bf16.msra.mxu0 0
        %1637 = vmatprep.subr.bf16.mxu0 0
        %1638 = vmatpush1.bf16.msra.mxu0 0
        %1639 = vmatprep.subr.bf16.mxu0 0
        %1640 = vmatpush1.bf16.msra.mxu0 0
        %1641 = vmatprep.subr.bf16.mxu0 0
        %1642 = vmatpush1.bf16.msra.mxu0 0
        %1643 = vmatprep.subr.bf16.mxu0 0
        %1644 = vmatpush1.bf16.msra.mxu0 0
        %1645 = vmatprep.subr.bf16.mxu0 0
        %1646 = vmatpush1.bf16.msra.mxu0 0
        %1647 = vmatprep.mubr.bf16.mxu0 0
        %1648 = vmatmul.mubr.bf16.gmra.mrb[0].mxu0 %v1610
        %v1649 = vpop.f32.mrb[0].mxu0
        %v1650 = vadd.f32 %v1595, %v1649
        %v1651 = vpop.f32.mrb[0].mxu0
        %v1652 = vpop.f32.mrb[0].mxu0
        %v1653 = vadd.f32 %v1595, %v1652
        %v1654 = vpop.f32.mrb[0].mxu0
        %1655 = vmatprep.mubr.bf16.mxu0 0
        %1656 = vmatmul.mubr.bf16.gmra.mrb[0].mxu0 %v1613
        %v1657 = vpop.f32.mrb[0].mxu0
        %v1658 = vadd.f32 %v1595, %v1657
        %v1659 = vpop.f32.mrb[0].mxu0
        %v1660 = vpop.f32.mrb[0].mxu0
        %v1661 = vadd.f32 %v1595, %v1660
        %v1662 = vpop.f32.mrb[0].mxu0
        %1663 = vdwg.mxu0
        %v1664 = vld [vmem:[#allocation2] sm:$0xff]
        %v1665 = vld [vmem:[#allocation2 + $0x8] sm:$0xff]
        %v1666 = vld [vmem:[#allocation2 + $0x10] sm:$0xff]
        %v1667 = vld [vmem:[#allocation2 + $0x18] sm:$0xff]
        %v1668 = vmul.f32 %v1650, 0.35355338
        %v1669 = vmul.f32 %v1653, 0.35355338
        %v1670 = vmul.f32 %v1658, 0.35355338
        %v1671 = vmul.f32 %v1661, 0.35355338
        %v1672 = vpack.c.bf16 %v1669, %v1668
        %v1673 = vpack.c.bf16 %v1671, %v1670
        %vm1674 = vcmask 64512
        %v1676 = vsel %vm1674, %v1672, 0
        %v1679 = vsel %vm1674, %v1673, 0
        %v1682 = vsel %vm1674, %v1664, 0
        %v1685 = vsel %vm1674, %v1665, 0
        %v1688 = vsel %vm1674, %v1666, 0
        %v1691 = vsel %vm1674, %v1667, 0
        %1693 = vmatprep.subr.bf16.mxu0 0
        %1694 = vmatpush1.bf16.xpose.msra.mxu0 %v1682
        %1695 = vmatprep.subr.bf16.mxu0 0
        %1696 = vmatpush1.bf16.xpose.msra.mxu0 %v1685
        %1697 = vmatprep.subr.bf16.mxu0 0
        %1698 = vmatpush1.bf16.xpose.msra.mxu0 %v1688
        %1699 = vmatprep.subr.bf16.mxu0 0
        %1700 = vmatpush1.bf16.xpose.msra.mxu0 %v1691
        %1701 = vmatprep.subr.bf16.mxu0 0
        %1702 = vmatpush1.bf16.xpose.msra.mxu0 0
        %1703 = vmatprep.subr.bf16.mxu0 0
        %1704 = vmatpush1.bf16.xpose.msra.mxu0 0
        %1705 = vmatprep.subr.bf16.mxu0 0
        %1706 = vmatpush1.bf16.xpose.msra.mxu0 0
        %1707 = vmatprep.subr.bf16.mxu0 0
        %1708 = vmatpush1.bf16.xpose.msra.mxu0 0
        %1709 = vmatprep.subr.bf16.mxu0 0
        %1710 = vmatpush1.bf16.xpose.msra.mxu0 0
        %1711 = vmatprep.subr.bf16.mxu0 0
        %1712 = vmatpush1.bf16.xpose.msra.mxu0 0
        %1713 = vmatprep.subr.bf16.mxu0 0
        %1714 = vmatpush1.bf16.xpose.msra.mxu0 0
        %1715 = vmatprep.subr.bf16.mxu0 0
        %1716 = vmatpush1.bf16.xpose.msra.mxu0 0
        %1717 = vmatprep.subr.bf16.mxu0 0
        %1718 = vmatpush1.bf16.xpose.msra.mxu0 0
        %1719 = vmatprep.subr.bf16.mxu0 0
        %1720 = vmatpush1.bf16.xpose.msra.mxu0 0
        %1721 = vmatprep.subr.bf16.mxu0 0
        %1722 = vmatpush1.bf16.xpose.msra.mxu0 0
        %1723 = vmatprep.subr.bf16.mxu0 0
        %1724 = vmatpush1.bf16.xpose.msra.mxu0 0
        %1725 = vmatprep.mubr.bf16.mxu0 0
        %1726 = vmatmul.mubr.bf16.gmra.mrb[0].mxu0 %v1676
        %v1727 = vpop.f32.mrb[0].mxu0
        %v1728 = vadd.f32 %v1475, %v1727
        %v1729 = vpop.f32.mrb[0].mxu0
        %v1730 = vpop.f32.mrb[0].mxu0
        %v1731 = vadd.f32 %v1476, %v1730
        %v1732 = vpop.f32.mrb[0].mxu0
        %1733 = vmatprep.mubr.bf16.mxu0 0
        %1734 = vmatmul.mubr.bf16.gmra.mrb[0].mxu0 %v1679
        %v1735 = vpop.f32.mrb[0].mxu0
        %v1736 = vadd.f32 %v1477, %v1735
        %v1737 = vpop.f32.mrb[0].mxu0
        %v1738 = vpop.f32.mrb[0].mxu0
        %v1739 = vadd.f32 %v1478, %v1738
        %v1740 = vpop.f32.mrb[0].mxu0
        %1741 = vdwg.mxu0
        %vm1742 = vcmask 523264
        %v1743 = vsel %vm1742, %v1728, -inf
        %1744 = vmax.xlane.f32.xlu0 %v1743
        %v1745 = vpop.xlane.xlu0 %1744
        %v1746 = vsel %vm1742, %v1731, -inf
        %1747 = vmax.xlane.f32.xlu0 %v1746
        %v1748 = vpop.xlane.xlu0 %1747
        %v1749 = vsel %vm1742, %v1736, -inf
        %1750 = vmax.xlane.f32.xlu0 %v1749
        %v1751 = vpop.xlane.xlu0 %1750
        %v1752 = vsel %vm1742, %v1739, -inf
        %1753 = vmax.xlane.f32.xlu0 %v1752
        %v1754 = vpop.xlane.xlu0 %1753
        %v1755 = vsub.f32 %v1728, %v1745
        %v1756 = vsub.f32 %v1731, %v1748
        %v1757 = vsub.f32 %v1736, %v1751
        %v1758 = vsub.f32 %v1739, %v1754
        %v1759 = vmul.f32 %v1755, 1.442695
        %v1760 = vpow.pop %v1759
        %v1761 = vmul.f32 %v1756, 1.442695
        %v1762 = vpow.pop %v1761
        %v1763 = vmul.f32 %v1757, 1.442695
        %v1764 = vpow.pop %v1763
        %v1765 = vmul.f32 %v1758, 1.442695
        %v1766 = vpow.pop %v1765
        %v1767 = vsel %vm1742, %v1760, 0.0
        %1768 = vadd.xlane.f32.xlu0 %v1767
        %v1769 = vpop.xlane.xlu0 %1768
        %v1770 = vsel %vm1742, %v1762, 0.0
        %1771 = vadd.xlane.f32.xlu0 %v1770
        %v1772 = vpop.xlane.xlu0 %1771
        %v1773 = vsel %vm1742, %v1764, 0.0
        %1774 = vadd.xlane.f32.xlu0 %v1773
        %v1775 = vpop.xlane.xlu0 %1774
        %v1776 = vsel %vm1742, %v1766, 0.0
        %1777 = vadd.xlane.f32.xlu0 %v1776
        %v1778 = vpop.xlane.xlu0 %1777
        %v1779 = vrcp.pop %v1769
        %v1780 = vrcp.pop %v1772
        %v1781 = vrcp.pop %v1775
        %v1782 = vrcp.pop %v1778
        %v1783 = vmul.f32 %v1760, %v1779
        %v1784 = vmul.f32 %v1762, %v1780
        %v1785 = vmul.f32 %v1764, %v1781
        %v1786 = vmul.f32 %v1766, %v1782
        %v1787 = vpack.c.bf16 %v1784, %v1783
        %v1788 = vpack.c.bf16 %v1786, %v1785
        %1793 = vrot.lane.b32.xlu0 %v1664, 96
        %v1794 = vpop.permute.xlu0 %1793
        %1795 = vrot.lane.b32.xlu0 %v1665, 96
        %v1796 = vpop.permute.xlu0 %1795
        %1797 = vrot.lane.b32.xlu0 %v1666, 96
        %v1798 = vpop.permute.xlu0 %1797
        %1799 = vrot.lane.b32.xlu0 %v1667, 96
        %v1800 = vpop.permute.xlu0 %1799
        %v1806 = vsel %vm1742, %v1787, 0
        %v1809 = vsel %vm1742, %v1788, 0
        %1811 = vmatprep.subr.bf16.mxu0 0
        %1812 = vmatpush1.bf16.msra.mxu0 %v1794
        %1813 = vmatprep.subr.bf16.mxu0 0
        %1814 = vmatpush1.bf16.msra.mxu0 %v1796
        %1815 = vmatprep.subr.bf16.mxu0 0
        %1816 = vmatpush1.bf16.msra.mxu0 %v1798
        %1817 = vmatprep.subr.bf16.mxu0 0
        %1818 = vmatpush1.bf16.msra.mxu0 %v1800
        %1819 = vmatprep.subr.bf16.mxu0 0
        %1820 = vmatpush1.bf16.msra.mxu0 0
        %1821 = vmatprep.subr.bf16.mxu0 0
        %1822 = vmatpush1.bf16.msra.mxu0 0
        %1823 = vmatprep.subr.bf16.mxu0 0
        %1824 = vmatpush1.bf16.msra.mxu0 0
        %1825 = vmatprep.subr.bf16.mxu0 0
        %1826 = vmatpush1.bf16.msra.mxu0 0
        %1827 = vmatprep.subr.bf16.mxu0 0
        %1828 = vmatpush1.bf16.msra.mxu0 0
        %1829 = vmatprep.subr.bf16.mxu0 0
        %1830 = vmatpush1.bf16.msra.mxu0 0
        %1831 = vmatprep.subr.bf16.mxu0 0
        %1832 = vmatpush1.bf16.msra.mxu0 0
        %1833 = vmatprep.subr.bf16.mxu0 0
        %1834 = vmatpush1.bf16.msra.mxu0 0
        %1835 = vmatprep.subr.bf16.mxu0 0
        %1836 = vmatpush1.bf16.msra.mxu0 0
        %1837 = vmatprep.subr.bf16.mxu0 0
        %1838 = vmatpush1.bf16.msra.mxu0 0
        %1839 = vmatprep.subr.bf16.mxu0 0
        %1840 = vmatpush1.bf16.msra.mxu0 0
        %1841 = vmatprep.subr.bf16.mxu0 0
        %1842 = vmatpush1.bf16.msra.mxu0 0
        %1843 = vmatprep.mubr.bf16.mxu0 0
        %1844 = vmatmul.mubr.bf16.gmra.mrb[0].mxu0 %v1806
        %v1845 = vpop.f32.mrb[0].mxu0
        %v1846 = vadd.f32 0.0, %v1845
        %v1847 = vpop.f32.mrb[0].mxu0
        %v1848 = vpop.f32.mrb[0].mxu0
        %v1849 = vadd.f32 0.0, %v1848
        %v1850 = vpop.f32.mrb[0].mxu0
        %1851 = vmatprep.mubr.bf16.mxu0 0
        %1852 = vmatmul.mubr.bf16.gmra.mrb[0].mxu0 %v1809
        %v1853 = vpop.f32.mrb[0].mxu0
        %v1854 = vadd.f32 0.0, %v1853
        %v1855 = vpop.f32.mrb[0].mxu0
        %v1856 = vpop.f32.mrb[0].mxu0
        %v1857 = vadd.f32 0.0, %v1856
        %v1858 = vpop.f32.mrb[0].mxu0
        %1859 = vdwg.mxu0
        %1862 = vrot.lane.b32.xlu0 %v1672, 120
        %v1863 = vpop.permute.xlu0 %1862
        %1864 = vrot.lane.b32.xlu0 %v1673, 120
        %v1865 = vpop.permute.xlu0 %1864
        %1866 = vrot.lane.b32.xlu0 %v1664, 120
        %v1867 = vpop.permute.xlu0 %1866
        %1868 = vrot.lane.b32.xlu0 %v1665, 120
        %v1869 = vpop.permute.xlu0 %1868
        %1870 = vrot.lane.b32.xlu0 %v1666, 120
        %v1871 = vpop.permute.xlu0 %1870
        %1872 = vrot.lane.b32.xlu0 %v1667, 120
        %v1873 = vpop.permute.xlu0 %1872
        %v1875 = vsel %vm1674, %v1863, 0
        %v1878 = vsel %vm1674, %v1865, 0
        %v1881 = vsel %vm1674, %v1867, 0
        %v1884 = vsel %vm1674, %v1869, 0
        %v1887 = vsel %vm1674, %v1871, 0
        %v1890 = vsel %vm1674, %v1873, 0
        %1892 = vmatprep.subr.bf16.mxu0 0
        %1893 = vmatpush1.bf16.xpose.msra.mxu0 %v1881
        %1894 = vmatprep.subr.bf16.mxu0 0
        %1895 = vmatpush1.bf16.xpose.msra.mxu0 %v1884
        %1896 = vmatprep.subr.bf16.mxu0 0
        %1897 = vmatpush1.bf16.xpose.msra.mxu0 %v1887
        %1898 = vmatprep.subr.bf16.mxu0 0
        %1899 = vmatpush1.bf16.xpose.msra.mxu0 %v1890
        %1900 = vmatprep.subr.bf16.mxu0 0
        %1901 = vmatpush1.bf16.xpose.msra.mxu0 0
        %1902 = vmatprep.subr.bf16.mxu0 0
        %1903 = vmatpush1.bf16.xpose.msra.mxu0 0
        %1904 = vmatprep.subr.bf16.mxu0 0
        %1905 = vmatpush1.bf16.xpose.msra.mxu0 0
        %1906 = vmatprep.subr.bf16.mxu0 0
        %1907 = vmatpush1.bf16.xpose.msra.mxu0 0
        %1908 = vmatprep.subr.bf16.mxu0 0
        %1909 = vmatpush1.bf16.xpose.msra.mxu0 0
        %1910 = vmatprep.subr.bf16.mxu0 0
        %1911 = vmatpush1.bf16.xpose.msra.mxu0 0
        %1912 = vmatprep.subr.bf16.mxu0 0
        %1913 = vmatpush1.bf16.xpose.msra.mxu0 0
        %1914 = vmatprep.subr.bf16.mxu0 0
        %1915 = vmatpush1.bf16.xpose.msra.mxu0 0
        %1916 = vmatprep.subr.bf16.mxu0 0
        %1917 = vmatpush1.bf16.xpose.msra.mxu0 0
        %1918 = vmatprep.subr.bf16.mxu0 0
        %1919 = vmatpush1.bf16.xpose.msra.mxu0 0
        %1920 = vmatprep.subr.bf16.mxu0 0
        %1921 = vmatpush1.bf16.xpose.msra.mxu0 0
        %1922 = vmatprep.subr.bf16.mxu0 0
        %1923 = vmatpush1.bf16.xpose.msra.mxu0 0
        %1924 = vmatprep.mubr.bf16.mxu0 0
        %1925 = vmatmul.mubr.bf16.gmra.mrb[0].mxu0 %v1875
        %v1926 = vpop.f32.mrb[0].mxu0
        %v1927 = vadd.f32 %v1475, %v1926
        %v1928 = vpop.f32.mrb[0].mxu0
        %v1929 = vpop.f32.mrb[0].mxu0
        %v1930 = vadd.f32 %v1476, %v1929
        %v1931 = vpop.f32.mrb[0].mxu0
        %1932 = vmatprep.mubr.bf16.mxu0 0
        %1933 = vmatmul.mubr.bf16.gmra.mrb[0].mxu0 %v1878
        %v1934 = vpop.f32.mrb[0].mxu0
        %v1935 = vadd.f32 %v1477, %v1934
        %v1936 = vpop.f32.mrb[0].mxu0
        %v1937 = vpop.f32.mrb[0].mxu0
        %v1938 = vadd.f32 %v1478, %v1937
        %v1939 = vpop.f32.mrb[0].mxu0
        %1940 = vdwg.mxu0
        %v1941 = vsel %vm1742, %v1927, -inf
        %1942 = vmax.xlane.f32.xlu0 %v1941
        %v1943 = vpop.xlane.xlu0 %1942
        %v1944 = vsel %vm1742, %v1930, -inf
        %1945 = vmax.xlane.f32.xlu0 %v1944
        %v1946 = vpop.xlane.xlu0 %1945
        %v1947 = vsel %vm1742, %v1935, -inf
        %1948 = vmax.xlane.f32.xlu0 %v1947
        %v1949 = vpop.xlane.xlu0 %1948
        %v1950 = vsel %vm1742, %v1938, -inf
        %1951 = vmax.xlane.f32.xlu0 %v1950
        %v1952 = vpop.xlane.xlu0 %1951
        %v1953 = vsub.f32 %v1927, %v1943
        %v1954 = vsub.f32 %v1930, %v1946
        %v1955 = vsub.f32 %v1935, %v1949
        %v1956 = vsub.f32 %v1938, %v1952
        %v1957 = vmul.f32 %v1953, 1.442695
        %v1958 = vpow.pop %v1957
        %v1959 = vmul.f32 %v1954, 1.442695
        %v1960 = vpow.pop %v1959
        %v1961 = vmul.f32 %v1955, 1.442695
        %v1962 = vpow.pop %v1961
        %v1963 = vmul.f32 %v1956, 1.442695
        %v1964 = vpow.pop %v1963
        %v1965 = vsel %vm1742, %v1958, 0.0
        %1966 = vadd.xlane.f32.xlu0 %v1965
        %v1967 = vpop.xlane.xlu0 %1966
        %v1968 = vsel %vm1742, %v1960, 0.0
        %1969 = vadd.xlane.f32.xlu0 %v1968
        %v1970 = vpop.xlane.xlu0 %1969
        %v1971 = vsel %vm1742, %v1962, 0.0
        %1972 = vadd.xlane.f32.xlu0 %v1971
        %v1973 = vpop.xlane.xlu0 %1972
        %v1974 = vsel %vm1742, %v1964, 0.0
        %1975 = vadd.xlane.f32.xlu0 %v1974
        %v1976 = vpop.xlane.xlu0 %1975
        %v1977 = vrcp.pop %v1967
        %v1978 = vrcp.pop %v1970
        %v1979 = vrcp.pop %v1973
        %v1980 = vrcp.pop %v1976
        %v1981 = vmul.f32 %v1958, %v1977
        %v1982 = vmul.f32 %v1960, %v1978
        %v1983 = vmul.f32 %v1962, %v1979
        %v1984 = vmul.f32 %v1964, %v1980
        %v1985 = vpack.c.bf16 %v1982, %v1981
        %v1986 = vpack.c.bf16 %v1984, %v1983
        %1987 = vrot.lane.b32.xlu0 %v1664, 88
        %v1988 = vpop.permute.xlu0 %1987
        %1989 = vrot.lane.b32.xlu0 %v1665, 88
        %v1990 = vpop.permute.xlu0 %1989
        %1991 = vrot.lane.b32.xlu0 %v1666, 88
        %v1992 = vpop.permute.xlu0 %1991
        %1993 = vrot.lane.b32.xlu0 %v1667, 88
        %v1994 = vpop.permute.xlu0 %1993
        %v2000 = vsel %vm1742, %v1985, 0
        %v2003 = vsel %vm1742, %v1986, 0
        %2005 = vmatprep.subr.bf16.mxu0 0
        %2006 = vmatpush1.bf16.msra.mxu0 %v1988
        %2007 = vmatprep.subr.bf16.mxu0 0
        %2008 = vmatpush1.bf16.msra.mxu0 %v1990
        %2009 = vmatprep.subr.bf16.mxu0 0
        %2010 = vmatpush1.bf16.msra.mxu0 %v1992
        %2011 = vmatprep.subr.bf16.mxu0 0
        %2012 = vmatpush1.bf16.msra.mxu0 %v1994
        %2013 = vmatprep.subr.bf16.mxu0 0
        %2014 = vmatpush1.bf16.msra.mxu0 0
        %2015 = vmatprep.subr.bf16.mxu0 0
        %2016 = vmatpush1.bf16.msra.mxu0 0
        %2017 = vmatprep.subr.bf16.mxu0 0
        %2018 = vmatpush1.bf16.msra.mxu0 0
        %2019 = vmatprep.subr.bf16.mxu0 0
        %2020 = vmatpush1.bf16.msra.mxu0 0
        %2021 = vmatprep.subr.bf16.mxu0 0
        %2022 = vmatpush1.bf16.msra.mxu0 0
        %2023 = vmatprep.subr.bf16.mxu0 0
        %2024 = vmatpush1.bf16.msra.mxu0 0
        %2025 = vmatprep.subr.bf16.mxu0 0
        %2026 = vmatpush1.bf16.msra.mxu0 0
        %2027 = vmatprep.subr.bf16.mxu0 0
        %2028 = vmatpush1.bf16.msra.mxu0 0
        %2029 = vmatprep.subr.bf16.mxu0 0
        %2030 = vmatpush1.bf16.msra.mxu0 0
        %2031 = vmatprep.subr.bf16.mxu0 0
        %2032 = vmatpush1.bf16.msra.mxu0 0
        %2033 = vmatprep.subr.bf16.mxu0 0
        %2034 = vmatpush1.bf16.msra.mxu0 0
        %2035 = vmatprep.subr.bf16.mxu0 0
        %2036 = vmatpush1.bf16.msra.mxu0 0
        %2037 = vmatprep.mubr.bf16.mxu0 0
        %2038 = vmatmul.mubr.bf16.gmra.mrb[0].mxu0 %v2000
        %v2039 = vpop.f32.mrb[0].mxu0
        %v2040 = vadd.f32 0.0, %v2039
        %v2041 = vpop.f32.mrb[0].mxu0
        %v2042 = vpop.f32.mrb[0].mxu0
        %v2043 = vadd.f32 0.0, %v2042
        %v2044 = vpop.f32.mrb[0].mxu0
        %2045 = vmatprep.mubr.bf16.mxu0 0
        %2046 = vmatmul.mubr.bf16.gmra.mrb[0].mxu0 %v2003
        %v2047 = vpop.f32.mrb[0].mxu0
        %v2048 = vadd.f32 0.0, %v2047
        %v2049 = vpop.f32.mrb[0].mxu0
        %v2050 = vpop.f32.mrb[0].mxu0
        %v2051 = vadd.f32 0.0, %v2050
        %v2052 = vpop.f32.mrb[0].mxu0
        %2053 = vdwg.mxu0
        %2054 = vrot.lane.b32.xlu0 %v1672, 112
        %v2055 = vpop.permute.xlu0 %2054
        %2056 = vrot.lane.b32.xlu0 %v1673, 112
        %v2057 = vpop.permute.xlu0 %2056
        %2058 = vrot.lane.b32.xlu0 %v1664, 112
        %v2059 = vpop.permute.xlu0 %2058
        %2060 = vrot.lane.b32.xlu0 %v1665, 112
        %v2061 = vpop.permute.xlu0 %2060
        %2062 = vrot.lane.b32.xlu0 %v1666, 112
        %v2063 = vpop.permute.xlu0 %2062
        %2064 = vrot.lane.b32.xlu0 %v1667, 112
        %v2065 = vpop.permute.xlu0 %2064
        %v2067 = vsel %vm1674, %v2055, 0
        %v2070 = vsel %vm1674, %v2057, 0
        %v2073 = vsel %vm1674, %v2059, 0
        %v2076 = vsel %vm1674, %v2061, 0
        %v2079 = vsel %vm1674, %v2063, 0
        %v2082 = vsel %vm1674, %v2065, 0
        %2084 = vmatprep.subr.bf16.mxu0 0
        %2085 = vmatpush1.bf16.xpose.msra.mxu0 %v2073
        %2086 = vmatprep.subr.bf16.mxu0 0
        %2087 = vmatpush1.bf16.xpose.msra.mxu0 %v2076
        %2088 = vmatprep.subr.bf16.mxu0 0
        %2089 = vmatpush1.bf16.xpose.msra.mxu0 %v2079
        %2090 = vmatprep.subr.bf16.mxu0 0
        %2091 = vmatpush1.bf16.xpose.msra.mxu0 %v2082
        %2092 = vmatprep.subr.bf16.mxu0 0
        %2093 = vmatpush1.bf16.xpose.msra.mxu0 0
        %2094 = vmatprep.subr.bf16.mxu0 0
        %2095 = vmatpush1.bf16.xpose.msra.mxu0 0
        %2096 = vmatprep.subr.bf16.mxu0 0
        %2097 = vmatpush1.bf16.xpose.msra.mxu0 0
        %2098 = vmatprep.subr.bf16.mxu0 0
        %2099 = vmatpush1.bf16.xpose.msra.mxu0 0
        %2100 = vmatprep.subr.bf16.mxu0 0
        %2101 = vmatpush1.bf16.xpose.msra.mxu0 0
        %2102 = vmatprep.subr.bf16.mxu0 0
        %2103 = vmatpush1.bf16.xpose.msra.mxu0 0
        %2104 = vmatprep.subr.bf16.mxu0 0
        %2105 = vmatpush1.bf16.xpose.msra.mxu0 0
        %2106 = vmatprep.subr.bf16.mxu0 0
        %2107 = vmatpush1.bf16.xpose.msra.mxu0 0
        %2108 = vmatprep.subr.bf16.mxu0 0
        %2109 = vmatpush1.bf16.xpose.msra.mxu0 0
        %2110 = vmatprep.subr.bf16.mxu0 0
        %2111 = vmatpush1.bf16.xpose.msra.mxu0 0
        %2112 = vmatprep.subr.bf16.mxu0 0
        %2113 = vmatpush1.bf16.xpose.msra.mxu0 0
        %2114 = vmatprep.subr.bf16.mxu0 0
        %2115 = vmatpush1.bf16.xpose.msra.mxu0 0
        %2116 = vmatprep.mubr.bf16.mxu0 0
        %2117 = vmatmul.mubr.bf16.gmra.mrb[0].mxu0 %v2067
        %v2118 = vpop.f32.mrb[0].mxu0
        %v2119 = vadd.f32 %v1475, %v2118
        %v2120 = vpop.f32.mrb[0].mxu0
        %v2121 = vpop.f32.mrb[0].mxu0
        %v2122 = vadd.f32 %v1476, %v2121
        %v2123 = vpop.f32.mrb[0].mxu0
        %2124 = vmatprep.mubr.bf16.mxu0 0
        %2125 = vmatmul.mubr.bf16.gmra.mrb[0].mxu0 %v2070
        %v2126 = vpop.f32.mrb[0].mxu0
        %v2127 = vadd.f32 %v1477, %v2126
        %v2128 = vpop.f32.mrb[0].mxu0
        %v2129 = vpop.f32.mrb[0].mxu0
        %v2130 = vadd.f32 %v1478, %v2129
        %v2131 = vpop.f32.mrb[0].mxu0
        %2132 = vdwg.mxu0
        %v2133 = vsel %vm1742, %v2119, -inf
        %2134 = vmax.xlane.f32.xlu0 %v2133
        %v2135 = vpop.xlane.xlu0 %2134
        %v2136 = vsel %vm1742, %v2122, -inf
        %2137 = vmax.xlane.f32.xlu0 %v2136
        %v2138 = vpop.xlane.xlu0 %2137
        %v2139 = vsel %vm1742, %v2127, -inf
        %2140 = vmax.xlane.f32.xlu0 %v2139
        %v2141 = vpop.xlane.xlu0 %2140
        %v2142 = vsel %vm1742, %v2130, -inf
        %2143 = vmax.xlane.f32.xlu0 %v2142
        %v2144 = vpop.xlane.xlu0 %2143
        %v2145 = vsub.f32 %v2119, %v2135
        %v2146 = vsub.f32 %v2122, %v2138
        %v2147 = vsub.f32 %v2127, %v2141
        %v2148 = vsub.f32 %v2130, %v2144
        %v2149 = vmul.f32 %v2145, 1.442695
        %v2150 = vpow.pop %v2149
        %v2151 = vmul.f32 %v2146, 1.442695
        %v2152 = vpow.pop %v2151
        %v2153 = vmul.f32 %v2147, 1.442695
        %v2154 = vpow.pop %v2153
        %v2155 = vmul.f32 %v2148, 1.442695
        %v2156 = vpow.pop %v2155
        %v2157 = vsel %vm1742, %v2150, 0.0
        %2158 = vadd.xlane.f32.xlu0 %v2157
        %v2159 = vpop.xlane.xlu0 %2158
        %v2160 = vsel %vm1742, %v2152, 0.0
        %2161 = vadd.xlane.f32.xlu0 %v2160
        %v2162 = vpop.xlane.xlu0 %2161
        %v2163 = vsel %vm1742, %v2154, 0.0
        %2164 = vadd.xlane.f32.xlu0 %v2163
        %v2165 = vpop.xlane.xlu0 %2164
        %v2166 = vsel %vm1742, %v2156, 0.0
        %2167 = vadd.xlane.f32.xlu0 %v2166
        %v2168 = vpop.xlane.xlu0 %2167
        %v2169 = vrcp.pop %v2159
        %v2170 = vrcp.pop %v2162
        %v2171 = vrcp.pop %v2165
        %v2172 = vrcp.pop %v2168
        %v2173 = vmul.f32 %v2150, %v2169
        %v2174 = vmul.f32 %v2152, %v2170
        %v2175 = vmul.f32 %v2154, %v2171
        %v2176 = vmul.f32 %v2156, %v2172
        %v2177 = vpack.c.bf16 %v2174, %v2173
        %v2178 = vpack.c.bf16 %v2176, %v2175
        %2179 = vrot.lane.b32.xlu0 %v1664, 80
        %v2180 = vpop.permute.xlu0 %2179
        %2181 = vrot.lane.b32.xlu0 %v1665, 80
        %v2182 = vpop.permute.xlu0 %2181
        %2183 = vrot.lane.b32.xlu0 %v1666, 80
        %v2184 = vpop.permute.xlu0 %2183
        %2185 = vrot.lane.b32.xlu0 %v1667, 80
        %v2186 = vpop.permute.xlu0 %2185
        %v2192 = vsel %vm1742, %v2177, 0
        %v2195 = vsel %vm1742, %v2178, 0
        %2197 = vmatprep.subr.bf16.mxu0 0
        %2198 = vmatpush1.bf16.msra.mxu0 %v2180
        %2199 = vmatprep.subr.bf16.mxu0 0
        %2200 = vmatpush1.bf16.msra.mxu0 %v2182
        %2201 = vmatprep.subr.bf16.mxu0 0
        %2202 = vmatpush1.bf16.msra.mxu0 %v2184
        %2203 = vmatprep.subr.bf16.mxu0 0
        %2204 = vmatpush1.bf16.msra.mxu0 %v2186
        %2205 = vmatprep.subr.bf16.mxu0 0
        %2206 = vmatpush1.bf16.msra.mxu0 0
        %2207 = vmatprep.subr.bf16.mxu0 0
        %2208 = vmatpush1.bf16.msra.mxu0 0
        %2209 = vmatprep.subr.bf16.mxu0 0
        %2210 = vmatpush1.bf16.msra.mxu0 0
        %2211 = vmatprep.subr.bf16.mxu0 0
        %2212 = vmatpush1.bf16.msra.mxu0 0
        %2213 = vmatprep.subr.bf16.mxu0 0
        %2214 = vmatpush1.bf16.msra.mxu0 0
        %2215 = vmatprep.subr.bf16.mxu0 0
        %2216 = vmatpush1.bf16.msra.mxu0 0
        %2217 = vmatprep.subr.bf16.mxu0 0
        %2218 = vmatpush1.bf16.msra.mxu0 0
        %2219 = vmatprep.subr.bf16.mxu0 0
        %2220 = vmatpush1.bf16.msra.mxu0 0
        %2221 = vmatprep.subr.bf16.mxu0 0
        %2222 = vmatpush1.bf16.msra.mxu0 0
        %2223 = vmatprep.subr.bf16.mxu0 0
        %2224 = vmatpush1.bf16.msra.mxu0 0
        %2225 = vmatprep.subr.bf16.mxu0 0
        %2226 = vmatpush1.bf16.msra.mxu0 0
        %2227 = vmatprep.subr.bf16.mxu0 0
        %2228 = vmatpush1.bf16.msra.mxu0 0
        %2229 = vmatprep.mubr.bf16.mxu0 0
        %2230 = vmatmul.mubr.bf16.gmra.mrb[0].mxu0 %v2192
        %v2231 = vpop.f32.mrb[0].mxu0
        %v2232 = vadd.f32 0.0, %v2231
        %v2233 = vpop.f32.mrb[0].mxu0
        %v2234 = vpop.f32.mrb[0].mxu0
        %v2235 = vadd.f32 0.0, %v2234
        %v2236 = vpop.f32.mrb[0].mxu0
        %2237 = vmatprep.mubr.bf16.mxu0 0
        %2238 = vmatmul.mubr.bf16.gmra.mrb[0].mxu0 %v2195
        %v2239 = vpop.f32.mrb[0].mxu0
        %v2240 = vadd.f32 0.0, %v2239
        %v2241 = vpop.f32.mrb[0].mxu0
        %v2242 = vpop.f32.mrb[0].mxu0
        %v2243 = vadd.f32 0.0, %v2242
        %v2244 = vpop.f32.mrb[0].mxu0
        %2245 = vdwg.mxu0
        %2246 = vrot.lane.b32.xlu0 %v1672, 104
        %v2247 = vpop.permute.xlu0 %2246
        %2248 = vrot.lane.b32.xlu0 %v1673, 104
        %v2249 = vpop.permute.xlu0 %2248
        %2250 = vrot.lane.b32.xlu0 %v1664, 104
        %v2251 = vpop.permute.xlu0 %2250
        %2252 = vrot.lane.b32.xlu0 %v1665, 104
        %v2253 = vpop.permute.xlu0 %2252
        %2254 = vrot.lane.b32.xlu0 %v1666, 104
        %v2255 = vpop.permute.xlu0 %2254
        %2256 = vrot.lane.b32.xlu0 %v1667, 104
        %v2257 = vpop.permute.xlu0 %2256
        %v2259 = vsel %vm1674, %v2247, 0
        %v2262 = vsel %vm1674, %v2249, 0
        %v2265 = vsel %vm1674, %v2251, 0
        %v2268 = vsel %vm1674, %v2253, 0
        %v2271 = vsel %vm1674, %v2255, 0
        %v2274 = vsel %vm1674, %v2257, 0
        %2276 = vmatprep.subr.bf16.mxu0 0
        %2277 = vmatpush1.bf16.xpose.msra.mxu0 %v2265
        %2278 = vmatprep.subr.bf16.mxu0 0
        %2279 = vmatpush1.bf16.xpose.msra.mxu0 %v2268
        %2280 = vmatprep.subr.bf16.mxu0 0
        %2281 = vmatpush1.bf16.xpose.msra.mxu0 %v2271
        %2282 = vmatprep.subr.bf16.mxu0 0
        %2283 = vmatpush1.bf16.xpose.msra.mxu0 %v2274
        %2284 = vmatprep.subr.bf16.mxu0 0
        %2285 = vmatpush1.bf16.xpose.msra.mxu0 0
        %2286 = vmatprep.subr.bf16.mxu0 0
        %2287 = vmatpush1.bf16.xpose.msra.mxu0 0
        %2288 = vmatprep.subr.bf16.mxu0 0
        %2289 = vmatpush1.bf16.xpose.msra.mxu0 0
        %2290 = vmatprep.subr.bf16.mxu0 0
        %2291 = vmatpush1.bf16.xpose.msra.mxu0 0
        %2292 = vmatprep.subr.bf16.mxu0 0
        %2293 = vmatpush1.bf16.xpose.msra.mxu0 0
        %2294 = vmatprep.subr.bf16.mxu0 0
        %2295 = vmatpush1.bf16.xpose.msra.mxu0 0
        %2296 = vmatprep.subr.bf16.mxu0 0
        %2297 = vmatpush1.bf16.xpose.msra.mxu0 0
        %2298 = vmatprep.subr.bf16.mxu0 0
        %2299 = vmatpush1.bf16.xpose.msra.mxu0 0
        %2300 = vmatprep.subr.bf16.mxu0 0
        %2301 = vmatpush1.bf16.xpose.msra.mxu0 0
        %2302 = vmatprep.subr.bf16.mxu0 0
        %2303 = vmatpush1.bf16.xpose.msra.mxu0 0
        %2304 = vmatprep.subr.bf16.mxu0 0
        %2305 = vmatpush1.bf16.xpose.msra.mxu0 0
        %2306 = vmatprep.subr.bf16.mxu0 0
        %2307 = vmatpush1.bf16.xpose.msra.mxu0 0
        %2308 = vmatprep.mubr.bf16.mxu0 0
        %2309 = vmatmul.mubr.bf16.gmra.mrb[0].mxu0 %v2259
        %v2310 = vpop.f32.mrb[0].mxu0
        %v2311 = vadd.f32 %v1475, %v2310
        %v2312 = vpop.f32.mrb[0].mxu0
        %v2313 = vpop.f32.mrb[0].mxu0
        %v2314 = vadd.f32 %v1476, %v2313
        %v2315 = vpop.f32.mrb[0].mxu0
        %2316 = vmatprep.mubr.bf16.mxu0 0
        %2317 = vmatmul.mubr.bf16.gmra.mrb[0].mxu0 %v2262
        %v2318 = vpop.f32.mrb[0].mxu0
        %v2319 = vadd.f32 %v1477, %v2318
        %v2320 = vpop.f32.mrb[0].mxu0
        %v2321 = vpop.f32.mrb[0].mxu0
        %v2322 = vadd.f32 %v1478, %v2321
        %v2323 = vpop.f32.mrb[0].mxu0
        %2324 = vdwg.mxu0
        %v2325 = vsel %vm1742, %v2311, -inf
        %2326 = vmax.xlane.f32.xlu0 %v2325
        %v2327 = vpop.xlane.xlu0 %2326
        %v2328 = vsel %vm1742, %v2314, -inf
        %2329 = vmax.xlane.f32.xlu0 %v2328
        %v2330 = vpop.xlane.xlu0 %2329
        %v2331 = vsel %vm1742, %v2319, -inf
        %2332 = vmax.xlane.f32.xlu0 %v2331
        %v2333 = vpop.xlane.xlu0 %2332
        %v2334 = vsel %vm1742, %v2322, -inf
        %2335 = vmax.xlane.f32.xlu0 %v2334
        %v2336 = vpop.xlane.xlu0 %2335
        %v2337 = vsub.f32 %v2311, %v2327
        %v2338 = vsub.f32 %v2314, %v2330
        %v2339 = vsub.f32 %v2319, %v2333
        %v2340 = vsub.f32 %v2322, %v2336
        %v2341 = vmul.f32 %v2337, 1.442695
        %v2342 = vpow.pop %v2341
        %v2343 = vmul.f32 %v2338, 1.442695
        %v2344 = vpow.pop %v2343
        %v2345 = vmul.f32 %v2339, 1.442695
        %v2346 = vpow.pop %v2345
        %v2347 = vmul.f32 %v2340, 1.442695
        %v2348 = vpow.pop %v2347
        %v2349 = vsel %vm1742, %v2342, 0.0
        %2350 = vadd.xlane.f32.xlu0 %v2349
        %v2351 = vpop.xlane.xlu0 %2350
        %v2352 = vsel %vm1742, %v2344, 0.0
        %2353 = vadd.xlane.f32.xlu0 %v2352
        %v2354 = vpop.xlane.xlu0 %2353
        %v2355 = vsel %vm1742, %v2346, 0.0
        %2356 = vadd.xlane.f32.xlu0 %v2355
        %v2357 = vpop.xlane.xlu0 %2356
        %v2358 = vsel %vm1742, %v2348, 0.0
        %2359 = vadd.xlane.f32.xlu0 %v2358
        %v2360 = vpop.xlane.xlu0 %2359
        %v2361 = vrcp.pop %v2351
        %v2362 = vrcp.pop %v2354
        %v2363 = vrcp.pop %v2357
        %v2364 = vrcp.pop %v2360
        %v2365 = vmul.f32 %v2342, %v2361
        %v2366 = vmul.f32 %v2344, %v2362
        %v2367 = vmul.f32 %v2346, %v2363
        %v2368 = vmul.f32 %v2348, %v2364
        %v2369 = vpack.c.bf16 %v2366, %v2365
        %v2370 = vpack.c.bf16 %v2368, %v2367
        %2371 = vrot.lane.b32.xlu0 %v1664, 72
        %v2372 = vpop.permute.xlu0 %2371
        %2373 = vrot.lane.b32.xlu0 %v1665, 72
        %v2374 = vpop.permute.xlu0 %2373
        %2375 = vrot.lane.b32.xlu0 %v1666, 72
        %v2376 = vpop.permute.xlu0 %2375
        %2377 = vrot.lane.b32.xlu0 %v1667, 72
        %v2378 = vpop.permute.xlu0 %2377
        %v2384 = vsel %vm1742, %v2369, 0
        %v2387 = vsel %vm1742, %v2370, 0
        %2389 = vmatprep.subr.bf16.mxu0 0
        %2390 = vmatpush1.bf16.msra.mxu0 %v2372
        %2391 = vmatprep.subr.bf16.mxu0 0
        %2392 = vmatpush1.bf16.msra.mxu0 %v2374
        %2393 = vmatprep.subr.bf16.mxu0 0
        %2394 = vmatpush1.bf16.msra.mxu0 %v2376
        %2395 = vmatprep.subr.bf16.mxu0 0
        %2396 = vmatpush1.bf16.msra.mxu0 %v2378
        %2397 = vmatprep.subr.bf16.mxu0 0
        %2398 = vmatpush1.bf16.msra.mxu0 0
        %2399 = vmatprep.subr.bf16.mxu0 0
        %2400 = vmatpush1.bf16.msra.mxu0 0
        %2401 = vmatprep.subr.bf16.mxu0 0
        %2402 = vmatpush1.bf16.msra.mxu0 0
        %2403 = vmatprep.subr.bf16.mxu0 0
        %2404 = vmatpush1.bf16.msra.mxu0 0
        %2405 = vmatprep.subr.bf16.mxu0 0
        %2406 = vmatpush1.bf16.msra.mxu0 0
        %2407 = vmatprep.subr.bf16.mxu0 0
        %2408 = vmatpush1.bf16.msra.mxu0 0
        %2409 = vmatprep.subr.bf16.mxu0 0
        %2410 = vmatpush1.bf16.msra.mxu0 0
        %2411 = vmatprep.subr.bf16.mxu0 0
        %2412 = vmatpush1.bf16.msra.mxu0 0
        %2413 = vmatprep.subr.bf16.mxu0 0
        %2414 = vmatpush1.bf16.msra.mxu0 0
        %2415 = vmatprep.subr.bf16.mxu0 0
        %2416 = vmatpush1.bf16.msra.mxu0 0
        %2417 = vmatprep.subr.bf16.mxu0 0
        %2418 = vmatpush1.bf16.msra.mxu0 0
        %2419 = vmatprep.subr.bf16.mxu0 0
        %2420 = vmatpush1.bf16.msra.mxu0 0
        %2421 = vmatprep.mubr.bf16.mxu0 0
        %2422 = vmatmul.mubr.bf16.gmra.mrb[0].mxu0 %v2384
        %v2423 = vpop.f32.mrb[0].mxu0
        %v2424 = vadd.f32 0.0, %v2423
        %v2425 = vpop.f32.mrb[0].mxu0
        %v2426 = vpop.f32.mrb[0].mxu0
        %v2427 = vadd.f32 0.0, %v2426
        %v2428 = vpop.f32.mrb[0].mxu0
        %2429 = vmatprep.mubr.bf16.mxu0 0
        %2430 = vmatmul.mubr.bf16.gmra.mrb[0].mxu0 %v2387
        %v2431 = vpop.f32.mrb[0].mxu0
        %v2432 = vadd.f32 0.0, %v2431
        %v2433 = vpop.f32.mrb[0].mxu0
        %v2434 = vpop.f32.mrb[0].mxu0
        %v2435 = vadd.f32 0.0, %v2434
        %v2436 = vpop.f32.mrb[0].mxu0
        %2437 = vdwg.mxu0
        %2442 = vrot.lane.b32.xlu0 %v2040, 8
        %v2443 = vpop.permute.xlu0 %2442
        %2444 = vrot.lane.b32.xlu0 %v2043, 8
        %v2445 = vpop.permute.xlu0 %2444
        %2446 = vrot.lane.b32.xlu0 %v2048, 8
        %v2447 = vpop.permute.xlu0 %2446
        %2448 = vrot.lane.b32.xlu0 %v2051, 8
        %v2449 = vpop.permute.xlu0 %2448
        %2458 = vrot.lane.b32.xlu0 %v2232, 16
        %v2459 = vpop.permute.xlu0 %2458
        %2460 = vrot.lane.b32.xlu0 %v2235, 16
        %v2461 = vpop.permute.xlu0 %2460
        %2462 = vrot.lane.b32.xlu0 %v2240, 16
        %v2463 = vpop.permute.xlu0 %2462
        %2464 = vrot.lane.b32.xlu0 %v2243, 16
        %v2465 = vpop.permute.xlu0 %2464
        %2474 = vrot.lane.b32.xlu0 %v2424, 24
        %v2475 = vpop.permute.xlu0 %2474
        %2476 = vrot.lane.b32.xlu0 %v2427, 24
        %v2477 = vpop.permute.xlu0 %2476
        %2478 = vrot.lane.b32.xlu0 %v2432, 24
        %v2479 = vpop.permute.xlu0 %2478
        %2480 = vrot.lane.b32.xlu0 %v2435, 24
        %v2481 = vpop.permute.xlu0 %2480
        %v2486 = vsel %vm1674, %v1846, %v2443
        %v2487 = vsel %vm1674, %v1849, %v2445
        %v2488 = vsel %vm1674, %v1854, %v2447
        %v2489 = vsel %vm1674, %v1857, %v2449
        %vm2490 = vcmask 130048
        %v2491 = vsel %vm2490, %v2486, %v2459
        %v2492 = vsel %vm2490, %v2487, %v2461
        %v2493 = vsel %vm2490, %v2488, %v2463
        %v2494 = vsel %vm2490, %v2489, %v2465
        %vm2495 = vcmask 195584
        %v2496 = vsel %vm2495, %v2491, %v2475
        %v2497 = vsel %vm2495, %v2492, %v2477
        %v2498 = vsel %vm2495, %v2493, %v2479
        %v2499 = vsel %vm2495, %v2494, %v2481
        %v2500 = vpack.c.bf16 %v2497, %v2496
        %v2501 = vpack.c.bf16 %v2499, %v2498
        %v2502 = vld [vmem:[#allocation21] sm:$0xf]
        %v2503 = vld [vmem:[#allocation21 + $0x4] sm:$0xf]
        %v2504 = vld [vmem:[#allocation21 + $0x8] sm:$0xf]
        %v2505 = vld [vmem:[#allocation21 + $0xc] sm:$0xf]
        %v2506 = vld [vmem:[#allocation22] sm:$0x1]
        %v2508 = vlaneseq
        %v2509 = vshrl.u32 %v2508, 7
        %v2510 = vsub.s32 0, %v2509
        %v2511 = vrot.slane %v2506, %v2510
        %v2517 = vunpack.c.l.b16 %v2502
        %v2518 = vunpack.c.l.b16 %v2503
        %v2519 = vunpack.c.l.b16 %v2504
        %v2520 = vunpack.c.l.b16 %v2505
        %v2521 = vpack.c.b16 %v2518, %v2517
        %v2522 = vpack.c.b16 %v2520, %v2519
        %v2526 = vsel %vm1486, %v2500, 0
        %v2529 = vsel %vm1486, %v2501, 0
        %2531 = vmatprep.subr.bf16.mxu0 0
        %2532 = vmatpush1.bf16.msra.mxu0 %v2521
        %2533 = vmatprep.subr.bf16.mxu0 0
        %2534 = vmatpush1.bf16.msra.mxu0 %v2522
        %2535 = vmatprep.subr.bf16.mxu0 0
        %2536 = vmatpush1.bf16.msra.mxu0 0
        %2537 = vmatprep.subr.bf16.mxu0 0
        %2538 = vmatpush1.bf16.msra.mxu0 0
        %2539 = vmatprep.subr.bf16.mxu0 0
        %2540 = vmatpush1.bf16.msra.mxu0 0
        %2541 = vmatprep.subr.bf16.mxu0 0
        %2542 = vmatpush1.bf16.msra.mxu0 0
        %2543 = vmatprep.subr.bf16.mxu0 0
        %2544 = vmatpush1.bf16.msra.mxu0 0
        %2545 = vmatprep.subr.bf16.mxu0 0
        %2546 = vmatpush1.bf16.msra.mxu0 0
        %2547 = vmatprep.subr.bf16.mxu0 0
        %2548 = vmatpush1.bf16.msra.mxu0 0
        %2549 = vmatprep.subr.bf16.mxu0 0
        %2550 = vmatpush1.bf16.msra.mxu0 0
        %2551 = vmatprep.subr.bf16.mxu0 0
        %2552 = vmatpush1.bf16.msra.mxu0 0
        %2553 = vmatprep.subr.bf16.mxu0 0
        %2554 = vmatpush1.bf16.msra.mxu0 0
        %2555 = vmatprep.subr.bf16.mxu0 0
        %2556 = vmatpush1.bf16.msra.mxu0 0
        %2557 = vmatprep.subr.bf16.mxu0 0
        %2558 = vmatpush1.bf16.msra.mxu0 0
        %2559 = vmatprep.subr.bf16.mxu0 0
        %2560 = vmatpush1.bf16.msra.mxu0 0
        %2561 = vmatprep.subr.bf16.mxu0 0
        %2562 = vmatpush1.bf16.msra.mxu0 0
        %2563 = vmatprep.mubr.bf16.mxu0 0
        %2564 = vmatmul.mubr.bf16.gmra.mrb[0].mxu0 %v2526
        %v2565 = vpop.f32.mrb[0].mxu0
        %v2566 = vadd.f32 %v2511, %v2565
        %v2567 = vpop.f32.mrb[0].mxu0
        %v2568 = vpop.f32.mrb[0].mxu0
        %v2569 = vadd.f32 %v2511, %v2568
        %v2570 = vpop.f32.mrb[0].mxu0
        %2571 = vmatprep.mubr.bf16.mxu0 0
        %2572 = vmatmul.mubr.bf16.gmra.mrb[0].mxu0 %v2529
        %v2573 = vpop.f32.mrb[0].mxu0
        %v2574 = vadd.f32 %v2511, %v2573
        %v2575 = vpop.f32.mrb[0].mxu0
        %v2576 = vpop.f32.mrb[0].mxu0
        %v2577 = vadd.f32 %v2511, %v2576
        %v2578 = vpop.f32.mrb[0].mxu0
        %2579 = vdwg.mxu0
        %v2580 = vadd.f32 %v1458, %v2566
        %v2581 = vadd.f32 %v1459, %v2569
        %v2582 = vadd.f32 %v1460, %v2574
        %v2583 = vadd.f32 %v1461, %v2577
        %v2584 = vld [vmem:[#allocation12 + $0x1] sm:$0x1]
        %v2585 = vld [vmem:[#allocation13 + $0x1] sm:$0x1]
        %v2586 = vsel %vm1486, %v2580, 0.0
        %2587 = vadd.xlane.f32.xlu0 %v2586
        %v2588 = vpop.xlane.xlu0 %2587
        %v2589 = vsel %vm1486, %v2581, 0.0
        %2590 = vadd.xlane.f32.xlu0 %v2589
        %v2591 = vpop.xlane.xlu0 %2590
        %v2592 = vsel %vm1486, %v2582, 0.0
        %2593 = vadd.xlane.f32.xlu0 %v2592
        %v2594 = vpop.xlane.xlu0 %2593
        %v2595 = vsel %vm1486, %v2583, 0.0
        %2596 = vadd.xlane.f32.xlu0 %v2595
        %v2597 = vpop.xlane.xlu0 %2596
        %v2598 = vmul.f32 %v2588, %v1499
        %v2599 = vmul.f32 %v2591, %v1499
        %v2600 = vmul.f32 %v2594, %v1499
        %v2601 = vmul.f32 %v2597, %v1499
        %v2602 = vsub.f32 %v2580, %v2598
        %v2603 = vsub.f32 %v2581, %v2599
        %v2604 = vsub.f32 %v2582, %v2600
        %v2605 = vsub.f32 %v2583, %v2601
        %v2606 = vmul.f32 %v2602, %v2602
        %v2607 = vmul.f32 %v2603, %v2603
        %v2608 = vmul.f32 %v2604, %v2604
        %v2609 = vmul.f32 %v2605, %v2605
        %v2610 = vsel %vm1486, %v2606, 0.0
        %2611 = vadd.xlane.f32.xlu0 %v2610
        %v2612 = vpop.xlane.xlu0 %2611
        %v2613 = vsel %vm1486, %v2607, 0.0
        %2614 = vadd.xlane.f32.xlu0 %v2613
        %v2615 = vpop.xlane.xlu0 %2614
        %v2616 = vsel %vm1486, %v2608, 0.0
        %2617 = vadd.xlane.f32.xlu0 %v2616
        %v2618 = vpop.xlane.xlu0 %2617
        %v2619 = vsel %vm1486, %v2609, 0.0
        %2620 = vadd.xlane.f32.xlu0 %v2619
        %v2621 = vpop.xlane.xlu0 %2620
        %v2622 = vmul.f32 %v2612, 0.032258064
        %v2623 = vmul.f32 %v2615, 0.032258064
        %v2624 = vmul.f32 %v2618, 0.032258064
        %v2625 = vmul.f32 %v2621, 0.032258064
        %v2626 = vrsqrt.pop %v2622
        %v2627 = vmul.f32 %v2622, %v2626
        %vm2628 = vcmp.eq.f32.partialorder %v2622, inf
        %v2629 = vsel %vm2628, %v2622, %v2627
        %vm2630 = vcmp.eq.f32.partialorder %v2622, 0.0
        %v2631 = vand.u32 %v2622, 2147483648
        %v2632 = vsel %vm2630, %v2631, %v2629
        %v2633 = vrsqrt.pop %v2623
        %v2634 = vmul.f32 %v2623, %v2633
        %vm2635 = vcmp.eq.f32.partialorder %v2623, inf
        %v2636 = vsel %vm2635, %v2623, %v2634
        %vm2637 = vcmp.eq.f32.partialorder %v2623, 0.0
        %v2638 = vand.u32 %v2623, 2147483648
        %v2639 = vsel %vm2637, %v2638, %v2636
        %v2640 = vrsqrt.pop %v2624
        %v2641 = vmul.f32 %v2624, %v2640
        %vm2642 = vcmp.eq.f32.partialorder %v2624, inf
        %v2643 = vsel %vm2642, %v2624, %v2641
        %vm2644 = vcmp.eq.f32.partialorder %v2624, 0.0
        %v2645 = vand.u32 %v2624, 2147483648
        %v2646 = vsel %vm2644, %v2645, %v2643
        %v2647 = vrsqrt.pop %v2625
        %v2648 = vmul.f32 %v2625, %v2647
        %vm2649 = vcmp.eq.f32.partialorder %v2625, inf
        %v2650 = vsel %vm2649, %v2625, %v2648
        %vm2651 = vcmp.eq.f32.partialorder %v2625, 0.0
        %v2652 = vand.u32 %v2625, 2147483648
        %v2653 = vsel %vm2651, %v2652, %v2650
        %v2654 = vadd.f32 %v2632, 1e-06
        %v2655 = vadd.f32 %v2639, 1e-06
        %v2656 = vadd.f32 %v2646, 1e-06
        %v2657 = vadd.f32 %v2653, 1e-06
        %v2658 = vrcp.pop %v2654
        %v2659 = vrcp.pop %v2655
        %v2660 = vrcp.pop %v2656
        %v2661 = vrcp.pop %v2657
        %v2662 = vmul.f32 %v2602, %v2658
        %v2663 = vmul.f32 %v2603, %v2659
        %v2664 = vmul.f32 %v2604, %v2660
        %v2665 = vmul.f32 %v2605, %v2661
        %v2666 = vlaneseq
        %v2667 = vshrl.u32 %v2666, 7
        %v2668 = vsub.s32 0, %v2667
        %v2669 = vrot.slane %v2584, %v2668
        %v2670 = vmul.f32 %v2669, %v2662
        %v2671 = vmul.f32 %v2669, %v2663
        %v2672 = vmul.f32 %v2669, %v2664
        %v2673 = vmul.f32 %v2669, %v2665
        %v2674 = vlaneseq
        %v2675 = vshrl.u32 %v2674, 7
        %v2676 = vsub.s32 0, %v2675
        %v2677 = vrot.slane %v2585, %v2676
        %v2678 = vadd.f32 %v2670, %v2677
        %v2679 = vadd.f32 %v2671, %v2677
        %v2680 = vadd.f32 %v2672, %v2677
        %v2681 = vadd.f32 %v2673, %v2677
        %v2682 = vpack.c.bf16 %v2679, %v2678
        %v2683 = vpack.c.bf16 %v2681, %v2680
        %v2684 = vld [vmem:[#allocation24] sm:$0xf]
        %v2685 = vld [vmem:[#allocation24 + $0x4] sm:$0xf]
        %v2686 = vld [vmem:[#allocation24 + $0x8] sm:$0xf]
        %v2687 = vld [vmem:[#allocation24 + $0xc] sm:$0xf]
        %v2688 = vld [vmem:[#allocation25] sm:$0x1]
        %v2690 = vlaneseq
        %v2691 = vshrl.u32 %v2690, 7
        %v2692 = vsub.s32 0, %v2691
        %v2693 = vrot.slane %v2688, %v2692
        %v2699 = vunpack.c.l.b16 %v2684
        %v2700 = vunpack.c.l.b16 %v2685
        %v2701 = vunpack.c.l.b16 %v2686
        %v2702 = vunpack.c.l.b16 %v2687
        %v2703 = vpack.c.b16 %v2700, %v2699
        %v2704 = vpack.c.b16 %v2702, %v2701
        %v2708 = vsel %vm1486, %v2682, 0
        %v2711 = vsel %vm1486, %v2683, 0
        %2713 = vmatprep.subr.bf16.mxu0 0
        %2714 = vmatpush1.bf16.msra.mxu0 %v2703
        %2715 = vmatprep.subr.bf16.mxu0 0
        %2716 = vmatpush1.bf16.msra.mxu0 %v2704
        %2717 = vmatprep.subr.bf16.mxu0 0
        %2718 = vmatpush1.bf16.msra.mxu0 0
        %2719 = vmatprep.subr.bf16.mxu0 0
        %2720 = vmatpush1.bf16.msra.mxu0 0
        %2721 = vmatprep.subr.bf16.mxu0 0
        %2722 = vmatpush1.bf16.msra.mxu0 0
        %2723 = vmatprep.subr.bf16.mxu0 0
        %2724 = vmatpush1.bf16.msra.mxu0 0
        %2725 = vmatprep.subr.bf16.mxu0 0
        %2726 = vmatpush1.bf16.msra.mxu0 0
        %2727 = vmatprep.subr.bf16.mxu0 0
        %2728 = vmatpush1.bf16.msra.mxu0 0
        %2729 = vmatprep.subr.bf16.mxu0 0
        %2730 = vmatpush1.bf16.msra.mxu0 0
        %2731 = vmatprep.subr.bf16.mxu0 0
        %2732 = vmatpush1.bf16.msra.mxu0 0
        %2733 = vmatprep.subr.bf16.mxu0 0
        %2734 = vmatpush1.bf16.msra.mxu0 0
        %2735 = vmatprep.subr.bf16.mxu0 0
        %2736 = vmatpush1.bf16.msra.mxu0 0
        %2737 = vmatprep.subr.bf16.mxu0 0
        %2738 = vmatpush1.bf16.msra.mxu0 0
        %2739 = vmatprep.subr.bf16.mxu0 0
        %2740 = vmatpush1.bf16.msra.mxu0 0
        %2741 = vmatprep.subr.bf16.mxu0 0
        %2742 = vmatpush1.bf16.msra.mxu0 0
        %2743 = vmatprep.subr.bf16.mxu0 0
        %2744 = vmatpush1.bf16.msra.mxu0 0
        %2745 = vmatprep.mubr.bf16.mxu0 0
        %2746 = vmatmul.mubr.bf16.gmra.mrb[0].mxu0 %v2708
        %v2747 = vpop.f32.mrb[0].mxu0
        %v2748 = vadd.f32 %v2693, %v2747
        %v2749 = vpop.f32.mrb[0].mxu0
        %v2750 = vpop.f32.mrb[0].mxu0
        %v2751 = vadd.f32 %v2693, %v2750
        %v2752 = vpop.f32.mrb[0].mxu0
        %2753 = vmatprep.mubr.bf16.mxu0 0
        %2754 = vmatmul.mubr.bf16.gmra.mrb[0].mxu0 %v2711
        %v2755 = vpop.f32.mrb[0].mxu0
        %v2756 = vadd.f32 %v2693, %v2755
        %v2757 = vpop.f32.mrb[0].mxu0
        %v2758 = vpop.f32.mrb[0].mxu0
        %v2759 = vadd.f32 %v2693, %v2758
        %v2760 = vpop.f32.mrb[0].mxu0
        %2761 = vdwg.mxu0
        %v2762 = vld [vmem:[#allocation3] sm:$0xff]
        %v2763 = vmul.f32 %v2748, 0.35355338
        %v2764 = vmul.f32 %v2751, 0.35355338
        %v2765 = vmul.f32 %v2756, 0.35355338
        %v2766 = vmul.f32 %v2759, 0.35355338
        %v2767 = vpack.c.bf16 %v2764, %v2763
        %v2768 = vpack.c.bf16 %v2766, %v2765
        %v2769 = vlaneseq
        %v2770 = vshrl.u32 %v2769, 7
        %v2771 = vsub.s32 0, %v2770
        %v2772 = vrot.slane %v1483, %v2771
        %v2774 = vsel %vm1674, %v2767, 0
        %v2777 = vsel %vm1674, %v2768, 0
        %v2780 = vsel %vm1674, %v2762, 0
        %2782 = vmatprep.subr.bf16.mxu0 0
        %2783 = vmatpush1.bf16.xpose.msra.mxu0 %v2780
        %2784 = vmatprep.subr.bf16.mxu0 0
        %2785 = vmatpush1.bf16.xpose.msra.mxu0 0
        %2786 = vmatprep.subr.bf16.mxu0 0
        %2787 = vmatpush1.bf16.xpose.msra.mxu0 0
        %2788 = vmatprep.subr.bf16.mxu0 0
        %2789 = vmatpush1.bf16.xpose.msra.mxu0 0
        %2790 = vmatprep.subr.bf16.mxu0 0
        %2791 = vmatpush1.bf16.xpose.msra.mxu0 0
        %2792 = vmatprep.subr.bf16.mxu0 0
        %2793 = vmatpush1.bf16.xpose.msra.mxu0 0
        %2794 = vmatprep.subr.bf16.mxu0 0
        %2795 = vmatpush1.bf16.xpose.msra.mxu0 0
        %2796 = vmatprep.subr.bf16.mxu0 0
        %2797 = vmatpush1.bf16.xpose.msra.mxu0 0
        %2798 = vmatprep.subr.bf16.mxu0 0
        %2799 = vmatpush1.bf16.xpose.msra.mxu0 0
        %2800 = vmatprep.subr.bf16.mxu0 0
        %2801 = vmatpush1.bf16.xpose.msra.mxu0 0
        %2802 = vmatprep.subr.bf16.mxu0 0
        %2803 = vmatpush1.bf16.xpose.msra.mxu0 0
        %2804 = vmatprep.subr.bf16.mxu0 0
        %2805 = vmatpush1.bf16.xpose.msra.mxu0 0
        %2806 = vmatprep.subr.bf16.mxu0 0
        %2807 = vmatpush1.bf16.xpose.msra.mxu0 0
        %2808 = vmatprep.subr.bf16.mxu0 0
        %2809 = vmatpush1.bf16.xpose.msra.mxu0 0
        %2810 = vmatprep.subr.bf16.mxu0 0
        %2811 = vmatpush1.bf16.xpose.msra.mxu0 0
        %2812 = vmatprep.subr.bf16.mxu0 0
        %2813 = vmatpush1.bf16.xpose.msra.mxu0 0
        %2814 = vmatprep.mubr.bf16.mxu0 0
        %2815 = vmatmul.mubr.bf16.gmra.mrb[0].mxu0 %v2774
        %v2816 = vpop.f32.mrb[0].mxu0
        %v2817 = vadd.f32 %v2772, %v2816
        %v2818 = vpop.f32.mrb[0].mxu0
        %v2819 = vpop.f32.mrb[0].mxu0
        %v2820 = vadd.f32 %v2772, %v2819
        %v2821 = vpop.f32.mrb[0].mxu0
        %2822 = vmatprep.mubr.bf16.mxu0 0
        %2823 = vmatmul.mubr.bf16.gmra.mrb[0].mxu0 %v2777
        %v2824 = vpop.f32.mrb[0].mxu0
        %v2825 = vadd.f32 %v2772, %v2824
        %v2826 = vpop.f32.mrb[0].mxu0
        %v2827 = vpop.f32.mrb[0].mxu0
        %v2828 = vadd.f32 %v2772, %v2827
        %v2829 = vpop.f32.mrb[0].mxu0
        %2830 = vdwg.mxu0
        %v2831 = vsel %vm2490, %v2817, -inf
        %2832 = vmax.xlane.f32.xlu0 %v2831
        %v2833 = vpop.xlane.xlu0 %2832
        %v2834 = vsel %vm2490, %v2820, -inf
        %2835 = vmax.xlane.f32.xlu0 %v2834
        %v2836 = vpop.xlane.xlu0 %2835
        %v2837 = vsel %vm2490, %v2825, -inf
        %2838 = vmax.xlane.f32.xlu0 %v2837
        %v2839 = vpop.xlane.xlu0 %2838
        %v2840 = vsel %vm2490, %v2828, -inf
        %2841 = vmax.xlane.f32.xlu0 %v2840
        %v2842 = vpop.xlane.xlu0 %2841
        %v2843 = vsub.f32 %v2817, %v2833
        %v2844 = vsub.f32 %v2820, %v2836
        %v2845 = vsub.f32 %v2825, %v2839
        %v2846 = vsub.f32 %v2828, %v2842
        %v2847 = vmul.f32 %v2843, 1.442695
        %v2848 = vpow.pop %v2847
        %v2849 = vmul.f32 %v2844, 1.442695
        %v2850 = vpow.pop %v2849
        %v2851 = vmul.f32 %v2845, 1.442695
        %v2852 = vpow.pop %v2851
        %v2853 = vmul.f32 %v2846, 1.442695
        %v2854 = vpow.pop %v2853
        %v2855 = vsel %vm2490, %v2848, 0.0
        %2856 = vadd.xlane.f32.xlu0 %v2855
        %v2857 = vpop.xlane.xlu0 %2856
        %v2858 = vsel %vm2490, %v2850, 0.0
        %2859 = vadd.xlane.f32.xlu0 %v2858
        %v2860 = vpop.xlane.xlu0 %2859
        %v2861 = vsel %vm2490, %v2852, 0.0
        %2862 = vadd.xlane.f32.xlu0 %v2861
        %v2863 = vpop.xlane.xlu0 %2862
        %v2864 = vsel %vm2490, %v2854, 0.0
        %2865 = vadd.xlane.f32.xlu0 %v2864
        %v2866 = vpop.xlane.xlu0 %2865
        %v2867 = vrcp.pop %v2857
        %v2868 = vrcp.pop %v2860
        %v2869 = vrcp.pop %v2863
        %v2870 = vrcp.pop %v2866
        %v2871 = vmul.f32 %v2848, %v2867
        %v2872 = vmul.f32 %v2850, %v2868
        %v2873 = vmul.f32 %v2852, %v2869
        %v2874 = vmul.f32 %v2854, %v2870
        %v2875 = vpack.c.bf16 %v2872, %v2871
        %v2876 = vpack.c.bf16 %v2874, %v2873
        %2878 = vrot.lane.b32.xlu0 %v2762, 96
        %v2879 = vpop.permute.xlu0 %2878
        %v2882 = vsel %vm2490, %v2875, 0
        %v2885 = vsel %vm2490, %v2876, 0
        %2887 = vmatprep.subr.bf16.mxu0 0
        %2888 = vmatpush1.bf16.msra.mxu0 %v2879
        %2889 = vmatprep.subr.bf16.mxu0 0
        %2890 = vmatpush1.bf16.msra.mxu0 0
        %2891 = vmatprep.subr.bf16.mxu0 0
        %2892 = vmatpush1.bf16.msra.mxu0 0
        %2893 = vmatprep.subr.bf16.mxu0 0
        %2894 = vmatpush1.bf16.msra.mxu0 0
        %2895 = vmatprep.subr.bf16.mxu0 0
        %2896 = vmatpush1.bf16.msra.mxu0 0
        %2897 = vmatprep.subr.bf16.mxu0 0
        %2898 = vmatpush1.bf16.msra.mxu0 0
        %2899 = vmatprep.subr.bf16.mxu0 0
        %2900 = vmatpush1.bf16.msra.mxu0 0
        %2901 = vmatprep.subr.bf16.mxu0 0
        %2902 = vmatpush1.bf16.msra.mxu0 0
        %2903 = vmatprep.subr.bf16.mxu0 0
        %2904 = vmatpush1.bf16.msra.mxu0 0
        %2905 = vmatprep.subr.bf16.mxu0 0
        %2906 = vmatpush1.bf16.msra.mxu0 0
        %2907 = vmatprep.subr.bf16.mxu0 0
        %2908 = vmatpush1.bf16.msra.mxu0 0
        %2909 = vmatprep.subr.bf16.mxu0 0
        %2910 = vmatpush1.bf16.msra.mxu0 0
        %2911 = vmatprep.subr.bf16.mxu0 0
        %2912 = vmatpush1.bf16.msra.mxu0 0
        %2913 = vmatprep.subr.bf16.mxu0 0
        %2914 = vmatpush1.bf16.msra.mxu0 0
        %2915 = vmatprep.subr.bf16.mxu0 0
        %2916 = vmatpush1.bf16.msra.mxu0 0
        %2917 = vmatprep.subr.bf16.mxu0 0
        %2918 = vmatpush1.bf16.msra.mxu0 0
        %2919 = vmatprep.mubr.bf16.mxu0 0
        %2920 = vmatmul.mubr.bf16.gmra.mrb[0].mxu0 %v2882
        %v2921 = vpop.f32.mrb[0].mxu0
        %v2922 = vadd.f32 0.0, %v2921
        %v2923 = vpop.f32.mrb[0].mxu0
        %v2924 = vpop.f32.mrb[0].mxu0
        %v2925 = vadd.f32 0.0, %v2924
        %v2926 = vpop.f32.mrb[0].mxu0
        %2927 = vmatprep.mubr.bf16.mxu0 0
        %2928 = vmatmul.mubr.bf16.gmra.mrb[0].mxu0 %v2885
        %v2929 = vpop.f32.mrb[0].mxu0
        %v2930 = vadd.f32 0.0, %v2929
        %v2931 = vpop.f32.mrb[0].mxu0
        %v2932 = vpop.f32.mrb[0].mxu0
        %v2933 = vadd.f32 0.0, %v2932
        %v2934 = vpop.f32.mrb[0].mxu0
        %2935 = vdwg.mxu0
        %2938 = vrot.lane.b32.xlu0 %v2767, 120
        %v2939 = vpop.permute.xlu0 %2938
        %2940 = vrot.lane.b32.xlu0 %v2768, 120
        %v2941 = vpop.permute.xlu0 %2940
        %2942 = vrot.lane.b32.xlu0 %v2762, 120
        %v2943 = vpop.permute.xlu0 %2942
        %v2945 = vsel %vm1674, %v2939, 0
        %v2948 = vsel %vm1674, %v2941, 0
        %v2951 = vsel %vm1674, %v2943, 0
        %2953 = vmatprep.subr.bf16.mxu0 0
        %2954 = vmatpush1.bf16.xpose.msra.mxu0 %v2951
        %2955 = vmatprep.subr.bf16.mxu0 0
        %2956 = vmatpush1.bf16.xpose.msra.mxu0 0
        %2957 = vmatprep.subr.bf16.mxu0 0
        %2958 = vmatpush1.bf16.xpose.msra.mxu0 0
        %2959 = vmatprep.subr.bf16.mxu0 0
        %2960 = vmatpush1.bf16.xpose.msra.mxu0 0
        %2961 = vmatprep.subr.bf16.mxu0 0
        %2962 = vmatpush1.bf16.xpose.msra.mxu0 0
        %2963 = vmatprep.subr.bf16.mxu0 0
        %2964 = vmatpush1.bf16.xpose.msra.mxu0 0
        %2965 = vmatprep.subr.bf16.mxu0 0
        %2966 = vmatpush1.bf16.xpose.msra.mxu0 0
        %2967 = vmatprep.subr.bf16.mxu0 0
        %2968 = vmatpush1.bf16.xpose.msra.mxu0 0
        %2969 = vmatprep.subr.bf16.mxu0 0
        %2970 = vmatpush1.bf16.xpose.msra.mxu0 0
        %2971 = vmatprep.subr.bf16.mxu0 0
        %2972 = vmatpush1.bf16.xpose.msra.mxu0 0
        %2973 = vmatprep.subr.bf16.mxu0 0
        %2974 = vmatpush1.bf16.xpose.msra.mxu0 0
        %2975 = vmatprep.subr.bf16.mxu0 0
        %2976 = vmatpush1.bf16.xpose.msra.mxu0 0
        %2977 = vmatprep.subr.bf16.mxu0 0
        %2978 = vmatpush1.bf16.xpose.msra.mxu0 0
        %2979 = vmatprep.subr.bf16.mxu0 0
        %2980 = vmatpush1.bf16.xpose.msra.mxu0 0
        %2981 = vmatprep.subr.bf16.mxu0 0
        %2982 = vmatpush1.bf16.xpose.msra.mxu0 0
        %2983 = vmatprep.subr.bf16.mxu0 0
        %2984 = vmatpush1.bf16.xpose.msra.mxu0 0
        %2985 = vmatprep.mubr.bf16.mxu0 0
        %2986 = vmatmul.mubr.bf16.gmra.mrb[0].mxu0 %v2945
        %v2987 = vpop.f32.mrb[0].mxu0
        %v2988 = vadd.f32 %v2772, %v2987
        %v2989 = vpop.f32.mrb[0].mxu0
        %v2990 = vpop.f32.mrb[0].mxu0
        %v2991 = vadd.f32 %v2772, %v2990
        %v2992 = vpop.f32.mrb[0].mxu0
        %2993 = vmatprep.mubr.bf16.mxu0 0
        %2994 = vmatmul.mubr.bf16.gmra.mrb[0].mxu0 %v2948
        %v2995 = vpop.f32.mrb[0].mxu0
        %v2996 = vadd.f32 %v2772, %v2995
        %v2997 = vpop.f32.mrb[0].mxu0
        %v2998 = vpop.f32.mrb[0].mxu0
        %v2999 = vadd.f32 %v2772, %v2998
        %v3000 = vpop.f32.mrb[0].mxu0
        %3001 = vdwg.mxu0
        %v3002 = vsel %vm2490, %v2988, -inf
        %3003 = vmax.xlane.f32.xlu0 %v3002
        %v3004 = vpop.xlane.xlu0 %3003
        %v3005 = vsel %vm2490, %v2991, -inf
        %3006 = vmax.xlane.f32.xlu0 %v3005
        %v3007 = vpop.xlane.xlu0 %3006
        %v3008 = vsel %vm2490, %v2996, -inf
        %3009 = vmax.xlane.f32.xlu0 %v3008
        %v3010 = vpop.xlane.xlu0 %3009
        %v3011 = vsel %vm2490, %v2999, -inf
        %3012 = vmax.xlane.f32.xlu0 %v3011
        %v3013 = vpop.xlane.xlu0 %3012
        %v3014 = vsub.f32 %v2988, %v3004
        %v3015 = vsub.f32 %v2991, %v3007
        %v3016 = vsub.f32 %v2996, %v3010
        %v3017 = vsub.f32 %v2999, %v3013
        %v3018 = vmul.f32 %v3014, 1.442695
        %v3019 = vpow.pop %v3018
        %v3020 = vmul.f32 %v3015, 1.442695
        %v3021 = vpow.pop %v3020
        %v3022 = vmul.f32 %v3016, 1.442695
        %v3023 = vpow.pop %v3022
        %v3024 = vmul.f32 %v3017, 1.442695
        %v3025 = vpow.pop %v3024
        %v3026 = vsel %vm2490, %v3019, 0.0
        %3027 = vadd.xlane.f32.xlu0 %v3026
        %v3028 = vpop.xlane.xlu0 %3027
        %v3029 = vsel %vm2490, %v3021, 0.0
        %3030 = vadd.xlane.f32.xlu0 %v3029
        %v3031 = vpop.xlane.xlu0 %3030
        %v3032 = vsel %vm2490, %v3023, 0.0
        %3033 = vadd.xlane.f32.xlu0 %v3032
        %v3034 = vpop.xlane.xlu0 %3033
        %v3035 = vsel %vm2490, %v3025, 0.0
        %3036 = vadd.xlane.f32.xlu0 %v3035
        %v3037 = vpop.xlane.xlu0 %3036
        %v3038 = vrcp.pop %v3028
        %v3039 = vrcp.pop %v3031
        %v3040 = vrcp.pop %v3034
        %v3041 = vrcp.pop %v3037
        %v3042 = vmul.f32 %v3019, %v3038
        %v3043 = vmul.f32 %v3021, %v3039
        %v3044 = vmul.f32 %v3023, %v3040
        %v3045 = vmul.f32 %v3025, %v3041
        %v3046 = vpack.c.bf16 %v3043, %v3042
        %v3047 = vpack.c.bf16 %v3045, %v3044
        %3048 = vrot.lane.b32.xlu0 %v2762, 88
        %v3049 = vpop.permute.xlu0 %3048
        %v3052 = vsel %vm2490, %v3046, 0
        %v3055 = vsel %vm2490, %v3047, 0
        %3057 = vmatprep.subr.bf16.mxu0 0
        %3058 = vmatpush1.bf16.msra.mxu0 %v3049
        %3059 = vmatprep.subr.bf16.mxu0 0
        %3060 = vmatpush1.bf16.msra.mxu0 0
        %3061 = vmatprep.subr.bf16.mxu0 0
        %3062 = vmatpush1.bf16.msra.mxu0 0
        %3063 = vmatprep.subr.bf16.mxu0 0
        %3064 = vmatpush1.bf16.msra.mxu0 0
        %3065 = vmatprep.subr.bf16.mxu0 0
        %3066 = vmatpush1.bf16.msra.mxu0 0
        %3067 = vmatprep.subr.bf16.mxu0 0
        %3068 = vmatpush1.bf16.msra.mxu0 0
        %3069 = vmatprep.subr.bf16.mxu0 0
        %3070 = vmatpush1.bf16.msra.mxu0 0
        %3071 = vmatprep.subr.bf16.mxu0 0
        %3072 = vmatpush1.bf16.msra.mxu0 0
        %3073 = vmatprep.subr.bf16.mxu0 0
        %3074 = vmatpush1.bf16.msra.mxu0 0
        %3075 = vmatprep.subr.bf16.mxu0 0
        %3076 = vmatpush1.bf16.msra.mxu0 0
        %3077 = vmatprep.subr.bf16.mxu0 0
        %3078 = vmatpush1.bf16.msra.mxu0 0
        %3079 = vmatprep.subr.bf16.mxu0 0
        %3080 = vmatpush1.bf16.msra.mxu0 0
        %3081 = vmatprep.subr.bf16.mxu0 0
        %3082 = vmatpush1.bf16.msra.mxu0 0
        %3083 = vmatprep.subr.bf16.mxu0 0
        %3084 = vmatpush1.bf16.msra.mxu0 0
        %3085 = vmatprep.subr.bf16.mxu0 0
        %3086 = vmatpush1.bf16.msra.mxu0 0
        %3087 = vmatprep.subr.bf16.mxu0 0
        %3088 = vmatpush1.bf16.msra.mxu0 0
        %3089 = vmatprep.mubr.bf16.mxu0 0
        %3090 = vmatmul.mubr.bf16.gmra.mrb[0].mxu0 %v3052
        %v3091 = vpop.f32.mrb[0].mxu0
        %v3092 = vadd.f32 0.0, %v3091
        %v3093 = vpop.f32.mrb[0].mxu0
        %v3094 = vpop.f32.mrb[0].mxu0
        %v3095 = vadd.f32 0.0, %v3094
        %v3096 = vpop.f32.mrb[0].mxu0
        %3097 = vmatprep.mubr.bf16.mxu0 0
        %3098 = vmatmul.mubr.bf16.gmra.mrb[0].mxu0 %v3055
        %v3099 = vpop.f32.mrb[0].mxu0
        %v3100 = vadd.f32 0.0, %v3099
        %v3101 = vpop.f32.mrb[0].mxu0
        %v3102 = vpop.f32.mrb[0].mxu0
        %v3103 = vadd.f32 0.0, %v3102
        %v3104 = vpop.f32.mrb[0].mxu0
        %3105 = vdwg.mxu0
        %3106 = vrot.lane.b32.xlu0 %v2767, 112
        %v3107 = vpop.permute.xlu0 %3106
        %3108 = vrot.lane.b32.xlu0 %v2768, 112
        %v3109 = vpop.permute.xlu0 %3108
        %3110 = vrot.lane.b32.xlu0 %v2762, 112
        %v3111 = vpop.permute.xlu0 %3110
        %v3113 = vsel %vm1674, %v3107, 0
        %v3116 = vsel %vm1674, %v3109, 0
        %v3119 = vsel %vm1674, %v3111, 0
        %3121 = vmatprep.subr.bf16.mxu0 0
        %3122 = vmatpush1.bf16.xpose.msra.mxu0 %v3119
        %3123 = vmatprep.subr.bf16.mxu0 0
        %3124 = vmatpush1.bf16.xpose.msra.mxu0 0
        %3125 = vmatprep.subr.bf16.mxu0 0
        %3126 = vmatpush1.bf16.xpose.msra.mxu0 0
        %3127 = vmatprep.subr.bf16.mxu0 0
        %3128 = vmatpush1.bf16.xpose.msra.mxu0 0
        %3129 = vmatprep.subr.bf16.mxu0 0
        %3130 = vmatpush1.bf16.xpose.msra.mxu0 0
        %3131 = vmatprep.subr.bf16.mxu0 0
        %3132 = vmatpush1.bf16.xpose.msra.mxu0 0
        %3133 = vmatprep.subr.bf16.mxu0 0
        %3134 = vmatpush1.bf16.xpose.msra.mxu0 0
        %3135 = vmatprep.subr.bf16.mxu0 0
        %3136 = vmatpush1.bf16.xpose.msra.mxu0 0
        %3137 = vmatprep.subr.bf16.mxu0 0
        %3138 = vmatpush1.bf16.xpose.msra.mxu0 0
        %3139 = vmatprep.subr.bf16.mxu0 0
        %3140 = vmatpush1.bf16.xpose.msra.mxu0 0
        %3141 = vmatprep.subr.bf16.mxu0 0
        %3142 = vmatpush1.bf16.xpose.msra.mxu0 0
        %3143 = vmatprep.subr.bf16.mxu0 0
        %3144 = vmatpush1.bf16.xpose.msra.mxu0 0
        %3145 = vmatprep.subr.bf16.mxu0 0
        %3146 = vmatpush1.bf16.xpose.msra.mxu0 0
        %3147 = vmatprep.subr.bf16.mxu0 0
        %3148 = vmatpush1.bf16.xpose.msra.mxu0 0
        %3149 = vmatprep.subr.bf16.mxu0 0
        %3150 = vmatpush1.bf16.xpose.msra.mxu0 0
        %3151 = vmatprep.subr.bf16.mxu0 0
        %3152 = vmatpush1.bf16.xpose.msra.mxu0 0
        %3153 = vmatprep.mubr.bf16.mxu0 0
        %3154 = vmatmul.mubr.bf16.gmra.mrb[0].mxu0 %v3113
        %v3155 = vpop.f32.mrb[0].mxu0
        %v3156 = vadd.f32 %v2772, %v3155
        %v3157 = vpop.f32.mrb[0].mxu0
        %v3158 = vpop.f32.mrb[0].mxu0
        %v3159 = vadd.f32 %v2772, %v3158
        %v3160 = vpop.f32.mrb[0].mxu0
        %3161 = vmatprep.mubr.bf16.mxu0 0
        %3162 = vmatmul.mubr.bf16.gmra.mrb[0].mxu0 %v3116
        %v3163 = vpop.f32.mrb[0].mxu0
        %v3164 = vadd.f32 %v2772, %v3163
        %v3165 = vpop.f32.mrb[0].mxu0
        %v3166 = vpop.f32.mrb[0].mxu0
        %v3167 = vadd.f32 %v2772, %v3166
        %v3168 = vpop.f32.mrb[0].mxu0
        %3169 = vdwg.mxu0
        %v3170 = vsel %vm2490, %v3156, -inf
        %3171 = vmax.xlane.f32.xlu0 %v3170
        %v3172 = vpop.xlane.xlu0 %3171
        %v3173 = vsel %vm2490, %v3159, -inf
        %3174 = vmax.xlane.f32.xlu0 %v3173
        %v3175 = vpop.xlane.xlu0 %3174
        %v3176 = vsel %vm2490, %v3164, -inf
        %3177 = vmax.xlane.f32.xlu0 %v3176
        %v3178 = vpop.xlane.xlu0 %3177
        %v3179 = vsel %vm2490, %v3167, -inf
        %3180 = vmax.xlane.f32.xlu0 %v3179
        %v3181 = vpop.xlane.xlu0 %3180
        %v3182 = vsub.f32 %v3156, %v3172
        %v3183 = vsub.f32 %v3159, %v3175
        %v3184 = vsub.f32 %v3164, %v3178
        %v3185 = vsub.f32 %v3167, %v3181
        %v3186 = vmul.f32 %v3182, 1.442695
        %v3187 = vpow.pop %v3186
        %v3188 = vmul.f32 %v3183, 1.442695
        %v3189 = vpow.pop %v3188
        %v3190 = vmul.f32 %v3184, 1.442695
        %v3191 = vpow.pop %v3190
        %v3192 = vmul.f32 %v3185, 1.442695
        %v3193 = vpow.pop %v3192
        %v3194 = vsel %vm2490, %v3187, 0.0
        %3195 = vadd.xlane.f32.xlu0 %v3194
        %v3196 = vpop.xlane.xlu0 %3195
        %v3197 = vsel %vm2490, %v3189, 0.0
        %3198 = vadd.xlane.f32.xlu0 %v3197
        %v3199 = vpop.xlane.xlu0 %3198
        %v3200 = vsel %vm2490, %v3191, 0.0
        %3201 = vadd.xlane.f32.xlu0 %v3200
        %v3202 = vpop.xlane.xlu0 %3201
        %v3203 = vsel %vm2490, %v3193, 0.0
        %3204 = vadd.xlane.f32.xlu0 %v3203
        %v3205 = vpop.xlane.xlu0 %3204
        %v3206 = vrcp.pop %v3196
        %v3207 = vrcp.pop %v3199
        %v3208 = vrcp.pop %v3202
        %v3209 = vrcp.pop %v3205
        %v3210 = vmul.f32 %v3187, %v3206
        %v3211 = vmul.f32 %v3189, %v3207
        %v3212 = vmul.f32 %v3191, %v3208
        %v3213 = vmul.f32 %v3193, %v3209
        %v3214 = vpack.c.bf16 %v3211, %v3210
        %v3215 = vpack.c.bf16 %v3213, %v3212
        %3216 = vrot.lane.b32.xlu0 %v2762, 80
        %v3217 = vpop.permute.xlu0 %3216
        %v3220 = vsel %vm2490, %v3214, 0
        %v3223 = vsel %vm2490, %v3215, 0
        %3225 = vmatprep.subr.bf16.mxu0 0
        %3226 = vmatpush1.bf16.msra.mxu0 %v3217
        %3227 = vmatprep.subr.bf16.mxu0 0
        %3228 = vmatpush1.bf16.msra.mxu0 0
        %3229 = vmatprep.subr.bf16.mxu0 0
        %3230 = vmatpush1.bf16.msra.mxu0 0
        %3231 = vmatprep.subr.bf16.mxu0 0
        %3232 = vmatpush1.bf16.msra.mxu0 0
        %3233 = vmatprep.subr.bf16.mxu0 0
        %3234 = vmatpush1.bf16.msra.mxu0 0
        %3235 = vmatprep.subr.bf16.mxu0 0
        %3236 = vmatpush1.bf16.msra.mxu0 0
        %3237 = vmatprep.subr.bf16.mxu0 0
        %3238 = vmatpush1.bf16.msra.mxu0 0
        %3239 = vmatprep.subr.bf16.mxu0 0
        %3240 = vmatpush1.bf16.msra.mxu0 0
        %3241 = vmatprep.subr.bf16.mxu0 0
        %3242 = vmatpush1.bf16.msra.mxu0 0
        %3243 = vmatprep.subr.bf16.mxu0 0
        %3244 = vmatpush1.bf16.msra.mxu0 0
        %3245 = vmatprep.subr.bf16.mxu0 0
        %3246 = vmatpush1.bf16.msra.mxu0 0
        %3247 = vmatprep.subr.bf16.mxu0 0
        %3248 = vmatpush1.bf16.msra.mxu0 0
        %3249 = vmatprep.subr.bf16.mxu0 0
        %3250 = vmatpush1.bf16.msra.mxu0 0
        %3251 = vmatprep.subr.bf16.mxu0 0
        %3252 = vmatpush1.bf16.msra.mxu0 0
        %3253 = vmatprep.subr.bf16.mxu0 0
        %3254 = vmatpush1.bf16.msra.mxu0 0
        %3255 = vmatprep.subr.bf16.mxu0 0
        %3256 = vmatpush1.bf16.msra.mxu0 0
        %3257 = vmatprep.mubr.bf16.mxu0 0
        %3258 = vmatmul.mubr.bf16.gmra.mrb[0].mxu0 %v3220
        %v3259 = vpop.f32.mrb[0].mxu0
        %v3260 = vadd.f32 0.0, %v3259
        %v3261 = vpop.f32.mrb[0].mxu0
        %v3262 = vpop.f32.mrb[0].mxu0
        %v3263 = vadd.f32 0.0, %v3262
        %v3264 = vpop.f32.mrb[0].mxu0
        %3265 = vmatprep.mubr.bf16.mxu0 0
        %3266 = vmatmul.mubr.bf16.gmra.mrb[0].mxu0 %v3223
        %v3267 = vpop.f32.mrb[0].mxu0
        %v3268 = vadd.f32 0.0, %v3267
        %v3269 = vpop.f32.mrb[0].mxu0
        %v3270 = vpop.f32.mrb[0].mxu0
        %v3271 = vadd.f32 0.0, %v3270
        %v3272 = vpop.f32.mrb[0].mxu0
        %3273 = vdwg.mxu0
        %3274 = vrot.lane.b32.xlu0 %v2767, 104
        %v3275 = vpop.permute.xlu0 %3274
        %3276 = vrot.lane.b32.xlu0 %v2768, 104
        %v3277 = vpop.permute.xlu0 %3276
        %3278 = vrot.lane.b32.xlu0 %v2762, 104
        %v3279 = vpop.permute.xlu0 %3278
        %v3281 = vsel %vm1674, %v3275, 0
        %v3284 = vsel %vm1674, %v3277, 0
        %v3287 = vsel %vm1674, %v3279, 0
        %3289 = vmatprep.subr.bf16.mxu0 0
        %3290 = vmatpush1.bf16.xpose.msra.mxu0 %v3287
        %3291 = vmatprep.subr.bf16.mxu0 0
        %3292 = vmatpush1.bf16.xpose.msra.mxu0 0
        %3293 = vmatprep.subr.bf16.mxu0 0
        %3294 = vmatpush1.bf16.xpose.msra.mxu0 0
        %3295 = vmatprep.subr.bf16.mxu0 0
        %3296 = vmatpush1.bf16.xpose.msra.mxu0 0
        %3297 = vmatprep.subr.bf16.mxu0 0
        %3298 = vmatpush1.bf16.xpose.msra.mxu0 0
        %3299 = vmatprep.subr.bf16.mxu0 0
        %3300 = vmatpush1.bf16.xpose.msra.mxu0 0
        %3301 = vmatprep.subr.bf16.mxu0 0
        %3302 = vmatpush1.bf16.xpose.msra.mxu0 0
        %3303 = vmatprep.subr.bf16.mxu0 0
        %3304 = vmatpush1.bf16.xpose.msra.mxu0 0
        %3305 = vmatprep.subr.bf16.mxu0 0
        %3306 = vmatpush1.bf16.xpose.msra.mxu0 0
        %3307 = vmatprep.subr.bf16.mxu0 0
        %3308 = vmatpush1.bf16.xpose.msra.mxu0 0
        %3309 = vmatprep.subr.bf16.mxu0 0
        %3310 = vmatpush1.bf16.xpose.msra.mxu0 0
        %3311 = vmatprep.subr.bf16.mxu0 0
        %3312 = vmatpush1.bf16.xpose.msra.mxu0 0
        %3313 = vmatprep.subr.bf16.mxu0 0
        %3314 = vmatpush1.bf16.xpose.msra.mxu0 0
        %3315 = vmatprep.subr.bf16.mxu0 0
        %3316 = vmatpush1.bf16.xpose.msra.mxu0 0
        %3317 = vmatprep.subr.bf16.mxu0 0
        %3318 = vmatpush1.bf16.xpose.msra.mxu0 0
        %3319 = vmatprep.subr.bf16.mxu0 0
        %3320 = vmatpush1.bf16.xpose.msra.mxu0 0
        %3321 = vmatprep.mubr.bf16.mxu0 0
        %3322 = vmatmul.mubr.bf16.gmra.mrb[0].mxu0 %v3281
        %v3323 = vpop.f32.mrb[0].mxu0
        %v3324 = vadd.f32 %v2772, %v3323
        %v3325 = vpop.f32.mrb[0].mxu0
        %v3326 = vpop.f32.mrb[0].mxu0
        %v3327 = vadd.f32 %v2772, %v3326
        %v3328 = vpop.f32.mrb[0].mxu0
        %3329 = vmatprep.mubr.bf16.mxu0 0
        %3330 = vmatmul.mubr.bf16.gmra.mrb[0].mxu0 %v3284
        %v3331 = vpop.f32.mrb[0].mxu0
        %v3332 = vadd.f32 %v2772, %v3331
        %v3333 = vpop.f32.mrb[0].mxu0
        %v3334 = vpop.f32.mrb[0].mxu0
        %v3335 = vadd.f32 %v2772, %v3334
        %v3336 = vpop.f32.mrb[0].mxu0
        %3337 = vdwg.mxu0
        %v3338 = vsel %vm2490, %v3324, -inf
        %3339 = vmax.xlane.f32.xlu0 %v3338
        %v3340 = vpop.xlane.xlu0 %3339
        %v3341 = vsel %vm2490, %v3327, -inf
        %3342 = vmax.xlane.f32.xlu0 %v3341
        %v3343 = vpop.xlane.xlu0 %3342
        %v3344 = vsel %vm2490, %v3332, -inf
        %3345 = vmax.xlane.f32.xlu0 %v3344
        %v3346 = vpop.xlane.xlu0 %3345
        %v3347 = vsel %vm2490, %v3335, -inf
        %3348 = vmax.xlane.f32.xlu0 %v3347
        %v3349 = vpop.xlane.xlu0 %3348
        %v3350 = vsub.f32 %v3324, %v3340
        %v3351 = vsub.f32 %v3327, %v3343
        %v3352 = vsub.f32 %v3332, %v3346
        %v3353 = vsub.f32 %v3335, %v3349
        %v3354 = vmul.f32 %v3350, 1.442695
        %v3355 = vpow.pop %v3354
        %v3356 = vmul.f32 %v3351, 1.442695
        %v3357 = vpow.pop %v3356
        %v3358 = vmul.f32 %v3352, 1.442695
        %v3359 = vpow.pop %v3358
        %v3360 = vmul.f32 %v3353, 1.442695
        %v3361 = vpow.pop %v3360
        %v3362 = vsel %vm2490, %v3355, 0.0
        %3363 = vadd.xlane.f32.xlu0 %v3362
        %v3364 = vpop.xlane.xlu0 %3363
        %v3365 = vsel %vm2490, %v3357, 0.0
        %3366 = vadd.xlane.f32.xlu0 %v3365
        %v3367 = vpop.xlane.xlu0 %3366
        %v3368 = vsel %vm2490, %v3359, 0.0
        %3369 = vadd.xlane.f32.xlu0 %v3368
        %v3370 = vpop.xlane.xlu0 %3369
        %v3371 = vsel %vm2490, %v3361, 0.0
        %3372 = vadd.xlane.f32.xlu0 %v3371
        %v3373 = vpop.xlane.xlu0 %3372
        %v3374 = vrcp.pop %v3364
        %v3375 = vrcp.pop %v3367
        %v3376 = vrcp.pop %v3370
        %v3377 = vrcp.pop %v3373
        %v3378 = vmul.f32 %v3355, %v3374
        %v3379 = vmul.f32 %v3357, %v3375
        %v3380 = vmul.f32 %v3359, %v3376
        %v3381 = vmul.f32 %v3361, %v3377
        %v3382 = vpack.c.bf16 %v3379, %v3378
        %v3383 = vpack.c.bf16 %v3381, %v3380
        %3384 = vrot.lane.b32.xlu0 %v2762, 72
        %v3385 = vpop.permute.xlu0 %3384
        %v3388 = vsel %vm2490, %v3382, 0
        %v3391 = vsel %vm2490, %v3383, 0
        %3393 = vmatprep.subr.bf16.mxu0 0
        %3394 = vmatpush1.bf16.msra.mxu0 %v3385
        %3395 = vmatprep.subr.bf16.mxu0 0
        %3396 = vmatpush1.bf16.msra.mxu0 0
        %3397 = vmatprep.subr.bf16.mxu0 0
        %3398 = vmatpush1.bf16.msra.mxu0 0
        %3399 = vmatprep.subr.bf16.mxu0 0
        %3400 = vmatpush1.bf16.msra.mxu0 0
        %3401 = vmatprep.subr.bf16.mxu0 0
        %3402 = vmatpush1.bf16.msra.mxu0 0
        %3403 = vmatprep.subr.bf16.mxu0 0
        %3404 = vmatpush1.bf16.msra.mxu0 0
        %3405 = vmatprep.subr.bf16.mxu0 0
        %3406 = vmatpush1.bf16.msra.mxu0 0
        %3407 = vmatprep.subr.bf16.mxu0 0
        %3408 = vmatpush1.bf16.msra.mxu0 0
        %3409 = vmatprep.subr.bf16.mxu0 0
        %3410 = vmatpush1.bf16.msra.mxu0 0
        %3411 = vmatprep.subr.bf16.mxu0 0
        %3412 = vmatpush1.bf16.msra.mxu0 0
        %3413 = vmatprep.subr.bf16.mxu0 0
        %3414 = vmatpush1.bf16.msra.mxu0 0
        %3415 = vmatprep.subr.bf16.mxu0 0
        %3416 = vmatpush1.bf16.msra.mxu0 0
        %3417 = vmatprep.subr.bf16.mxu0 0
        %3418 = vmatpush1.bf16.msra.mxu0 0
        %3419 = vmatprep.subr.bf16.mxu0 0
        %3420 = vmatpush1.bf16.msra.mxu0 0
        %3421 = vmatprep.subr.bf16.mxu0 0
        %3422 = vmatpush1.bf16.msra.mxu0 0
        %3423 = vmatprep.subr.bf16.mxu0 0
        %3424 = vmatpush1.bf16.msra.mxu0 0
        %3425 = vmatprep.mubr.bf16.mxu0 0
        %3426 = vmatmul.mubr.bf16.gmra.mrb[0].mxu0 %v3388
        %v3427 = vpop.f32.mrb[0].mxu0
        %v3428 = vadd.f32 0.0, %v3427
        %v3429 = vpop.f32.mrb[0].mxu0
        %v3430 = vpop.f32.mrb[0].mxu0
        %v3431 = vadd.f32 0.0, %v3430
        %v3432 = vpop.f32.mrb[0].mxu0
        %3433 = vmatprep.mubr.bf16.mxu0 0
        %3434 = vmatmul.mubr.bf16.gmra.mrb[0].mxu0 %v3391
        %v3435 = vpop.f32.mrb[0].mxu0
        %v3436 = vadd.f32 0.0, %v3435
        %v3437 = vpop.f32.mrb[0].mxu0
        %v3438 = vpop.f32.mrb[0].mxu0
        %v3439 = vadd.f32 0.0, %v3438
        %v3440 = vpop.f32.mrb[0].mxu0
        %3441 = vdwg.mxu0
        %3446 = vrot.lane.b32.xlu0 %v3092, 8
        %v3447 = vpop.permute.xlu0 %3446
        %3448 = vrot.lane.b32.xlu0 %v3095, 8
        %v3449 = vpop.permute.xlu0 %3448
        %3450 = vrot.lane.b32.xlu0 %v3100, 8
        %v3451 = vpop.permute.xlu0 %3450
        %3452 = vrot.lane.b32.xlu0 %v3103, 8
        %v3453 = vpop.permute.xlu0 %3452
        %3462 = vrot.lane.b32.xlu0 %v3260, 16
        %v3463 = vpop.permute.xlu0 %3462
        %3464 = vrot.lane.b32.xlu0 %v3263, 16
        %v3465 = vpop.permute.xlu0 %3464
        %3466 = vrot.lane.b32.xlu0 %v3268, 16
        %v3467 = vpop.permute.xlu0 %3466
        %3468 = vrot.lane.b32.xlu0 %v3271, 16
        %v3469 = vpop.permute.xlu0 %3468
        %3478 = vrot.lane.b32.xlu0 %v3428, 24
        %v3479 = vpop.permute.xlu0 %3478
        %3480 = vrot.lane.b32.xlu0 %v3431, 24
        %v3481 = vpop.permute.xlu0 %3480
        %3482 = vrot.lane.b32.xlu0 %v3436, 24
        %v3483 = vpop.permute.xlu0 %3482
        %3484 = vrot.lane.b32.xlu0 %v3439, 24
        %v3485 = vpop.permute.xlu0 %3484
        %v3490 = vsel %vm1674, %v2922, %v3447
        %v3491 = vsel %vm1674, %v2925, %v3449
        %v3492 = vsel %vm1674, %v2930, %v3451
        %v3493 = vsel %vm1674, %v2933, %v3453
        %v3494 = vsel %vm2490, %v3490, %v3463
        %v3495 = vsel %vm2490, %v3491, %v3465
        %v3496 = vsel %vm2490, %v3492, %v3467
        %v3497 = vsel %vm2490, %v3493, %v3469
        %v3498 = vsel %vm2495, %v3494, %v3479
        %v3499 = vsel %vm2495, %v3495, %v3481
        %v3500 = vsel %vm2495, %v3496, %v3483
        %v3501 = vsel %vm2495, %v3497, %v3485
        %v3502 = vpack.c.bf16 %v3499, %v3498
        %v3503 = vpack.c.bf16 %v3501, %v3500
        %v3504 = vld [vmem:[#allocation30] sm:$0xf]
        %v3505 = vld [vmem:[#allocation30 + $0x4] sm:$0xf]
        %v3506 = vld [vmem:[#allocation30 + $0x8] sm:$0xf]
        %v3507 = vld [vmem:[#allocation30 + $0xc] sm:$0xf]
        %v3508 = vld [vmem:[#allocation31] sm:$0x1]
        %v3510 = vlaneseq
        %v3511 = vshrl.u32 %v3510, 7
        %v3512 = vsub.s32 0, %v3511
        %v3513 = vrot.slane %v3508, %v3512
        %v3519 = vunpack.c.l.b16 %v3504
        %v3520 = vunpack.c.l.b16 %v3505
        %v3521 = vunpack.c.l.b16 %v3506
        %v3522 = vunpack.c.l.b16 %v3507
        %v3523 = vpack.c.b16 %v3520, %v3519
        %v3524 = vpack.c.b16 %v3522, %v3521
        %v3528 = vsel %vm1486, %v3502, 0
        %v3531 = vsel %vm1486, %v3503, 0
        %3533 = vmatprep.subr.bf16.mxu0 0
        %3534 = vmatpush1.bf16.msra.mxu0 %v3523
        %3535 = vmatprep.subr.bf16.mxu0 0
        %3536 = vmatpush1.bf16.msra.mxu0 %v3524
        %3537 = vmatprep.subr.bf16.mxu0 0
        %3538 = vmatpush1.bf16.msra.mxu0 0
        %3539 = vmatprep.subr.bf16.mxu0 0
        %3540 = vmatpush1.bf16.msra.mxu0 0
        %3541 = vmatprep.subr.bf16.mxu0 0
        %3542 = vmatpush1.bf16.msra.mxu0 0
        %3543 = vmatprep.subr.bf16.mxu0 0
        %3544 = vmatpush1.bf16.msra.mxu0 0
        %3545 = vmatprep.subr.bf16.mxu0 0
        %3546 = vmatpush1.bf16.msra.mxu0 0
        %3547 = vmatprep.subr.bf16.mxu0 0
        %3548 = vmatpush1.bf16.msra.mxu0 0
        %3549 = vmatprep.subr.bf16.mxu0 0
        %3550 = vmatpush1.bf16.msra.mxu0 0
        %3551 = vmatprep.subr.bf16.mxu0 0
        %3552 = vmatpush1.bf16.msra.mxu0 0
        %3553 = vmatprep.subr.bf16.mxu0 0
        %3554 = vmatpush1.bf16.msra.mxu0 0
        %3555 = vmatprep.subr.bf16.mxu0 0
        %3556 = vmatpush1.bf16.msra.mxu0 0
        %3557 = vmatprep.subr.bf16.mxu0 0
        %3558 = vmatpush1.bf16.msra.mxu0 0
        %3559 = vmatprep.subr.bf16.mxu0 0
        %3560 = vmatpush1.bf16.msra.mxu0 0
        %3561 = vmatprep.subr.bf16.mxu0 0
        %3562 = vmatpush1.bf16.msra.mxu0 0
        %3563 = vmatprep.subr.bf16.mxu0 0
        %3564 = vmatpush1.bf16.msra.mxu0 0
        %3565 = vmatprep.mubr.bf16.mxu0 0
        %3566 = vmatmul.mubr.bf16.gmra.mrb[0].mxu0 %v3528
        %v3567 = vpop.f32.mrb[0].mxu0
        %v3568 = vadd.f32 %v3513, %v3567
        %v3569 = vpop.f32.mrb[0].mxu0
        %v3570 = vpop.f32.mrb[0].mxu0
        %v3571 = vadd.f32 %v3513, %v3570
        %v3572 = vpop.f32.mrb[0].mxu0
        %3573 = vmatprep.mubr.bf16.mxu0 0
        %3574 = vmatmul.mubr.bf16.gmra.mrb[0].mxu0 %v3531
        %v3575 = vpop.f32.mrb[0].mxu0
        %v3576 = vadd.f32 %v3513, %v3575
        %v3577 = vpop.f32.mrb[0].mxu0
        %v3578 = vpop.f32.mrb[0].mxu0
        %v3579 = vadd.f32 %v3513, %v3578
        %v3580 = vpop.f32.mrb[0].mxu0
        %3581 = vdwg.mxu0
        %v3582 = vadd.f32 %v2580, %v3568
        %v3583 = vadd.f32 %v2581, %v3571
        %v3584 = vadd.f32 %v2582, %v3576
        %v3585 = vadd.f32 %v2583, %v3579
        %v3586 = vld [vmem:[#allocation12 + $0x2] sm:$0x1]
        %v3587 = vld [vmem:[#allocation13 + $0x2] sm:$0x1]
        %v3588 = vsel %vm1486, %v3582, 0.0
        %3589 = vadd.xlane.f32.xlu0 %v3588
        %v3590 = vpop.xlane.xlu0 %3589
        %v3591 = vsel %vm1486, %v3583, 0.0
        %3592 = vadd.xlane.f32.xlu0 %v3591
        %v3593 = vpop.xlane.xlu0 %3592
        %v3594 = vsel %vm1486, %v3584, 0.0
        %3595 = vadd.xlane.f32.xlu0 %v3594
        %v3596 = vpop.xlane.xlu0 %3595
        %v3597 = vsel %vm1486, %v3585, 0.0
        %3598 = vadd.xlane.f32.xlu0 %v3597
        %v3599 = vpop.xlane.xlu0 %3598
        %v3600 = vmul.f32 %v3590, %v1499
        %v3601 = vmul.f32 %v3593, %v1499
        %v3602 = vmul.f32 %v3596, %v1499
        %v3603 = vmul.f32 %v3599, %v1499
        %v3604 = vsub.f32 %v3582, %v3600
        %v3605 = vsub.f32 %v3583, %v3601
        %v3606 = vsub.f32 %v3584, %v3602
        %v3607 = vsub.f32 %v3585, %v3603
        %v3608 = vmul.f32 %v3604, %v3604
        %v3609 = vmul.f32 %v3605, %v3605
        %v3610 = vmul.f32 %v3606, %v3606
        %v3611 = vmul.f32 %v3607, %v3607
        %v3612 = vsel %vm1486, %v3608, 0.0
        %3613 = vadd.xlane.f32.xlu0 %v3612
        %v3614 = vpop.xlane.xlu0 %3613
        %v3615 = vsel %vm1486, %v3609, 0.0
        %3616 = vadd.xlane.f32.xlu0 %v3615
        %v3617 = vpop.xlane.xlu0 %3616
        %v3618 = vsel %vm1486, %v3610, 0.0
        %3619 = vadd.xlane.f32.xlu0 %v3618
        %v3620 = vpop.xlane.xlu0 %3619
        %v3621 = vsel %vm1486, %v3611, 0.0
        %3622 = vadd.xlane.f32.xlu0 %v3621
        %v3623 = vpop.xlane.xlu0 %3622
        %v3624 = vmul.f32 %v3614, 0.032258064
        %v3625 = vmul.f32 %v3617, 0.032258064
        %v3626 = vmul.f32 %v3620, 0.032258064
        %v3627 = vmul.f32 %v3623, 0.032258064
        %v3628 = vrsqrt.pop %v3624
        %v3629 = vmul.f32 %v3624, %v3628
        %vm3630 = vcmp.eq.f32.partialorder %v3624, inf
        %v3631 = vsel %vm3630, %v3624, %v3629
        %vm3632 = vcmp.eq.f32.partialorder %v3624, 0.0
        %v3633 = vand.u32 %v3624, 2147483648
        %v3634 = vsel %vm3632, %v3633, %v3631
        %v3635 = vrsqrt.pop %v3625
        %v3636 = vmul.f32 %v3625, %v3635
        %vm3637 = vcmp.eq.f32.partialorder %v3625, inf
        %v3638 = vsel %vm3637, %v3625, %v3636
        %vm3639 = vcmp.eq.f32.partialorder %v3625, 0.0
        %v3640 = vand.u32 %v3625, 2147483648
        %v3641 = vsel %vm3639, %v3640, %v3638
        %v3642 = vrsqrt.pop %v3626
        %v3643 = vmul.f32 %v3626, %v3642
        %vm3644 = vcmp.eq.f32.partialorder %v3626, inf
        %v3645 = vsel %vm3644, %v3626, %v3643
        %vm3646 = vcmp.eq.f32.partialorder %v3626, 0.0
        %v3647 = vand.u32 %v3626, 2147483648
        %v3648 = vsel %vm3646, %v3647, %v3645
        %v3649 = vrsqrt.pop %v3627
        %v3650 = vmul.f32 %v3627, %v3649
        %vm3651 = vcmp.eq.f32.partialorder %v3627, inf
        %v3652 = vsel %vm3651, %v3627, %v3650
        %vm3653 = vcmp.eq.f32.partialorder %v3627, 0.0
        %v3654 = vand.u32 %v3627, 2147483648
        %v3655 = vsel %vm3653, %v3654, %v3652
        %v3656 = vadd.f32 %v3634, 1e-06
        %v3657 = vadd.f32 %v3641, 1e-06
        %v3658 = vadd.f32 %v3648, 1e-06
        %v3659 = vadd.f32 %v3655, 1e-06
        %v3660 = vrcp.pop %v3656
        %v3661 = vrcp.pop %v3657
        %v3662 = vrcp.pop %v3658
        %v3663 = vrcp.pop %v3659
        %v3664 = vmul.f32 %v3604, %v3660
        %v3665 = vmul.f32 %v3605, %v3661
        %v3666 = vmul.f32 %v3606, %v3662
        %v3667 = vmul.f32 %v3607, %v3663
        %v3668 = vlaneseq
        %v3669 = vshrl.u32 %v3668, 7
        %v3670 = vsub.s32 0, %v3669
        %v3671 = vrot.slane %v3586, %v3670
        %v3672 = vmul.f32 %v3671, %v3664
        %v3673 = vmul.f32 %v3671, %v3665
        %v3674 = vmul.f32 %v3671, %v3666
        %v3675 = vmul.f32 %v3671, %v3667
        %v3676 = vlaneseq
        %v3677 = vshrl.u32 %v3676, 7
        %v3678 = vsub.s32 0, %v3677
        %v3679 = vrot.slane %v3587, %v3678
        %v3680 = vadd.f32 %v3672, %v3679
        %v3681 = vadd.f32 %v3673, %v3679
        %v3682 = vadd.f32 %v3674, %v3679
        %v3683 = vadd.f32 %v3675, %v3679
        %v3684 = vpack.c.bf16 %v3681, %v3680
        %v3685 = vpack.c.bf16 %v3683, %v3682
        %v3686 = vld [vmem:[#allocation33] sm:$0xf]
        %v3687 = vld [vmem:[#allocation33 + $0x4] sm:$0xf]
        %v3688 = vld [vmem:[#allocation33 + $0x8] sm:$0xf]
        %v3689 = vld [vmem:[#allocation33 + $0xc] sm:$0xf]
        %v3690 = vld [vmem:[#allocation34] sm:$0x1]
        %v3692 = vlaneseq
        %v3693 = vshrl.u32 %v3692, 7
        %v3694 = vsub.s32 0, %v3693
        %v3695 = vrot.slane %v3690, %v3694
        %v3701 = vunpack.c.l.b16 %v3686
        %v3702 = vunpack.c.l.b16 %v3687
        %v3703 = vunpack.c.l.b16 %v3688
        %v3704 = vunpack.c.l.b16 %v3689
        %v3705 = vpack.c.b16 %v3702, %v3701
        %v3706 = vpack.c.b16 %v3704, %v3703
        %v3710 = vsel %vm1486, %v3684, 0
        %v3713 = vsel %vm1486, %v3685, 0
        %3715 = vmatprep.subr.bf16.mxu0 0
        %3716 = vmatpush1.bf16.msra.mxu0 %v3705
        %3717 = vmatprep.subr.bf16.mxu0 0
        %3718 = vmatpush1.bf16.msra.mxu0 %v3706
        %3719 = vmatprep.subr.bf16.mxu0 0
        %3720 = vmatpush1.bf16.msra.mxu0 0
        %3721 = vmatprep.subr.bf16.mxu0 0
        %3722 = vmatpush1.bf16.msra.mxu0 0
        %3723 = vmatprep.subr.bf16.mxu0 0
        %3724 = vmatpush1.bf16.msra.mxu0 0
        %3725 = vmatprep.subr.bf16.mxu0 0
        %3726 = vmatpush1.bf16.msra.mxu0 0
        %3727 = vmatprep.subr.bf16.mxu0 0
        %3728 = vmatpush1.bf16.msra.mxu0 0
        %3729 = vmatprep.subr.bf16.mxu0 0
        %3730 = vmatpush1.bf16.msra.mxu0 0
        %3731 = vmatprep.subr.bf16.mxu0 0
        %3732 = vmatpush1.bf16.msra.mxu0 0
        %3733 = vmatprep.subr.bf16.mxu0 0
        %3734 = vmatpush1.bf16.msra.mxu0 0
        %3735 = vmatprep.subr.bf16.mxu0 0
        %3736 = vmatpush1.bf16.msra.mxu0 0
        %3737 = vmatprep.subr.bf16.mxu0 0
        %3738 = vmatpush1.bf16.msra.mxu0 0
        %3739 = vmatprep.subr.bf16.mxu0 0
        %3740 = vmatpush1.bf16.msra.mxu0 0
        %3741 = vmatprep.subr.bf16.mxu0 0
        %3742 = vmatpush1.bf16.msra.mxu0 0
        %3743 = vmatprep.subr.bf16.mxu0 0
        %3744 = vmatpush1.bf16.msra.mxu0 0
        %3745 = vmatprep.subr.bf16.mxu0 0
        %3746 = vmatpush1.bf16.msra.mxu0 0
        %3747 = vmatprep.mubr.bf16.mxu0 0
        %3748 = vmatmul.mubr.bf16.gmra.mrb[0].mxu0 %v3710
        %v3749 = vpop.f32.mrb[0].mxu0
        %v3750 = vadd.f32 %v3695, %v3749
        %v3751 = vpop.f32.mrb[0].mxu0
        %v3752 = vpop.f32.mrb[0].mxu0
        %v3753 = vadd.f32 %v3695, %v3752
        %v3754 = vpop.f32.mrb[0].mxu0
        %3755 = vmatprep.mubr.bf16.mxu0 0
        %3756 = vmatmul.mubr.bf16.gmra.mrb[0].mxu0 %v3713
        %v3757 = vpop.f32.mrb[0].mxu0
        %v3758 = vadd.f32 %v3695, %v3757
        %v3759 = vpop.f32.mrb[0].mxu0
        %v3760 = vpop.f32.mrb[0].mxu0
        %v3761 = vadd.f32 %v3695, %v3760
        %v3762 = vpop.f32.mrb[0].mxu0
        %3763 = vdwg.mxu0
        %v3764 = vmax.f32 %v3750, 0.0
        %v3765 = vmax.f32 %v3753, 0.0
        %v3766 = vmax.f32 %v3758, 0.0
        %v3767 = vmax.f32 %v3761, 0.0
        %v3768 = vpack.c.bf16 %v3765, %v3764
        %v3769 = vpack.c.bf16 %v3767, %v3766
        %v3770 = vld [vmem:[#allocation36] sm:$0xf]
        %v3771 = vld [vmem:[#allocation36 + $0x4] sm:$0xf]
        %v3772 = vld [vmem:[#allocation36 + $0x8] sm:$0xf]
        %v3773 = vld [vmem:[#allocation36 + $0xc] sm:$0xf]
        %v3774 = vld [vmem:[#allocation36 + $0x10] sm:$0xf]
        %v3775 = vld [vmem:[#allocation36 + $0x14] sm:$0xf]
        %v3776 = vld [vmem:[#allocation36 + $0x18] sm:$0xf]
        %v3777 = vld [vmem:[#allocation36 + $0x1c] sm:$0xf]
        %v3778 = vld [vmem:[#allocation37] sm:$0x1]
        %v3780 = vlaneseq
        %v3781 = vshrl.u32 %v3780, 7
        %v3782 = vsub.s32 0, %v3781
        %v3783 = vrot.slane %v3778, %v3782
        %v3793 = vunpack.c.l.b16 %v3770
        %v3794 = vunpack.c.l.b16 %v3771
        %v3795 = vunpack.c.l.b16 %v3772
        %v3796 = vunpack.c.l.b16 %v3773
        %v3797 = vunpack.c.l.b16 %v3774
        %v3798 = vunpack.c.l.b16 %v3775
        %v3799 = vunpack.c.l.b16 %v3776
        %v3800 = vunpack.c.l.b16 %v3777
        %v3801 = vpack.c.b16 %v3794, %v3793
        %v3802 = vpack.c.b16 %v3796, %v3795
        %v3803 = vpack.c.b16 %v3798, %v3797
        %v3804 = vpack.c.b16 %v3800, %v3799
        %v3810 = vsel %vm1742, %v3768, 0
        %v3813 = vsel %vm1742, %v3769, 0
        %3815 = vmatprep.subr.bf16.mxu0 0
        %3816 = vmatpush1.bf16.msra.mxu0 %v3801
        %3817 = vmatprep.subr.bf16.mxu0 0
        %3818 = vmatpush1.bf16.msra.mxu0 %v3802
        %3819 = vmatprep.subr.bf16.mxu0 0
        %3820 = vmatpush1.bf16.msra.mxu0 %v3803
        %3821 = vmatprep.subr.bf16.mxu0 0
        %3822 = vmatpush1.bf16.msra.mxu0 %v3804
        %3823 = vmatprep.subr.bf16.mxu0 0
        %3824 = vmatpush1.bf16.msra.mxu0 0
        %3825 = vmatprep.subr.bf16.mxu0 0
        %3826 = vmatpush1.bf16.msra.mxu0 0
        %3827 = vmatprep.subr.bf16.mxu0 0
        %3828 = vmatpush1.bf16.msra.mxu0 0
        %3829 = vmatprep.subr.bf16.mxu0 0
        %3830 = vmatpush1.bf16.msra.mxu0 0
        %3831 = vmatprep.subr.bf16.mxu0 0
        %3832 = vmatpush1.bf16.msra.mxu0 0
        %3833 = vmatprep.subr.bf16.mxu0 0
        %3834 = vmatpush1.bf16.msra.mxu0 0
        %3835 = vmatprep.subr.bf16.mxu0 0
        %3836 = vmatpush1.bf16.msra.mxu0 0
        %3837 = vmatprep.subr.bf16.mxu0 0
        %3838 = vmatpush1.bf16.msra.mxu0 0
        %3839 = vmatprep.subr.bf16.mxu0 0
        %3840 = vmatpush1.bf16.msra.mxu0 0
        %3841 = vmatprep.subr.bf16.mxu0 0
        %3842 = vmatpush1.bf16.msra.mxu0 0
        %3843 = vmatprep.subr.bf16.mxu0 0
        %3844 = vmatpush1.bf16.msra.mxu0 0
        %3845 = vmatprep.subr.bf16.mxu0 0
        %3846 = vmatpush1.bf16.msra.mxu0 0
        %3847 = vmatprep.mubr.bf16.mxu0 0
        %3848 = vmatmul.mubr.bf16.gmra.mrb[0].mxu0 %v3810
        %v3849 = vpop.f32.mrb[0].mxu0
        %v3850 = vadd.f32 %v3783, %v3849
        %v3851 = vpop.f32.mrb[0].mxu0
        %v3852 = vpop.f32.mrb[0].mxu0
        %v3853 = vadd.f32 %v3783, %v3852
        %v3854 = vpop.f32.mrb[0].mxu0
        %3855 = vmatprep.mubr.bf16.mxu0 0
        %3856 = vmatmul.mubr.bf16.gmra.mrb[0].mxu0 %v3813
        %v3857 = vpop.f32.mrb[0].mxu0
        %v3858 = vadd.f32 %v3783, %v3857
        %v3859 = vpop.f32.mrb[0].mxu0
        %v3860 = vpop.f32.mrb[0].mxu0
        %v3861 = vadd.f32 %v3783, %v3860
        %v3862 = vpop.f32.mrb[0].mxu0
        %3863 = vdwg.mxu0
        %v3864 = vadd.f32 %v3582, %v3850
        %v3865 = vadd.f32 %v3583, %v3853
        %v3866 = vadd.f32 %v3584, %v3858
        %v3867 = vadd.f32 %v3585, %v3861
        %3868 = vst.msk [vmem:[%s1068] sm:$0xff] %vm1486, %v3864
        %3869 = vst.msk [vmem:[%s1068 + $0x8] sm:$0xff] %vm1486, %v3865
        %3870 = vst.msk [vmem:[%s1068 + $0x10] sm:$0xff] %vm1486, %v3866
        %3871 = vst.msk [vmem:[%s1068 + $0x18] sm:$0xff] %vm1486, %v3867
        %s3872 = sand.u32 %s560, 1
        %s3873 = scalar_lea.sflag [#allocation6], %s3872
        %s3874 = sand.u32 %s560, 1
        %s3875 = smul.addr %s3874, 32
        %s3876 = scalar_lea.vmem [#allocation39], %s3875
        // Predicated region
        $region201: #{tpu_custom_call.1} parent=107 // pred_check
          %p3877 = pneg %p570
        $region202: #{tpu_custom_call.1} parent=107 // pred_check_branch
          %3879 = sbr.rel (%p3877) target = $region204
        $region203: #{tpu_custom_call.1} parent=107 // pred_region
          %s3880 = smul.u32 4, %s59
          %s3882 = ssub.s32 512, 512
          %3883 = vsyncadd %s3873, %s3882
          %s3884 = smul.addr %s58, 8
          %s3885 = sadd.s32 %s3880, %s3884
          %s3886 = smul.addr %s3885, 128
          %s3887 = scalar_lea.hbm %s22, %s3886
          %s3888 = sshll.u32 %s3876, 4
          %s3889 = int_to_ptr.vmem [resolvable:$true] %s3888
          %3894 = dma.vmem_to_hbm [thread:$0]  %s3889, 512, %s3887, %s3873, 128, 128, 8
        $region204: #{tpu_custom_call.1} parent=107 // pred_fallthru
          _
      $region108: #{tpu_custom_call.1} parent=5 // pred_fallthru
        _
      %p3895 = scmp.le.s32.totalorder 2, %s49
      // Predicated region
      $region205: #{tpu_custom_call.1} parent=5 // pred_check
        %p3896 = pneg %p3895
      $region206: #{tpu_custom_call.1} parent=5 // pred_check_branch
        %3898 = sbr.rel (%p3896) target = $region208
      $region207: #{tpu_custom_call.1} parent=5 // pred_region
        %s3899 = ssub.s32 %s49, 2
        // Predicated region
        $region209: #{tpu_custom_call.1} parent=207 // pred_check
          %p3900 = pneg %p576
        $region210: #{tpu_custom_call.1} parent=207 // pred_check_branch
          %3902 = sbr.rel (%p3900) target = $region212
        $region211: #{tpu_custom_call.1} parent=207 // pred_region
          %s3903 = sand.u32 %s561, 1
          %s3904 = scalar_lea.sflag [#allocation6], %s3903
          %s3905 = sand.u32 %s561, 1
          %s3906 = smul.addr %s3905, 32
          %s3907 = scalar_lea.vmem [#allocation39], %s3906
          %3908 = dma.done %s3904, 512
        $region212: #{tpu_custom_call.1} parent=207 // pred_fallthru
          _
      $region208: #{tpu_custom_call.1} parent=5 // pred_fallthru
        _
    $region6: #{tpu_custom_call.1} parent=1 // loop_footer
      %s53 = sadd.s32 1, %s49
    $region7: #{tpu_custom_call.1} parent=1 // loop_footer_branch
      %48 = sbr.rel target = $region3
    $region8: #{tpu_custom_call.1} parent=1 // loop_exit
      _
    %3909 = vsyncpa [#allocation5], 1
    %s3910 = scalar_lea.sflag [#allocation5], 1
    %3911 = vsyncpa %s3910, 1
    %3912 = vsyncpa [#allocation8], 1
    %s3913 = scalar_lea.sflag [#allocation8], 1
    %3914 = vsyncpa %s3913, 1
    %3915 = vsyncpa [#allocation11], 1
    %s3916 = scalar_lea.sflag [#allocation11], 1
    %3917 = vsyncpa %s3916, 1
    %3918 = vsyncpa [#allocation14], 1
    %3919 = vsyncpa [#allocation17], 1
    %3920 = vsyncpa [#allocation20], 1
    %3921 = vsyncpa [#allocation23], 1
    %3922 = vsyncpa [#allocation26], 1
    %3923 = vsyncpa [#allocation29], 1
    %3924 = vsyncpa [#allocation32], 1
    %3925 = vsyncpa [#allocation35], 1
    %3926 = vsyncpa [#allocation38], 1
    %3927 = vsyncpa [#allocation6], 1
    %s3928 = scalar_lea.sflag [#allocation6], 1
    %3929 = vsyncpa %s3928, 1

</llo_original>
